<compile_context>
chip_gen: v7x
topology: tpu7x:2x2x1
jax: 0.10.0
libtpu: 0.0.40
codegen_flags: <defaults>
</compile_context>

<pallas_src>
import functools

import jax
import jax.numpy as jnp
import numpy as np
from jax.experimental import pallas as pl
from jax.experimental.pallas import tpu as pltpu


# ----------------------------------------------------------------------------
# Host-side constant preparation (done once per block at wrapper/trace level)
# ----------------------------------------------------------------------------
def _bilinear_matrix_np(n_in):
    """(2*n_in, n_in) interpolation matrix for scale=2, align_corners=True."""
    n_out = 2 * n_in
    if n_in == 1:
        return np.ones((n_out, 1), np.float32)
    o = np.arange(n_out, dtype=np.float64)
    src = o * (n_in - 1) / (n_out - 1)
    i0 = np.floor(src).astype(np.int64)
    i1 = np.minimum(i0 + 1, n_in - 1)
    frac = src - i0
    m = np.zeros((n_out, n_in), np.float64)
    m[np.arange(n_out), i0] += 1.0 - frac
    m[np.arange(n_out), i1] += frac
    return m.astype(np.float32)


def _conv_toeplitz_fused_np(w, W):
    """Fold a 3x3 conv (stride 1, pad 1) into ONE (3*W*Cin, W*Cout) matrix.

    Row band dy*W*Cin .. (dy+1)*W*Cin corresponds to input row r-1+dy, so the
    whole conv becomes a single matmul (rows, 3*W*Cin) @ (3*W*Cin, W*Cout).
    Width zero-padding is encoded by the band structure (out-of-range input
    columns simply have no entries).
    """
    w = np.asarray(w, np.float32)                      # (3, 3, Cin, Cout)
    _, _, Cin, Cout = w.shape
    M = np.zeros((3, W * Cin, W * Cout), np.float32)
    for dy in range(3):
        for x in range(W):
            for dx in range(3):
                c = x + dx - 1                         # unpadded input column
                if 0 <= c < W:
                    M[dy, c * Cin:(c + 1) * Cin, x * Cout:(x + 1) * Cout] = w[dy, dx]
    return M.reshape(3 * W * Cin, W * Cout)


def _width_upsample_kron_np(W, Cout):
    """(W*Cout, 2W*Cout): bilinear 2x width upsample on channel-minor lanes."""
    uw = _bilinear_matrix_np(W)                        # (2W, W)
    return np.kron(uw.T, np.eye(Cout, dtype=np.float32)).astype(np.float32)


def _height_upsample_blockdiag_np(H, Nb):
    """(Nb*2H, Nb*H): per-image bilinear 2x height upsample, all Nb at once."""
    uh = _bilinear_matrix_np(H)                        # (2H, H)
    return np.kron(np.eye(Nb, dtype=np.float32), uh).astype(np.float32)


def _pick_block_n(N, H, target_rows=256):
    """Largest divisor Nb of N with Nb*H <= target_rows (MXU M occupancy)."""
    nb = 1
    for cand in range(1, N + 1):
        if N % cand == 0 and cand * H <= max(target_rows, H):
            nb = cand
    return nb


# ----------------------------------------------------------------------------
# Fused kernel: Conv3x3(pad=1) + GroupNorm + ReLU (+ bilinear 2x upsample)
# ----------------------------------------------------------------------------
def _fused_block_kernel(x_ref, w_ref, gb_ref, *rest,
                        Nb, H, W, Cin, Cout, num_groups, upsample):
    if upsample:
        uhb_ref, mwk_ref, o_ref, xcat_ref = rest
    else:
        o_ref, xcat_ref = rest

    WCin = W * Cin
    WCout = W * Cout
    R = Nb * H                        # matmul M dimension this grid step
    G = num_groups
    cpg = Cout // G
    n_per_group = float(H * W * cpg)

    # ------------------------------------------------------------------
    # Assemble the fused conv LHS (R, 3*W*Cin) in a bf16 scratch:
    #   lanes [0      : WCin )  = input row r-1 (dy=0 tap; zero on image top)
    #   lanes [WCin   : 2WCin)  = input row r   (dy=1 tap)
    #   lanes [2WCin  : 3WCin)  = input row r+1 (dy=2 tap; zero on image bottom)
    # Width zero-padding lives inside the block-banded weight matrix.
    # Every row/band is rewritten each step, so the scratch is megacore-safe.
    # ------------------------------------------------------------------
    zero_row = jnp.zeros((1, WCin), x_ref.dtype)
    xcat_ref[:, WCin:2 * WCin] = x_ref[...]
    xcat_ref[1:R, 0:WCin] = x_ref[0:R - 1, :]
    xcat_ref[0:R - 1, 2 * WCin:3 * WCin] = x_ref[1:R, :]
    for n in range(Nb):               # per-image zero halo rows (static unroll)
        xcat_ref[n * H:n * H + 1, 0:WCin] = zero_row
        xcat_ref[(n + 1) * H - 1:(n + 1) * H, 2 * WCin:3 * WCin] = zero_row

    # ---- 3x3 conv: one fused MXU matmul, bf16 operands, f32 accumulation
    acc = jnp.dot(xcat_ref[...], w_ref[...],
                  preferred_element_type=jnp.float32)          # (R, W*Cout) f32

    # ---- GroupNorm: per-image single-pass sum / sum-of-squares stats (f32)
    acc3 = acc.reshape(Nb, H, WCout)
    s_row = jnp.sum(acc3, axis=1)                              # (Nb, W*Cout)
    q_row = jnp.sum(acc3 * acc3, axis=1)                       # (Nb, W*Cout)

    def fold_to_groups(v):                                     # (Nb, W*Cout) -> (Nb, G)
        vc = jnp.sum(v.reshape(Nb, W, Cout), axis=1)           # fold width
        return jnp.sum(vc.reshape(Nb, G, cpg), axis=2)         # fold chans/group

    def expand_from_groups(v):                                 # (Nb, G) -> (Nb, W*Cout)
        vc = jnp.broadcast_to(v.reshape(Nb, G, 1), (Nb, G, cpg)).reshape(Nb, Cout)
        return jnp.broadcast_to(vc.reshape(Nb, 1, Cout),
                                (Nb, W, Cout)).reshape(Nb, WCout)

    mean_g = fold_to_groups(s_row) / n_per_group               # (Nb, G)
    var_g = fold_to_groups(q_row) / n_per_group - mean_g * mean_g
    inv_g = jax.lax.rsqrt(var_g + 1e-5)

    gamma_t = gb_ref[0:1, :]                                   # (1, W*Cout) f32
    beta_t = gb_ref[1:2, :]
    a = expand_from_groups(inv_g) * gamma_t                    # fused scale
    b = beta_t - expand_from_groups(mean_g) * a                # fused shift
    z = jnp.maximum(acc3 * a[:, None, :] + b[:, None, :], 0.0)  # GN affine + ReLU
    z = z.reshape(R, WCout)

    if upsample:
        # bilinear 2x (align_corners=True): width then height, bf16 MXU matmuls
        zw = jnp.dot(z.astype(jnp.bfloat16), mwk_ref[...],
                     preferred_element_type=jnp.float32)       # (R, 2W*Cout)
        out = jnp.dot(uhb_ref[...], zw.astype(jnp.bfloat16),
                      preferred_element_type=jnp.float32)      # (2R, 2W*Cout)
        o_ref[...] = out.astype(o_ref.dtype)
    else:
        o_ref[...] = z.astype(o_ref.dtype)


def conv3x3_gn_relu_block(x, w, gamma, beta, *, num_groups=32, upsample=True,
                          out_dtype=jnp.float32, block_n=None):
    """x: (N,H,W,Cin) f32/bf16, w: (3,3,Cin,Cout), gamma/beta: (Cout,).
    Returns (N, 2H, 2W, Cout) if upsample else (N, H, W, Cout), in out_dtype."""
    N, H, W, Cin = x.shape
    Cout = w.shape[-1]
    assert Cout % num_groups == 0, "GroupNorm requires Cout % num_groups == 0"
    Nb = _pick_block_n(N, H) if block_n is None else block_n
    assert N % Nb == 0
    WCin, WCout = W * Cin, W * Cout
    R = Nb * H
    # Best performance when W*Cin and W*Cout are multiples of 128 (lane-dense);
    # the kernel is still correct otherwise (masked partial-lane accesses).

    # lane-dense bf16 activations (no-op cast if already bf16 from prev block)
    x2 = x.astype(jnp.bfloat16).reshape(N * H, WCin)
    wf = jnp.asarray(_conv_toeplitz_fused_np(w, W), jnp.bfloat16)  # (3*WCin, WCout)
    gb = jnp.concatenate(
        [jnp.tile(jnp.asarray(gamma, jnp.float32).reshape(1, Cout), (1, W)),
         jnp.tile(jnp.asarray(beta, jnp.float32).reshape(1, Cout), (1, W))],
        axis=0)                                                     # (2, WCout) f32

    in_specs = [
        pl.BlockSpec((R, WCin), lambda n: (n, 0)),
        pl.BlockSpec((3 * WCin, WCout), lambda n: (0, 0)),
        pl.BlockSpec((2, WCout), lambda n: (0, 0)),
    ]
    args = [x2, wf, gb]

    if upsample:
        uhb = jnp.asarray(_height_upsample_blockdiag_np(H, Nb), jnp.bfloat16)
        mwk = jnp.asarray(_width_upsample_kron_np(W, Cout), jnp.bfloat16)
        in_specs += [pl.BlockSpec((2 * R, R), lambda n: (0, 0)),
                     pl.BlockSpec((WCout, 2 * WCout), lambda n: (0, 0))]
        args += [uhb, mwk]
        OH, OWC = 2 * H, 2 * WCout
    else:
        OH, OWC = H, WCout

    def nbytes(shape, dt):
        return int(np.prod(shape)) * jnp.dtype(dt).itemsize

    # VMEM budget from the real working set (double-buffered blocks + scratch
    # + live in-kernel temporaries), plus a small margin.
    blk_bytes = (nbytes((R, WCin), jnp.bfloat16)
                 + nbytes((3 * WCin, WCout), jnp.bfloat16)
                 + nbytes((2, WCout), jnp.float32)
                 + nbytes((Nb * OH, OWC), out_dtype))
    if upsample:
        blk_bytes += (nbytes((2 * R, R), jnp.bfloat16)
                      + nbytes((WCout, 2 * WCout), jnp.bfloat16))
    scratch_bytes = nbytes((R, 3 * WCin), jnp.bfloat16)
    tmp_bytes = 3 * nbytes((R, WCout), jnp.float32)            # acc / z / stats
    if upsample:
        tmp_bytes += (nbytes((R, 2 * WCout), jnp.float32)
                      + nbytes((R, 2 * WCout), jnp.bfloat16)
                      + nbytes((2 * R, 2 * WCout), jnp.float32))
    vmem_limit = min(int(2 * blk_bytes + scratch_bytes + 2 * tmp_bytes + (4 << 20)),
                     96 << 20)

    kernel = functools.partial(_fused_block_kernel, Nb=Nb, H=H, W=W, Cin=Cin,
                               Cout=Cout, num_groups=num_groups, upsample=upsample)

    out = pl.pallas_call(
        kernel,
        out_shape=jax.ShapeDtypeStruct((N * OH, OWC), out_dtype),
        grid=(N // Nb,),
        in_specs=in_specs,
        out_specs=pl.BlockSpec((Nb * OH, OWC), lambda n: (n, 0)),
        scratch_shapes=[pltpu.VMEM((R, 3 * WCin), jnp.bfloat16)],
        compiler_params=pltpu.CompilerParams(
            dimension_semantics=("parallel",),
            vmem_limit_bytes=vmem_limit),
    )(*args)

    if upsample:
        return out.reshape(N, 2 * H, 2 * W, Cout)
    return out.reshape(N, H, W, Cout)


# ----------------------------------------------------------------------------
# SegmentationBlock forward (chained blocks; intermediate HBM tensors in bf16)
# ----------------------------------------------------------------------------
def segmentation_block_forward(x, params, n_upsamples):
    upsample = n_upsamples > 0
    y = x
    n_blocks = len(params)
    for i, (w, gamma, beta) in enumerate(params):
        last = (i == n_blocks - 1)
        y = conv3x3_gn_relu_block(
            y, w, gamma, beta, num_groups=32, upsample=upsample,
            out_dtype=jnp.float32 if last else jnp.bfloat16)
    return y


def init_params(key, in_channels, out_channels, n_upsamples):
    n_blocks = max(1, n_upsamples)
    params = []
    cin = in_channels
    for _ in range(n_blocks):
        k1, k2, k3, key = jax.random.split(key, 4)
        w = 0.1 * jax.random.normal(k1, (3, 3, cin, out_channels), jnp.float32)
        gamma = 1.0 + 0.1 * jax.random.normal(k2, (out_channels,), jnp.float32)
        beta = 0.1 * jax.random.normal(k3, (out_channels,), jnp.float32)
        params.append((w, gamma, beta))
        cin = out_channels
    return params


# ----------------------------------------------------------------------------
# Pure-JAX reference with the same precision policy (bf16 matmul/interp
# operands, f32 accumulation and statistics) but standard XLA ops.
# ----------------------------------------------------------------------------
def ref_forward(x, params, n_upsamples, num_groups=32):
    y = x
    for (w, gamma, beta) in params:
        y = jax.lax.conv_general_dilated(
            y.astype(jnp.bfloat16), jnp.asarray(w, jnp.bfloat16),
            window_strides=(1, 1), padding=((1, 1), (1, 1)),
            dimension_numbers=("NHWC", "HWIO", "NHWC"),
            preferred_element_type=jnp.float32)
        N, H, W, C = y.shape
        cpg = C // num_groups
        yg = y.reshape(N, H, W, num_groups, cpg)
        mean = yg.mean(axis=(1, 2, 4), keepdims=True)
        var = yg.var(axis=(1, 2, 4), keepdims=True)
        yg = (yg - mean) * jax.lax.rsqrt(var + 1e-5)
        y = yg.reshape(N, H, W, C) * gamma + beta
        y = jnp.maximum(y, 0.0)
        if n_upsamples > 0:
            uw = jnp.asarray(_bilinear_matrix_np(W), jnp.bfloat16)
            uh = jnp.asarray(_bilinear_matrix_np(H), jnp.bfloat16)
            y = jnp.einsum("pw,nhwc->nhpc", uw, y.astype(jnp.bfloat16),
                           preferred_element_type=jnp.float32)
            y = jnp.einsum("oh,nhwc->nowc", uh, y.astype(jnp.bfloat16),
                           preferred_element_type=jnp.float32)
    return y


if __name__ == "__main__":
    key = jax.random.PRNGKey(0)
    kx, kp = jax.random.split(key)

    # NCHW view of the input would be [2, 16, 8, 8]; this script uses NHWC.
    N, Cin, Cout, H, W = 2, 16, 64, 8, 8
    n_upsamples = 2

    x = jax.random.normal(kx, (N, H, W, Cin), jnp.float32)       # NHWC
    params = init_params(kp, Cin, Cout, n_upsamples)

    out = segmentation_block_forward(x, params, n_upsamples)
    out = jax.block_until_ready(out)
    assert out.shape == (N, H * 4, W * 4, Cout), out.shape
    assert out.dtype == jnp.float32

    ref = ref_forward(x, params, n_upsamples)
    np.testing.assert_allclose(np.asarray(out), np.asarray(ref),
                               rtol=1e-2, atol=1e-2)
    print("KERNEL_OK")
</pallas_src>

<mosaic_0001>
module attributes {stable_mosaic.version = 11 : i64} {
  func.func @_fused_block_kernel(%arg0: i32, %arg1: memref<16x128xbf16, #tpu.memory_space<vmem>>, %arg2: memref<384x512xbf16, #tpu.memory_space<vmem>>, %arg3: memref<2x512xf32, #tpu.memory_space<vmem>>, %arg4: memref<32x16xbf16, #tpu.memory_space<vmem>>, %arg5: memref<512x1024xbf16, #tpu.memory_space<vmem>>, %arg6: memref<32x1024xbf16, #tpu.memory_space<vmem>>, %arg7: memref<16x384xbf16, #tpu.memory_space<vmem>>) attributes {dimension_semantics = [#tpu.dimension_semantics<parallel>], iteration_bounds = array<i64: 1>, scalar_prefetch = 0 : i64, scratch_operands = 1 : i64, tpu.core_type = #tpu.core_type<tc>, window_params = [{transform_indices = @transform_0, window_bounds = array<i64: 16, 128>}, {pipeline_mode = #tpu.pipeline_mode<synchronous>, transform_indices = @transform_1, window_bounds = array<i64: 384, 512>}, {pipeline_mode = #tpu.pipeline_mode<synchronous>, transform_indices = @transform_2, window_bounds = array<i64: 2, 512>}, {pipeline_mode = #tpu.pipeline_mode<synchronous>, transform_indices = @transform_3, window_bounds = array<i64: 32, 16>}, {pipeline_mode = #tpu.pipeline_mode<synchronous>, transform_indices = @transform_4, window_bounds = array<i64: 512, 1024>}, {transform_indices = @transform_5, window_bounds = array<i64: 32, 1024>}]} {
    %cst = arith.constant 0.000000e+00 : bf16
    %0 = vector.broadcast %cst : bf16 to vector<1x128xbf16>
    %c0 = arith.constant 0 : index
    %c0_0 = arith.constant 0 : index
    %1 = vector.load %arg1[%c0, %c0_0] : memref<16x128xbf16, #tpu.memory_space<vmem>>, vector<16x128xbf16>
    %c0_1 = arith.constant 0 : index
    %c128 = arith.constant 128 : index
    %2 = vector.load %arg7[%c0_1, %c128] : memref<16x384xbf16, #tpu.memory_space<vmem>>, vector<16x128xbf16>
    tpu.vector_store %arg7[%c0_1, %c128], %1 {strides = array<i32>} : memref<16x384xbf16, #tpu.memory_space<vmem>>, vector<16x128xbf16>,
    %c0_2 = arith.constant 0 : index
    %c0_3 = arith.constant 0 : index
    %3 = vector.load %arg1[%c0_2, %c0_3] : memref<16x128xbf16, #tpu.memory_space<vmem>>, vector<15x128xbf16>
    %c1 = arith.constant 1 : index
    %c0_4 = arith.constant 0 : index
    %4 = vector.load %arg7[%c1, %c0_4] : memref<16x384xbf16, #tpu.memory_space<vmem>>, vector<15x128xbf16>
    tpu.vector_store %arg7[%c1, %c0_4], %3 {strides = array<i32>} : memref<16x384xbf16, #tpu.memory_space<vmem>>, vector<15x128xbf16>,
    %c1_5 = arith.constant 1 : index
    %c0_6 = arith.constant 0 : index
    %5 = vector.load %arg1[%c1_5, %c0_6] : memref<16x128xbf16, #tpu.memory_space<vmem>>, vector<15x128xbf16>
    %c0_7 = arith.constant 0 : index
    %c256 = arith.constant 256 : index
    %6 = vector.load %arg7[%c0_7, %c256] : memref<16x384xbf16, #tpu.memory_space<vmem>>, vector<15x128xbf16>
    tpu.vector_store %arg7[%c0_7, %c256], %5 {strides = array<i32>} : memref<16x384xbf16, #tpu.memory_space<vmem>>, vector<15x128xbf16>,
    %c0_8 = arith.constant 0 : index
    %c0_9 = arith.constant 0 : index
    %7 = vector.load %arg7[%c0_8, %c0_9] : memref<16x384xbf16, #tpu.memory_space<vmem>>, vector<1x128xbf16>
    tpu.vector_store %arg7[%c0_8, %c0_9], %0 {strides = array<i32>} : memref<16x384xbf16, #tpu.memory_space<vmem>>, vector<1x128xbf16>,
    %c7 = arith.constant 7 : index
    %c256_10 = arith.constant 256 : index
    %8 = vector.load %arg7[%c7, %c256_10] : memref<16x384xbf16, #tpu.memory_space<vmem>>, vector<1x128xbf16>
    tpu.vector_store %arg7[%c7, %c256_10], %0 {strides = array<i32>} : memref<16x384xbf16, #tpu.memory_space<vmem>>, vector<1x128xbf16>,
    %c8 = arith.constant 8 : index
    %c0_11 = arith.constant 0 : index
    %9 = vector.load %arg7[%c8, %c0_11] : memref<16x384xbf16, #tpu.memory_space<vmem>>, vector<1x128xbf16>
    tpu.vector_store %arg7[%c8, %c0_11], %0 {strides = array<i32>} : memref<16x384xbf16, #tpu.memory_space<vmem>>, vector<1x128xbf16>,
    %c15 = arith.constant 15 : index
    %c256_12 = arith.constant 256 : index
    %10 = vector.load %arg7[%c15, %c256_12] : memref<16x384xbf16, #tpu.memory_space<vmem>>, vector<1x128xbf16>
    tpu.vector_store %arg7[%c15, %c256_12], %0 {strides = array<i32>} : memref<16x384xbf16, #tpu.memory_space<vmem>>, vector<1x128xbf16>,
    %c0_13 = arith.constant 0 : index
    %c0_14 = arith.constant 0 : index
    %11 = vector.load %arg7[%c0_13, %c0_14] : memref<16x384xbf16, #tpu.memory_space<vmem>>, vector<16x384xbf16>
    %c0_15 = arith.constant 0 : index
    %c0_16 = arith.constant 0 : index
    %12 = vector.load %arg2[%c0_15, %c0_16] : memref<384x512xbf16, #tpu.memory_space<vmem>>, vector<384x512xbf16>
    %cst_17 = arith.constant dense<0.000000e+00> : vector<16x512xf32>
    %13 = tpu.matmul %11, %12, %cst_17 {dimension_numbers = #tpu.dot_dimension_numbers<[1], [0], [0], [1], [0, 0, 1, 1], [], []>} : vector<16x384xbf16>, vector<384x512xbf16>, vector<16x512xf32> -> vector<16x512xf32>
    %14 = vector.shape_cast %13 : vector<16x512xf32> to vector<2x8x512xf32>
    %cst_18 = arith.constant dense<0.000000e+00> : vector<2x512xf32>
    %15 = vector.multi_reduction <add>, %14, %cst_18 [1] : vector<2x8x512xf32> to vector<2x512xf32>
    %16 = arith.mulf %14, %14 : vector<2x8x512xf32>
    %cst_19 = arith.constant dense<0.000000e+00> : vector<2x512xf32>
    %17 = vector.multi_reduction <add>, %16, %cst_19 [1] : vector<2x8x512xf32> to vector<2x512xf32>
    %18 = vector.shape_cast %15 : vector<2x512xf32> to vector<2x8x64xf32>
    %cst_20 = arith.constant dense<0.000000e+00> : vector<2x64xf32>
    %19 = vector.multi_reduction <add>, %18, %cst_20 [1] : vector<2x8x64xf32> to vector<2x64xf32>
    %20 = vector.shape_cast %19 : vector<2x64xf32> to vector<2x32x2xf32>
    %cst_21 = arith.constant dense<0.000000e+00> : vector<2x32xf32>
    %21 = vector.multi_reduction <add>, %20, %cst_21 [2] : vector<2x32x2xf32> to vector<2x32xf32>
    %cst_22 = arith.constant 1.280000e+02 : f32
    %22 = vector.broadcast %cst_22 : f32 to vector<2x32xf32>
    %23 = arith.divf %21, %22 : vector<2x32xf32>
    %24 = vector.shape_cast %17 : vector<2x512xf32> to vector<2x8x64xf32>
    %cst_23 = arith.constant dense<0.000000e+00> : vector<2x64xf32>
    %25 = vector.multi_reduction <add>, %24, %cst_23 [1] : vector<2x8x64xf32> to vector<2x64xf32>
    %26 = vector.shape_cast %25 : vector<2x64xf32> to vector<2x32x2xf32>
    %cst_24 = arith.constant dense<0.000000e+00> : vector<2x32xf32>
    %27 = vector.multi_reduction <add>, %26, %cst_24 [2] : vector<2x32x2xf32> to vector<2x32xf32>
    %cst_25 = arith.constant 1.280000e+02 : f32
    %28 = vector.broadcast %cst_25 : f32 to vector<2x32xf32>
    %29 = arith.divf %27, %28 : vector<2x32xf32>
    %30 = arith.mulf %23, %23 : vector<2x32xf32>
    %31 = arith.subf %29, %30 : vector<2x32xf32>
    %cst_26 = arith.constant 9.99999974E-6 : f32
    %32 = vector.broadcast %cst_26 : f32 to vector<2x32xf32>
    %33 = arith.addf %31, %32 : vector<2x32xf32>
    %34 = math.rsqrt %33 : vector<2x32xf32>
    %c0_27 = arith.constant 0 : index
    %c0_28 = arith.constant 0 : index
    %35 = vector.load %arg3[%c0_27, %c0_28] : memref<2x512xf32, #tpu.memory_space<vmem>>, vector<1x512xf32>
    %c1_29 = arith.constant 1 : index
    %c0_30 = arith.constant 0 : index
    %36 = vector.load %arg3[%c1_29, %c0_30] : memref<2x512xf32, #tpu.memory_space<vmem>>, vector<1x512xf32>
    %37 = vector.shape_cast %34 : vector<2x32xf32> to vector<2x32x1xf32>
    %38 = vector.shape_cast %37 : vector<2x32x1xf32> to vector<2x32x1xf32>
    %39 = vector.broadcast %38 : vector<2x32x1xf32> to vector<2x32x2xf32>
    %40 = vector.shape_cast %39 : vector<2x32x2xf32> to vector<2x64xf32>
    %41 = vector.shape_cast %40 : vector<2x64xf32> to vector<2x1x64xf32>
    %42 = vector.shape_cast %41 : vector<2x1x64xf32> to vector<2x1x64xf32>
    %43 = vector.broadcast %42 : vector<2x1x64xf32> to vector<2x8x64xf32>
    %44 = vector.shape_cast %43 : vector<2x8x64xf32> to vector<2x512xf32>
    %45 = vector.broadcast %35 : vector<1x512xf32> to vector<2x512xf32>
    %46 = arith.mulf %44, %45 : vector<2x512xf32>
    %47 = vector.shape_cast %23 : vector<2x32xf32> to vector<2x32x1xf32>
    %48 = vector.shape_cast %47 : vector<2x32x1xf32> to vector<2x32x1xf32>
    %49 = vector.broadcast %48 : vector<2x32x1xf32> to vector<2x32x2xf32>
    %50 = vector.shape_cast %49 : vector<2x32x2xf32> to vector<2x64xf32>
    %51 = vector.shape_cast %50 : vector<2x64xf32> to vector<2x1x64xf32>
    %52 = vector.shape_cast %51 : vector<2x1x64xf32> to vector<2x1x64xf32>
    %53 = vector.broadcast %52 : vector<2x1x64xf32> to vector<2x8x64xf32>
    %54 = vector.shape_cast %53 : vector<2x8x64xf32> to vector<2x512xf32>
    %55 = arith.mulf %54, %46 : vector<2x512xf32>
    %56 = vector.broadcast %36 : vector<1x512xf32> to vector<2x512xf32>
    %57 = arith.subf %56, %55 : vector<2x512xf32>
    %58 = vector.shape_cast %46 : vector<2x512xf32> to vector<2x1x512xf32>
    %59 = vector.broadcast %58 : vector<2x1x512xf32> to vector<2x8x512xf32>
    %60 = arith.mulf %14, %59 : vector<2x8x512xf32>
    %61 = vector.shape_cast %57 : vector<2x512xf32> to vector<2x1x512xf32>
    %62 = vector.broadcast %61 : vector<2x1x512xf32> to vector<2x8x512xf32>
    %63 = arith.addf %60, %62 : vector<2x8x512xf32>
    %cst_31 = arith.constant 0.000000e+00 : f32
    %64 = vector.broadcast %cst_31 : f32 to vector<2x8x512xf32>
    %65 = arith.maximumf %63, %64 : vector<2x8x512xf32>
    %66 = vector.shape_cast %65 : vector<2x8x512xf32> to vector<16x512xf32>
    %67 = arith.truncf %66 : vector<16x512xf32> to vector<16x512xbf16>
    %c0_32 = arith.constant 0 : index
    %c0_33 = arith.constant 0 : index
    %68 = vector.load %arg5[%c0_32, %c0_33] : memref<512x1024xbf16, #tpu.memory_space<vmem>>, vector<512x1024xbf16>
    %cst_34 = arith.constant dense<0.000000e+00> : vector<16x1024xf32>
    %69 = tpu.matmul %67, %68, %cst_34 {dimension_numbers = #tpu.dot_dimension_numbers<[1], [0], [0], [1], [0, 0, 1, 1], [], []>} : vector<16x512xbf16>, vector<512x1024xbf16>, vector<16x1024xf32> -> vector<16x1024xf32>
    %c0_35 = arith.constant 0 : index
    %c0_36 = arith.constant 0 : index
    %70 = vector.load %arg4[%c0_35, %c0_36] : memref<32x16xbf16, #tpu.memory_space<vmem>>, vector<32x16xbf16>
    %71 = arith.truncf %69 : vector<16x1024xf32> to vector<16x1024xbf16>
    %cst_37 = arith.constant dense<0.000000e+00> : vector<32x1024xf32>
    %72 = tpu.matmul %70, %71, %cst_37 {dimension_numbers = #tpu.dot_dimension_numbers<[1], [0], [0], [1], [0, 0, 1, 1], [], []>} : vector<32x16xbf16>, vector<16x1024xbf16>, vector<32x1024xf32> -> vector<32x1024xf32>
    %73 = arith.truncf %72 : vector<32x1024xf32> to vector<32x1024xbf16>
    %c0_38 = arith.constant 0 : index
    %c0_39 = arith.constant 0 : index
    %74 = vector.load %arg6[%c0_38, %c0_39] : memref<32x1024xbf16, #tpu.memory_space<vmem>>, vector<32x1024xbf16>
    tpu.vector_store %arg6[%c0_38, %c0_39], %73 {strides = array<i32>} : memref<32x1024xbf16, #tpu.memory_space<vmem>>, vector<32x1024xbf16>,
    return
  }
  func.func @transform_0(%arg0: i32) -> (i32, i32) {
    %c0_i32 = arith.constant 0 : i32
    %c0_i32_0 = arith.constant 0 : i32
    return %arg0, %c0_i32 : i32, i32
  }
  func.func @transform_1(%arg0: i32) -> (i32, i32) {
    %c0_i32 = arith.constant 0 : i32
    %c0_i32_0 = arith.constant 0 : i32
    %c0_i32_1 = arith.constant 0 : i32
    return %c0_i32, %c0_i32_0 : i32, i32
  }
  func.func @transform_2(%arg0: i32) -> (i32, i32) {
    %c0_i32 = arith.constant 0 : i32
    %c0_i32_0 = arith.constant 0 : i32
    %c0_i32_1 = arith.constant 0 : i32
    return %c0_i32, %c0_i32_0 : i32, i32
  }
  func.func @transform_3(%arg0: i32) -> (i32, i32) {
    %c0_i32 = arith.constant 0 : i32
    %c0_i32_0 = arith.constant 0 : i32
    %c0_i32_1 = arith.constant 0 : i32
    return %c0_i32, %c0_i32_0 : i32, i32
  }
  func.func @transform_4(%arg0: i32) -> (i32, i32) {
    %c0_i32 = arith.constant 0 : i32
    %c0_i32_0 = arith.constant 0 : i32
    %c0_i32_1 = arith.constant 0 : i32
    return %c0_i32, %c0_i32_0 : i32, i32
  }
  func.func @transform_5(%arg0: i32) -> (i32, i32) {
    %c0_i32 = arith.constant 0 : i32
    %c0_i32_0 = arith.constant 0 : i32
    return %arg0, %c0_i32 : i32, i32
  }
}

</mosaic_0001>

<llo_original>
// kernel: tpu_custom_call.1
$region0: #{tpu_custom_call.1}
  #allocation0 [shape = 'u32[]', space=smem, size = 0x4, offset = 0x4, fixed_abs, tag = 'smem constant byte address 0x4 - core index']
  #allocation1 [shape = 'u32[144,128]{1,0:T(1,128)}', space=vmem, size = 0x12000, scoped, tag = 'internal scratch']
  #allocation2 [shape = 'bf16[16,384]{1,0:T(16,128)(2,1)}', space=vmem, size = 0x3000, scoped, tag = 'scratch operand']
  %s0 = inlined_call_operand.vmem [shape: bf16[16,128], index: 0, kind: input, shape index: {}]
  %s1 = inlined_call_operand.hbm [shape: bf16[384,512], index: 1, kind: input, shape index: {}]
  %s2 = inlined_call_operand.vmem [shape: f32[2,512], index: 2, kind: input, shape index: {}]
  %s3 = inlined_call_operand.vmem [shape: bf16[32,16], index: 3, kind: input, shape index: {}]
  %s4 = inlined_call_operand.hbm [shape: bf16[512,1024], index: 4, kind: input, shape index: {}]
  %s5 = inlined_call_operand.hbm [shape: bf16[32,1024], index: 5, kind: output, shape index: {}]
  %s6 = sld [smem:[#allocation0]]
  $region38: #{tpu_custom_call.1} parent=0
    _
  %s8 = ssub.s32 1, %s6
  %s9 = scalar_select 0, %s8, %s6
  $region1: #{tpu_custom_call.1} parent=0
    #allocation3 [shape = 'u8[393216]{0}', space=vmem, size = 0x60000, scoped, tag = 'input window, operand 1, single buffered']
    #allocation4 [shape = 's32[1]{0}', space=sflag, size = 0x4, scoped, tag = 'scoped memory for tpu_custom_call.1']
    #allocation5 [shape = 's32[1]{0}', space=sflag, size = 0x4, scoped, tag = 'scoped memory for tpu_custom_call.1']
    #allocation6 [shape = 'u8[1048576]{0}', space=vmem, size = 0x100000, scoped, tag = 'input window, operand 4, single buffered']
    #allocation7 [shape = 's32[1]{0}', space=sflag, size = 0x4, scoped, tag = 'scoped memory for tpu_custom_call.1']
    #allocation8 [shape = 'u8[65536]{0}', space=vmem, size = 0x10000, scoped, tag = 'output window, operand 0, single buffered']
    %10 = vsyncpa [#allocation4], 0
    %11 = vsyncpa [#allocation7], 0
    %12 = vsyncpa [#allocation5], 0
    // Predicated region
    $region2: #{tpu_custom_call.1} parent=1 // pred_check
      _
    $region3: #{tpu_custom_call.1} parent=1 // pred_check_branch
      %14 = sbr.rel (0) target = $region5
    $region4: #{tpu_custom_call.1} parent=1 // pred_region
      _
    $region5: #{tpu_custom_call.1} parent=1 // pred_fallthru
      _
    // Predicated region
    $region6: #{tpu_custom_call.1} parent=1 // pred_check
      _
    $region7: #{tpu_custom_call.1} parent=1 // pred_check_branch
      %16 = sbr.rel (0) target = $region9
    $region8: #{tpu_custom_call.1} parent=1 // pred_region
      %s18 = ssub.s32 12288, 12288
      %19 = vsyncadd [#allocation4], %s18
      %s20 = sshll.u32 [#allocation3], 4
      %s21 = int_to_ptr.vmem [resolvable:$true] %s20
      %26 = dma.hbm_to_vmem [thread:$0]  %s1, 12288, %s21, [#allocation4], 256, 256, 16
    $region9: #{tpu_custom_call.1} parent=1 // pred_fallthru
      _
    // Predicated region
    $region10: #{tpu_custom_call.1} parent=1 // pred_check
      _
    $region11: #{tpu_custom_call.1} parent=1 // pred_check_branch
      %28 = sbr.rel (0) target = $region13
    $region12: #{tpu_custom_call.1} parent=1 // pred_region
      _
    $region13: #{tpu_custom_call.1} parent=1 // pred_fallthru
      _
    // Predicated region
    $region14: #{tpu_custom_call.1} parent=1 // pred_check
      _
    $region15: #{tpu_custom_call.1} parent=1 // pred_check_branch
      %30 = sbr.rel (0) target = $region17
    $region16: #{tpu_custom_call.1} parent=1 // pred_region
      _
    $region17: #{tpu_custom_call.1} parent=1 // pred_fallthru
      _
    // Predicated region
    $region18: #{tpu_custom_call.1} parent=1 // pred_check
      _
    $region19: #{tpu_custom_call.1} parent=1 // pred_check_branch
      %32 = sbr.rel (0) target = $region21
    $region20: #{tpu_custom_call.1} parent=1 // pred_region
      %s34 = ssub.s32 32768, 32768
      %35 = vsyncadd [#allocation7], %s34
      %s36 = sshll.u32 [#allocation6], 4
      %s37 = int_to_ptr.vmem [resolvable:$true] %s36
      %42 = dma.hbm_to_vmem [thread:$0]  %s4, 32768, %s37, [#allocation7], 512, 512, 32
    $region21: #{tpu_custom_call.1} parent=1 // pred_fallthru
      _
    // Predicated region
    $region22: #{tpu_custom_call.1} parent=1 // pred_check
      _
    $region23: #{tpu_custom_call.1} parent=1 // pred_check_branch
      %44 = sbr.rel (0) target = $region25
    $region24: #{tpu_custom_call.1} parent=1 // pred_region
      %45 = dma.done [#allocation4], 12288
    $region25: #{tpu_custom_call.1} parent=1 // pred_fallthru
      _
    // Predicated region
    $region26: #{tpu_custom_call.1} parent=1 // pred_check
      _
    $region27: #{tpu_custom_call.1} parent=1 // pred_check_branch
      %47 = sbr.rel (0) target = $region29
    $region28: #{tpu_custom_call.1} parent=1 // pred_region
      %48 = dma.done [#allocation7], 32768
    $region29: #{tpu_custom_call.1} parent=1 // pred_fallthru
      _
    %v50 = vld [vmem:[%s0] sm:$0xf]
    %v51 = vld [vmem:[%s0 + $0x4] sm:$0xf]
    %v54 = vunpack.c.l.b16 %v50
    %v55 = vunpack.c.l.b16 %v51
    %v56 = vpack.c.b16 %v55, %v54
    %58 = vst [vmem:[#allocation2 + $0x8] sm:$0xff] %v56
    %v59 = vld [vmem:[%s0] sm:$0xf]
    %v60 = vld [vmem:[%s0 + $0x4] sm:$0xf]
    %v63 = vunpack.c.l.b16 %v59
    %v64 = vunpack.c.l.b16 %v60
    %v65 = vpack.c.b16 %v64, %v63
    %v67 = vshrl.u32 %v65, 16
    %v69 = vrot.slane %v67, 7
    %v70 = vshll.u32 %v65, 16
    %v72 = vor.u32 %v69, %v70
    %vm74 = vcmask 1047552
    %vm75 = vsmask.f32 7938
    %vm76 = vmand %vm74, %vm75
    %v77 = vld [vmem:[#allocation2] sm:$0xff]
    %v78 = vsel %vm76, %v72, %v77
    %79 = vst [vmem:[#allocation2] sm:$0xff] %v78
    %v80 = vld [vmem:[%s0] sm:$0xf]
    %v81 = vld [vmem:[%s0 + $0x4] sm:$0xf]
    %v84 = vunpack.c.l.b16 %v80
    %v85 = vunpack.c.l.b16 %v81
    %v86 = vpack.c.b16 %v85, %v84
    %v88 = vshrl.u32 %v86, 16
    %v90 = vshll.u32 %v86, 16
    %v92 = vrot.slane %v90, 1
    %v93 = vor.u32 %v88, %v92
    %vm95 = vsmask.f32 7424
    %vm96 = vmand %vm74, %vm95
    %v97 = vld [vmem:[#allocation2 + $0x10] sm:$0xff]
    %v98 = vsel %vm96, %v93, %v97
    %99 = vst [vmem:[#allocation2 + $0x10] sm:$0xff] %v98
    %vm100 = vcmask 1040384
    %vm101 = vsmask.f32 256
    %vm102 = vmand %vm100, %vm101
    %v103 = vld [vmem:[#allocation2] sm:$0x1]
    %v104 = vsel %vm102, 0, %v103
    %105 = vst [vmem:[#allocation2] sm:$0x1] %v104
    %vm106 = vcmask 1043459
    %vm107 = vsmask.f32 7950
    %vm108 = vmand %vm106, %vm107
    %v109 = vld [vmem:[#allocation2 + $0x10] sm:$0x8]
    %v110 = vsel %vm108, 0, %v109
    %111 = vst [vmem:[#allocation2 + $0x10] sm:$0x8] %v110
    %vm112 = vcmask 1044484
    %vm113 = vsmask.f32 4352
    %vm114 = vmand %vm112, %vm113
    %v115 = vld [vmem:[#allocation2] sm:$0x10]
    %v116 = vsel %vm114, 0, %v115
    %117 = vst [vmem:[#allocation2] sm:$0x10] %v116
    %vm118 = vcmask 1047559
    %vm119 = vsmask.f32 7966
    %vm120 = vmand %vm118, %vm119
    %v121 = vld [vmem:[#allocation2 + $0x10] sm:$0x80]
    %v122 = vsel %vm120, 0, %v121
    %123 = vst [vmem:[#allocation2 + $0x10] sm:$0x80] %v122
    %v124 = vld [vmem:[#allocation2] sm:$0xff]
    %v125 = vld [vmem:[#allocation2 + $0x8] sm:$0xff]
    %v126 = vld [vmem:[#allocation2 + $0x10] sm:$0xff]
    %v127 = vld [vmem:[#allocation3] sm:$0xff]
    %v128 = vld [vmem:[#allocation3 + $0x8] sm:$0xff]
    %v129 = vld [vmem:[#allocation3 + $0x10] sm:$0xff]
    %v130 = vld [vmem:[#allocation3 + $0x18] sm:$0xff]
    %v131 = vld [vmem:[#allocation3 + $0x20] sm:$0xff]
    %v132 = vld [vmem:[#allocation3 + $0x28] sm:$0xff]
    %v133 = vld [vmem:[#allocation3 + $0x30] sm:$0xff]
    %v134 = vld [vmem:[#allocation3 + $0x38] sm:$0xff]
    %v135 = vld [vmem:[#allocation3 + $0x40] sm:$0xff]
    %v136 = vld [vmem:[#allocation3 + $0x48] sm:$0xff]
    %v137 = vld [vmem:[#allocation3 + $0x50] sm:$0xff]
    %v138 = vld [vmem:[#allocation3 + $0x58] sm:$0xff]
    %v139 = vld [vmem:[#allocation3 + $0x60] sm:$0xff]
    %v140 = vld [vmem:[#allocation3 + $0x68] sm:$0xff]
    %v141 = vld [vmem:[#allocation3 + $0x70] sm:$0xff]
    %v142 = vld [vmem:[#allocation3 + $0x78] sm:$0xff]
    %v143 = vld [vmem:[#allocation3 + $0x80] sm:$0xff]
    %v144 = vld [vmem:[#allocation3 + $0x88] sm:$0xff]
    %v145 = vld [vmem:[#allocation3 + $0x90] sm:$0xff]
    %v146 = vld [vmem:[#allocation3 + $0x98] sm:$0xff]
    %v147 = vld [vmem:[#allocation3 + $0xa0] sm:$0xff]
    %v148 = vld [vmem:[#allocation3 + $0xa8] sm:$0xff]
    %v149 = vld [vmem:[#allocation3 + $0xb0] sm:$0xff]
    %v150 = vld [vmem:[#allocation3 + $0xb8] sm:$0xff]
    %v151 = vld [vmem:[#allocation3 + $0xc0] sm:$0xff]
    %v152 = vld [vmem:[#allocation3 + $0xc8] sm:$0xff]
    %v153 = vld [vmem:[#allocation3 + $0xd0] sm:$0xff]
    %v154 = vld [vmem:[#allocation3 + $0xd8] sm:$0xff]
    %v155 = vld [vmem:[#allocation3 + $0xe0] sm:$0xff]
    %v156 = vld [vmem:[#allocation3 + $0xe8] sm:$0xff]
    %v157 = vld [vmem:[#allocation3 + $0xf0] sm:$0xff]
    %v158 = vld [vmem:[#allocation3 + $0xf8] sm:$0xff]
    %v159 = vld [vmem:[#allocation3 + $0x100] sm:$0xff]
    %v160 = vld [vmem:[#allocation3 + $0x108] sm:$0xff]
    %v161 = vld [vmem:[#allocation3 + $0x110] sm:$0xff]
    %v162 = vld [vmem:[#allocation3 + $0x118] sm:$0xff]
    %v163 = vld [vmem:[#allocation3 + $0x120] sm:$0xff]
    %v164 = vld [vmem:[#allocation3 + $0x128] sm:$0xff]
    %v165 = vld [vmem:[#allocation3 + $0x130] sm:$0xff]
    %v166 = vld [vmem:[#allocation3 + $0x138] sm:$0xff]
    %v167 = vld [vmem:[#allocation3 + $0x140] sm:$0xff]
    %v168 = vld [vmem:[#allocation3 + $0x148] sm:$0xff]
    %v169 = vld [vmem:[#allocation3 + $0x150] sm:$0xff]
    %v170 = vld [vmem:[#allocation3 + $0x158] sm:$0xff]
    %v171 = vld [vmem:[#allocation3 + $0x160] sm:$0xff]
    %v172 = vld [vmem:[#allocation3 + $0x168] sm:$0xff]
    %v173 = vld [vmem:[#allocation3 + $0x170] sm:$0xff]
    %v174 = vld [vmem:[#allocation3 + $0x178] sm:$0xff]
    %v175 = vld [vmem:[#allocation3 + $0x180] sm:$0xff]
    %v176 = vld [vmem:[#allocation3 + $0x188] sm:$0xff]
    %v177 = vld [vmem:[#allocation3 + $0x190] sm:$0xff]
    %v178 = vld [vmem:[#allocation3 + $0x198] sm:$0xff]
    %v179 = vld [vmem:[#allocation3 + $0x1a0] sm:$0xff]
    %v180 = vld [vmem:[#allocation3 + $0x1a8] sm:$0xff]
    %v181 = vld [vmem:[#allocation3 + $0x1b0] sm:$0xff]
    %v182 = vld [vmem:[#allocation3 + $0x1b8] sm:$0xff]
    %v183 = vld [vmem:[#allocation3 + $0x1c0] sm:$0xff]
    %v184 = vld [vmem:[#allocation3 + $0x1c8] sm:$0xff]
    %v185 = vld [vmem:[#allocation3 + $0x1d0] sm:$0xff]
    %v186 = vld [vmem:[#allocation3 + $0x1d8] sm:$0xff]
    %v187 = vld [vmem:[#allocation3 + $0x1e0] sm:$0xff]
    %v188 = vld [vmem:[#allocation3 + $0x1e8] sm:$0xff]
    %v189 = vld [vmem:[#allocation3 + $0x1f0] sm:$0xff]
    %v190 = vld [vmem:[#allocation3 + $0x1f8] sm:$0xff]
    %v191 = vld [vmem:[#allocation3 + $0x200] sm:$0xff]
    %v192 = vld [vmem:[#allocation3 + $0x208] sm:$0xff]
    %v193 = vld [vmem:[#allocation3 + $0x210] sm:$0xff]
    %v194 = vld [vmem:[#allocation3 + $0x218] sm:$0xff]
    %v195 = vld [vmem:[#allocation3 + $0x220] sm:$0xff]
    %v196 = vld [vmem:[#allocation3 + $0x228] sm:$0xff]
    %v197 = vld [vmem:[#allocation3 + $0x230] sm:$0xff]
    %v198 = vld [vmem:[#allocation3 + $0x238] sm:$0xff]
    %v199 = vld [vmem:[#allocation3 + $0x240] sm:$0xff]
    %v200 = vld [vmem:[#allocation3 + $0x248] sm:$0xff]
    %v201 = vld [vmem:[#allocation3 + $0x250] sm:$0xff]
    %v202 = vld [vmem:[#allocation3 + $0x258] sm:$0xff]
    %v203 = vld [vmem:[#allocation3 + $0x260] sm:$0xff]
    %v204 = vld [vmem:[#allocation3 + $0x268] sm:$0xff]
    %v205 = vld [vmem:[#allocation3 + $0x270] sm:$0xff]
    %v206 = vld [vmem:[#allocation3 + $0x278] sm:$0xff]
    %v207 = vld [vmem:[#allocation3 + $0x280] sm:$0xff]
    %v208 = vld [vmem:[#allocation3 + $0x288] sm:$0xff]
    %v209 = vld [vmem:[#allocation3 + $0x290] sm:$0xff]
    %v210 = vld [vmem:[#allocation3 + $0x298] sm:$0xff]
    %v211 = vld [vmem:[#allocation3 + $0x2a0] sm:$0xff]
    %v212 = vld [vmem:[#allocation3 + $0x2a8] sm:$0xff]
    %v213 = vld [vmem:[#allocation3 + $0x2b0] sm:$0xff]
    %v214 = vld [vmem:[#allocation3 + $0x2b8] sm:$0xff]
    %v215 = vld [vmem:[#allocation3 + $0x2c0] sm:$0xff]
    %v216 = vld [vmem:[#allocation3 + $0x2c8] sm:$0xff]
    %v217 = vld [vmem:[#allocation3 + $0x2d0] sm:$0xff]
    %v218 = vld [vmem:[#allocation3 + $0x2d8] sm:$0xff]
    %v219 = vld [vmem:[#allocation3 + $0x2e0] sm:$0xff]
    %v220 = vld [vmem:[#allocation3 + $0x2e8] sm:$0xff]
    %v221 = vld [vmem:[#allocation3 + $0x2f0] sm:$0xff]
    %v222 = vld [vmem:[#allocation3 + $0x2f8] sm:$0xff]
    %v319 = vunpack.c.l.b16 %v127
    %v320 = vunpack.c.h.b16 %v127
    %v321 = vunpack.c.l.b16 %v128
    %v322 = vunpack.c.h.b16 %v128
    %v323 = vunpack.c.l.b16 %v129
    %v324 = vunpack.c.h.b16 %v129
    %v325 = vunpack.c.l.b16 %v130
    %v326 = vunpack.c.h.b16 %v130
    %v327 = vunpack.c.l.b16 %v131
    %v328 = vunpack.c.h.b16 %v131
    %v329 = vunpack.c.l.b16 %v132
    %v330 = vunpack.c.h.b16 %v132
    %v331 = vunpack.c.l.b16 %v133
    %v332 = vunpack.c.h.b16 %v133
    %v333 = vunpack.c.l.b16 %v134
    %v334 = vunpack.c.h.b16 %v134
    %v335 = vunpack.c.l.b16 %v135
    %v336 = vunpack.c.h.b16 %v135
    %v337 = vunpack.c.l.b16 %v136
    %v338 = vunpack.c.h.b16 %v136
    %v339 = vunpack.c.l.b16 %v137
    %v340 = vunpack.c.h.b16 %v137
    %v341 = vunpack.c.l.b16 %v138
    %v342 = vunpack.c.h.b16 %v138
    %v343 = vunpack.c.l.b16 %v139
    %v344 = vunpack.c.h.b16 %v139
    %v345 = vunpack.c.l.b16 %v140
    %v346 = vunpack.c.h.b16 %v140
    %v347 = vunpack.c.l.b16 %v141
    %v348 = vunpack.c.h.b16 %v141
    %v349 = vunpack.c.l.b16 %v142
    %v350 = vunpack.c.h.b16 %v142
    %v351 = vunpack.c.l.b16 %v143
    %v352 = vunpack.c.h.b16 %v143
    %v353 = vunpack.c.l.b16 %v144
    %v354 = vunpack.c.h.b16 %v144
    %v355 = vunpack.c.l.b16 %v145
    %v356 = vunpack.c.h.b16 %v145
    %v357 = vunpack.c.l.b16 %v146
    %v358 = vunpack.c.h.b16 %v146
    %v359 = vunpack.c.l.b16 %v147
    %v360 = vunpack.c.h.b16 %v147
    %v361 = vunpack.c.l.b16 %v148
    %v362 = vunpack.c.h.b16 %v148
    %v363 = vunpack.c.l.b16 %v149
    %v364 = vunpack.c.h.b16 %v149
    %v365 = vunpack.c.l.b16 %v150
    %v366 = vunpack.c.h.b16 %v150
    %v367 = vunpack.c.l.b16 %v151
    %v368 = vunpack.c.h.b16 %v151
    %v369 = vunpack.c.l.b16 %v152
    %v370 = vunpack.c.h.b16 %v152
    %v371 = vunpack.c.l.b16 %v153
    %v372 = vunpack.c.h.b16 %v153
    %v373 = vunpack.c.l.b16 %v154
    %v374 = vunpack.c.h.b16 %v154
    %v375 = vunpack.c.l.b16 %v155
    %v376 = vunpack.c.h.b16 %v155
    %v377 = vunpack.c.l.b16 %v156
    %v378 = vunpack.c.h.b16 %v156
    %v379 = vunpack.c.l.b16 %v157
    %v380 = vunpack.c.h.b16 %v157
    %v381 = vunpack.c.l.b16 %v158
    %v382 = vunpack.c.h.b16 %v158
    %v383 = vunpack.c.l.b16 %v159
    %v384 = vunpack.c.h.b16 %v159
    %v385 = vunpack.c.l.b16 %v160
    %v386 = vunpack.c.h.b16 %v160
    %v387 = vunpack.c.l.b16 %v161
    %v388 = vunpack.c.h.b16 %v161
    %v389 = vunpack.c.l.b16 %v162
    %v390 = vunpack.c.h.b16 %v162
    %v391 = vunpack.c.l.b16 %v163
    %v392 = vunpack.c.h.b16 %v163
    %v393 = vunpack.c.l.b16 %v164
    %v394 = vunpack.c.h.b16 %v164
    %v395 = vunpack.c.l.b16 %v165
    %v396 = vunpack.c.h.b16 %v165
    %v397 = vunpack.c.l.b16 %v166
    %v398 = vunpack.c.h.b16 %v166
    %v399 = vunpack.c.l.b16 %v167
    %v400 = vunpack.c.h.b16 %v167
    %v401 = vunpack.c.l.b16 %v168
    %v402 = vunpack.c.h.b16 %v168
    %v403 = vunpack.c.l.b16 %v169
    %v404 = vunpack.c.h.b16 %v169
    %v405 = vunpack.c.l.b16 %v170
    %v406 = vunpack.c.h.b16 %v170
    %v407 = vunpack.c.l.b16 %v171
    %v408 = vunpack.c.h.b16 %v171
    %v409 = vunpack.c.l.b16 %v172
    %v410 = vunpack.c.h.b16 %v172
    %v411 = vunpack.c.l.b16 %v173
    %v412 = vunpack.c.h.b16 %v173
    %v413 = vunpack.c.l.b16 %v174
    %v414 = vunpack.c.h.b16 %v174
    %v415 = vunpack.c.l.b16 %v175
    %v416 = vunpack.c.h.b16 %v175
    %v417 = vunpack.c.l.b16 %v176
    %v418 = vunpack.c.h.b16 %v176
    %v419 = vunpack.c.l.b16 %v177
    %v420 = vunpack.c.h.b16 %v177
    %v421 = vunpack.c.l.b16 %v178
    %v422 = vunpack.c.h.b16 %v178
    %v423 = vunpack.c.l.b16 %v179
    %v424 = vunpack.c.h.b16 %v179
    %v425 = vunpack.c.l.b16 %v180
    %v426 = vunpack.c.h.b16 %v180
    %v427 = vunpack.c.l.b16 %v181
    %v428 = vunpack.c.h.b16 %v181
    %v429 = vunpack.c.l.b16 %v182
    %v430 = vunpack.c.h.b16 %v182
    %v431 = vunpack.c.l.b16 %v183
    %v432 = vunpack.c.h.b16 %v183
    %v433 = vunpack.c.l.b16 %v184
    %v434 = vunpack.c.h.b16 %v184
    %v435 = vunpack.c.l.b16 %v185
    %v436 = vunpack.c.h.b16 %v185
    %v437 = vunpack.c.l.b16 %v186
    %v438 = vunpack.c.h.b16 %v186
    %v439 = vunpack.c.l.b16 %v187
    %v440 = vunpack.c.h.b16 %v187
    %v441 = vunpack.c.l.b16 %v188
    %v442 = vunpack.c.h.b16 %v188
    %v443 = vunpack.c.l.b16 %v189
    %v444 = vunpack.c.h.b16 %v189
    %v445 = vunpack.c.l.b16 %v190
    %v446 = vunpack.c.h.b16 %v190
    %v447 = vunpack.c.l.b16 %v191
    %v448 = vunpack.c.h.b16 %v191
    %v449 = vunpack.c.l.b16 %v192
    %v450 = vunpack.c.h.b16 %v192
    %v451 = vunpack.c.l.b16 %v193
    %v452 = vunpack.c.h.b16 %v193
    %v453 = vunpack.c.l.b16 %v194
    %v454 = vunpack.c.h.b16 %v194
    %v455 = vunpack.c.l.b16 %v195
    %v456 = vunpack.c.h.b16 %v195
    %v457 = vunpack.c.l.b16 %v196
    %v458 = vunpack.c.h.b16 %v196
    %v459 = vunpack.c.l.b16 %v197
    %v460 = vunpack.c.h.b16 %v197
    %v461 = vunpack.c.l.b16 %v198
    %v462 = vunpack.c.h.b16 %v198
    %v463 = vunpack.c.l.b16 %v199
    %v464 = vunpack.c.h.b16 %v199
    %v465 = vunpack.c.l.b16 %v200
    %v466 = vunpack.c.h.b16 %v200
    %v467 = vunpack.c.l.b16 %v201
    %v468 = vunpack.c.h.b16 %v201
    %v469 = vunpack.c.l.b16 %v202
    %v470 = vunpack.c.h.b16 %v202
    %v471 = vunpack.c.l.b16 %v203
    %v472 = vunpack.c.h.b16 %v203
    %v473 = vunpack.c.l.b16 %v204
    %v474 = vunpack.c.h.b16 %v204
    %v475 = vunpack.c.l.b16 %v205
    %v476 = vunpack.c.h.b16 %v205
    %v477 = vunpack.c.l.b16 %v206
    %v478 = vunpack.c.h.b16 %v206
    %v479 = vunpack.c.l.b16 %v207
    %v480 = vunpack.c.h.b16 %v207
    %v481 = vunpack.c.l.b16 %v208
    %v482 = vunpack.c.h.b16 %v208
    %v483 = vunpack.c.l.b16 %v209
    %v484 = vunpack.c.h.b16 %v209
    %v485 = vunpack.c.l.b16 %v210
    %v486 = vunpack.c.h.b16 %v210
    %v487 = vunpack.c.l.b16 %v211
    %v488 = vunpack.c.h.b16 %v211
    %v489 = vunpack.c.l.b16 %v212
    %v490 = vunpack.c.h.b16 %v212
    %v491 = vunpack.c.l.b16 %v213
    %v492 = vunpack.c.h.b16 %v213
    %v493 = vunpack.c.l.b16 %v214
    %v494 = vunpack.c.h.b16 %v214
    %v495 = vunpack.c.l.b16 %v215
    %v496 = vunpack.c.h.b16 %v215
    %v497 = vunpack.c.l.b16 %v216
    %v498 = vunpack.c.h.b16 %v216
    %v499 = vunpack.c.l.b16 %v217
    %v500 = vunpack.c.h.b16 %v217
    %v501 = vunpack.c.l.b16 %v218
    %v502 = vunpack.c.h.b16 %v218
    %v503 = vunpack.c.l.b16 %v219
    %v504 = vunpack.c.h.b16 %v219
    %v505 = vunpack.c.l.b16 %v220
    %v506 = vunpack.c.h.b16 %v220
    %v507 = vunpack.c.l.b16 %v221
    %v508 = vunpack.c.h.b16 %v221
    %v509 = vunpack.c.l.b16 %v222
    %v510 = vunpack.c.h.b16 %v222
    %v511 = vpack.c.b16 %v323, %v319
    %v512 = vpack.c.b16 %v324, %v320
    %v513 = vpack.c.b16 %v325, %v321
    %v514 = vpack.c.b16 %v326, %v322
    %v515 = vpack.c.b16 %v331, %v327
    %v516 = vpack.c.b16 %v332, %v328
    %v517 = vpack.c.b16 %v333, %v329
    %v518 = vpack.c.b16 %v334, %v330
    %v519 = vpack.c.b16 %v339, %v335
    %v520 = vpack.c.b16 %v340, %v336
    %v521 = vpack.c.b16 %v341, %v337
    %v522 = vpack.c.b16 %v342, %v338
    %v523 = vpack.c.b16 %v347, %v343
    %v524 = vpack.c.b16 %v348, %v344
    %v525 = vpack.c.b16 %v349, %v345
    %v526 = vpack.c.b16 %v350, %v346
    %v527 = vpack.c.b16 %v355, %v351
    %v528 = vpack.c.b16 %v356, %v352
    %v529 = vpack.c.b16 %v357, %v353
    %v530 = vpack.c.b16 %v358, %v354
    %v531 = vpack.c.b16 %v363, %v359
    %v532 = vpack.c.b16 %v364, %v360
    %v533 = vpack.c.b16 %v365, %v361
    %v534 = vpack.c.b16 %v366, %v362
    %v535 = vpack.c.b16 %v371, %v367
    %v536 = vpack.c.b16 %v372, %v368
    %v537 = vpack.c.b16 %v373, %v369
    %v538 = vpack.c.b16 %v374, %v370
    %v539 = vpack.c.b16 %v379, %v375
    %v540 = vpack.c.b16 %v380, %v376
    %v541 = vpack.c.b16 %v381, %v377
    %v542 = vpack.c.b16 %v382, %v378
    %v543 = vpack.c.b16 %v387, %v383
    %v544 = vpack.c.b16 %v388, %v384
    %v545 = vpack.c.b16 %v389, %v385
    %v546 = vpack.c.b16 %v390, %v386
    %v547 = vpack.c.b16 %v395, %v391
    %v548 = vpack.c.b16 %v396, %v392
    %v549 = vpack.c.b16 %v397, %v393
    %v550 = vpack.c.b16 %v398, %v394
    %v551 = vpack.c.b16 %v403, %v399
    %v552 = vpack.c.b16 %v404, %v400
    %v553 = vpack.c.b16 %v405, %v401
    %v554 = vpack.c.b16 %v406, %v402
    %v555 = vpack.c.b16 %v411, %v407
    %v556 = vpack.c.b16 %v412, %v408
    %v557 = vpack.c.b16 %v413, %v409
    %v558 = vpack.c.b16 %v414, %v410
    %v559 = vpack.c.b16 %v419, %v415
    %v560 = vpack.c.b16 %v420, %v416
    %v561 = vpack.c.b16 %v421, %v417
    %v562 = vpack.c.b16 %v422, %v418
    %v563 = vpack.c.b16 %v427, %v423
    %v564 = vpack.c.b16 %v428, %v424
    %v565 = vpack.c.b16 %v429, %v425
    %v566 = vpack.c.b16 %v430, %v426
    %v567 = vpack.c.b16 %v435, %v431
    %v568 = vpack.c.b16 %v436, %v432
    %v569 = vpack.c.b16 %v437, %v433
    %v570 = vpack.c.b16 %v438, %v434
    %v571 = vpack.c.b16 %v443, %v439
    %v572 = vpack.c.b16 %v444, %v440
    %v573 = vpack.c.b16 %v445, %v441
    %v574 = vpack.c.b16 %v446, %v442
    %v575 = vpack.c.b16 %v451, %v447
    %v576 = vpack.c.b16 %v452, %v448
    %v577 = vpack.c.b16 %v453, %v449
    %v578 = vpack.c.b16 %v454, %v450
    %v579 = vpack.c.b16 %v459, %v455
    %v580 = vpack.c.b16 %v460, %v456
    %v581 = vpack.c.b16 %v461, %v457
    %v582 = vpack.c.b16 %v462, %v458
    %v583 = vpack.c.b16 %v467, %v463
    %v584 = vpack.c.b16 %v468, %v464
    %v585 = vpack.c.b16 %v469, %v465
    %v586 = vpack.c.b16 %v470, %v466
    %v587 = vpack.c.b16 %v475, %v471
    %v588 = vpack.c.b16 %v476, %v472
    %v589 = vpack.c.b16 %v477, %v473
    %v590 = vpack.c.b16 %v478, %v474
    %v591 = vpack.c.b16 %v483, %v479
    %v592 = vpack.c.b16 %v484, %v480
    %v593 = vpack.c.b16 %v485, %v481
    %v594 = vpack.c.b16 %v486, %v482
    %v595 = vpack.c.b16 %v491, %v487
    %v596 = vpack.c.b16 %v492, %v488
    %v597 = vpack.c.b16 %v493, %v489
    %v598 = vpack.c.b16 %v494, %v490
    %v599 = vpack.c.b16 %v499, %v495
    %v600 = vpack.c.b16 %v500, %v496
    %v601 = vpack.c.b16 %v501, %v497
    %v602 = vpack.c.b16 %v502, %v498
    %v603 = vpack.c.b16 %v507, %v503
    %v604 = vpack.c.b16 %v508, %v504
    %v605 = vpack.c.b16 %v509, %v505
    %v606 = vpack.c.b16 %v510, %v506
    %703 = vmatprep.subr.bf16.mxu0 %v512
    %704 = vmatpush1.bf16.msra.mxu0 %v511
    %705 = vmatprep.subr.bf16.mxu0 %v516
    %706 = vmatpush1.bf16.msra.mxu0 %v515
    %707 = vmatprep.subr.bf16.mxu0 %v520
    %708 = vmatpush1.bf16.msra.mxu0 %v519
    %709 = vmatprep.subr.bf16.mxu0 %v524
    %710 = vmatpush1.bf16.msra.mxu0 %v523
    %711 = vmatprep.subr.bf16.mxu0 %v528
    %712 = vmatpush1.bf16.msra.mxu0 %v527
    %713 = vmatprep.subr.bf16.mxu0 %v532
    %714 = vmatpush1.bf16.msra.mxu0 %v531
    %715 = vmatprep.subr.bf16.mxu0 %v536
    %716 = vmatpush1.bf16.msra.mxu0 %v535
    %717 = vmatprep.subr.bf16.mxu0 %v540
    %718 = vmatpush1.bf16.msra.mxu0 %v539
    %719 = vmatprep.subr.bf16.mxu0 %v544
    %720 = vmatpush1.bf16.msra.mxu0 %v543
    %721 = vmatprep.subr.bf16.mxu0 %v548
    %722 = vmatpush1.bf16.msra.mxu0 %v547
    %723 = vmatprep.subr.bf16.mxu0 %v552
    %724 = vmatpush1.bf16.msra.mxu0 %v551
    %725 = vmatprep.subr.bf16.mxu0 %v556
    %726 = vmatpush1.bf16.msra.mxu0 %v555
    %727 = vmatprep.subr.bf16.mxu0 %v560
    %728 = vmatpush1.bf16.msra.mxu0 %v559
    %729 = vmatprep.subr.bf16.mxu0 %v564
    %730 = vmatpush1.bf16.msra.mxu0 %v563
    %731 = vmatprep.subr.bf16.mxu0 %v568
    %732 = vmatpush1.bf16.msra.mxu0 %v567
    %733 = vmatprep.subr.bf16.mxu0 %v572
    %734 = vmatpush1.bf16.msra.mxu0 %v571
    %735 = vmatprep.mubr.bf16.mxu0 %v125
    %736 = vmatmul.mubr.bf16.gmra.mrb[0].mxu0 %v124
    %v737 = vpop.f32.mrb[0].mxu0
    %v738 = vadd.f32 0.0, %v737
    %v739 = vpop.f32.mrb[0].mxu0
    %v740 = vadd.f32 0.0, %v739
    %v741 = vpop.f32.mrb[0].mxu0
    %v742 = vadd.f32 0.0, %v741
    %v743 = vpop.f32.mrb[0].mxu0
    %v744 = vadd.f32 0.0, %v743
    %745 = vdwg.mxu0
    %746 = vmatprep.subr.bf16.mxu0 %v576
    %747 = vmatpush1.bf16.msra.mxu0 %v575
    %748 = vmatprep.subr.bf16.mxu0 %v580
    %749 = vmatpush1.bf16.msra.mxu0 %v579
    %750 = vmatprep.subr.bf16.mxu0 %v584
    %751 = vmatpush1.bf16.msra.mxu0 %v583
    %752 = vmatprep.subr.bf16.mxu0 %v588
    %753 = vmatpush1.bf16.msra.mxu0 %v587
    %754 = vmatprep.subr.bf16.mxu0 %v592
    %755 = vmatpush1.bf16.msra.mxu0 %v591
    %756 = vmatprep.subr.bf16.mxu0 %v596
    %757 = vmatpush1.bf16.msra.mxu0 %v595
    %758 = vmatprep.subr.bf16.mxu0 %v600
    %759 = vmatpush1.bf16.msra.mxu0 %v599
    %760 = vmatprep.subr.bf16.mxu0 %v604
    %761 = vmatpush1.bf16.msra.mxu0 %v603
    %762 = vmatprep.subr.bf16.mxu0 0
    %763 = vmatpush1.bf16.msra.mxu0 0
    %764 = vmatprep.subr.bf16.mxu0 0
    %765 = vmatpush1.bf16.msra.mxu0 0
    %766 = vmatprep.subr.bf16.mxu0 0
    %767 = vmatpush1.bf16.msra.mxu0 0
    %768 = vmatprep.subr.bf16.mxu0 0
    %769 = vmatpush1.bf16.msra.mxu0 0
    %770 = vmatprep.subr.bf16.mxu0 0
    %771 = vmatpush1.bf16.msra.mxu0 0
    %772 = vmatprep.subr.bf16.mxu0 0
    %773 = vmatpush1.bf16.msra.mxu0 0
    %774 = vmatprep.subr.bf16.mxu0 0
    %775 = vmatpush1.bf16.msra.mxu0 0
    %776 = vmatprep.subr.bf16.mxu0 0
    %777 = vmatpush1.bf16.msra.mxu0 0
    %778 = vmatprep.mubr.bf16.mxu0 0
    %779 = vmatmul.mubr.bf16.gmra.mrb[0].mxu0 %v126
    %v780 = vpop.f32.mrb[0].mxu0
    %v781 = vadd.f32 %v738, %v780
    %v782 = vpop.f32.mrb[0].mxu0
    %v783 = vadd.f32 %v740, %v782
    %v784 = vpop.f32.mrb[0].mxu0
    %v785 = vadd.f32 %v742, %v784
    %v786 = vpop.f32.mrb[0].mxu0
    %v787 = vadd.f32 %v744, %v786
    %788 = vdwg.mxu0
    %789 = vmatprep.subr.bf16.mxu0 %v514
    %790 = vmatpush1.bf16.msra.mxu0 %v513
    %791 = vmatprep.subr.bf16.mxu0 %v518
    %792 = vmatpush1.bf16.msra.mxu0 %v517
    %793 = vmatprep.subr.bf16.mxu0 %v522
    %794 = vmatpush1.bf16.msra.mxu0 %v521
    %795 = vmatprep.subr.bf16.mxu0 %v526
    %796 = vmatpush1.bf16.msra.mxu0 %v525
    %797 = vmatprep.subr.bf16.mxu0 %v530
    %798 = vmatpush1.bf16.msra.mxu0 %v529
    %799 = vmatprep.subr.bf16.mxu0 %v534
    %800 = vmatpush1.bf16.msra.mxu0 %v533
    %801 = vmatprep.subr.bf16.mxu0 %v538
    %802 = vmatpush1.bf16.msra.mxu0 %v537
    %803 = vmatprep.subr.bf16.mxu0 %v542
    %804 = vmatpush1.bf16.msra.mxu0 %v541
    %805 = vmatprep.subr.bf16.mxu0 %v546
    %806 = vmatpush1.bf16.msra.mxu0 %v545
    %807 = vmatprep.subr.bf16.mxu0 %v550
    %808 = vmatpush1.bf16.msra.mxu0 %v549
    %809 = vmatprep.subr.bf16.mxu0 %v554
    %810 = vmatpush1.bf16.msra.mxu0 %v553
    %811 = vmatprep.subr.bf16.mxu0 %v558
    %812 = vmatpush1.bf16.msra.mxu0 %v557
    %813 = vmatprep.subr.bf16.mxu0 %v562
    %814 = vmatpush1.bf16.msra.mxu0 %v561
    %815 = vmatprep.subr.bf16.mxu0 %v566
    %816 = vmatpush1.bf16.msra.mxu0 %v565
    %817 = vmatprep.subr.bf16.mxu0 %v570
    %818 = vmatpush1.bf16.msra.mxu0 %v569
    %819 = vmatprep.subr.bf16.mxu0 %v574
    %820 = vmatpush1.bf16.msra.mxu0 %v573
    %821 = vmatprep.mubr.bf16.mxu0 %v125
    %822 = vmatmul.mubr.bf16.gmra.mrb[0].mxu0 %v124
    %v823 = vpop.f32.mrb[0].mxu0
    %v824 = vadd.f32 0.0, %v823
    %v825 = vpop.f32.mrb[0].mxu0
    %v826 = vadd.f32 0.0, %v825
    %v827 = vpop.f32.mrb[0].mxu0
    %v828 = vadd.f32 0.0, %v827
    %v829 = vpop.f32.mrb[0].mxu0
    %v830 = vadd.f32 0.0, %v829
    %831 = vdwg.mxu0
    %832 = vmatprep.subr.bf16.mxu0 %v578
    %833 = vmatpush1.bf16.msra.mxu0 %v577
    %834 = vmatprep.subr.bf16.mxu0 %v582
    %835 = vmatpush1.bf16.msra.mxu0 %v581
    %836 = vmatprep.subr.bf16.mxu0 %v586
    %837 = vmatpush1.bf16.msra.mxu0 %v585
    %838 = vmatprep.subr.bf16.mxu0 %v590
    %839 = vmatpush1.bf16.msra.mxu0 %v589
    %840 = vmatprep.subr.bf16.mxu0 %v594
    %841 = vmatpush1.bf16.msra.mxu0 %v593
    %842 = vmatprep.subr.bf16.mxu0 %v598
    %843 = vmatpush1.bf16.msra.mxu0 %v597
    %844 = vmatprep.subr.bf16.mxu0 %v602
    %845 = vmatpush1.bf16.msra.mxu0 %v601
    %846 = vmatprep.subr.bf16.mxu0 %v606
    %847 = vmatpush1.bf16.msra.mxu0 %v605
    %848 = vmatprep.subr.bf16.mxu0 0
    %849 = vmatpush1.bf16.msra.mxu0 0
    %850 = vmatprep.subr.bf16.mxu0 0
    %851 = vmatpush1.bf16.msra.mxu0 0
    %852 = vmatprep.subr.bf16.mxu0 0
    %853 = vmatpush1.bf16.msra.mxu0 0
    %854 = vmatprep.subr.bf16.mxu0 0
    %855 = vmatpush1.bf16.msra.mxu0 0
    %856 = vmatprep.subr.bf16.mxu0 0
    %857 = vmatpush1.bf16.msra.mxu0 0
    %858 = vmatprep.subr.bf16.mxu0 0
    %859 = vmatpush1.bf16.msra.mxu0 0
    %860 = vmatprep.subr.bf16.mxu0 0
    %861 = vmatpush1.bf16.msra.mxu0 0
    %862 = vmatprep.subr.bf16.mxu0 0
    %863 = vmatpush1.bf16.msra.mxu0 0
    %864 = vmatprep.mubr.bf16.mxu0 0
    %865 = vmatmul.mubr.bf16.gmra.mrb[0].mxu0 %v126
    %v866 = vpop.f32.mrb[0].mxu0
    %v867 = vadd.f32 %v824, %v866
    %v868 = vpop.f32.mrb[0].mxu0
    %v869 = vadd.f32 %v826, %v868
    %v870 = vpop.f32.mrb[0].mxu0
    %v871 = vadd.f32 %v828, %v870
    %v872 = vpop.f32.mrb[0].mxu0
    %v873 = vadd.f32 %v830, %v872
    %874 = vdwg.mxu0
    %v875 = vrot.slane %v781, 4
    %v876 = vadd.f32 %v781, %v875
    %v877 = vrot.slane %v876, 2
    %v878 = vadd.f32 %v876, %v877
    %v879 = vrot.slane %v878, 1
    %v880 = vadd.f32 %v878, %v879
    %v881 = vrot.slane %v783, 4
    %v882 = vadd.f32 %v783, %v881
    %v883 = vrot.slane %v882, 2
    %v884 = vadd.f32 %v882, %v883
    %v885 = vrot.slane %v884, 1
    %v886 = vadd.f32 %v884, %v885
    %v887 = vrot.slane %v867, 4
    %v888 = vadd.f32 %v867, %v887
    %v889 = vrot.slane %v888, 2
    %v890 = vadd.f32 %v888, %v889
    %v891 = vrot.slane %v890, 1
    %v892 = vadd.f32 %v890, %v891
    %v893 = vrot.slane %v869, 4
    %v894 = vadd.f32 %v869, %v893
    %v895 = vrot.slane %v894, 2
    %v896 = vadd.f32 %v894, %v895
    %v897 = vrot.slane %v896, 1
    %v898 = vadd.f32 %v896, %v897
    %v899 = vrot.slane %v785, 4
    %v900 = vadd.f32 %v785, %v899
    %v901 = vrot.slane %v900, 2
    %v902 = vadd.f32 %v900, %v901
    %v903 = vrot.slane %v902, 1
    %v904 = vadd.f32 %v902, %v903
    %v905 = vrot.slane %v787, 4
    %v906 = vadd.f32 %v787, %v905
    %v907 = vrot.slane %v906, 2
    %v908 = vadd.f32 %v906, %v907
    %v909 = vrot.slane %v908, 1
    %v910 = vadd.f32 %v908, %v909
    %v911 = vrot.slane %v871, 4
    %v912 = vadd.f32 %v871, %v911
    %v913 = vrot.slane %v912, 2
    %v914 = vadd.f32 %v912, %v913
    %v915 = vrot.slane %v914, 1
    %v916 = vadd.f32 %v914, %v915
    %v917 = vrot.slane %v873, 4
    %v918 = vadd.f32 %v873, %v917
    %v919 = vrot.slane %v918, 2
    %v920 = vadd.f32 %v918, %v919
    %v921 = vrot.slane %v920, 1
    %v922 = vadd.f32 %v920, %v921
    %v923 = vmul.f32 %v781, %v781
    %v924 = vmul.f32 %v783, %v783
    %v925 = vmul.f32 %v867, %v867
    %v926 = vmul.f32 %v869, %v869
    %v927 = vmul.f32 %v785, %v785
    %v928 = vmul.f32 %v787, %v787
    %v929 = vmul.f32 %v871, %v871
    %v930 = vmul.f32 %v873, %v873
    %v931 = vrot.slane %v923, 4
    %v932 = vadd.f32 %v923, %v931
    %v933 = vrot.slane %v932, 2
    %v934 = vadd.f32 %v932, %v933
    %v935 = vrot.slane %v934, 1
    %v936 = vadd.f32 %v934, %v935
    %v937 = vrot.slane %v924, 4
    %v938 = vadd.f32 %v924, %v937
    %v939 = vrot.slane %v938, 2
    %v940 = vadd.f32 %v938, %v939
    %v941 = vrot.slane %v940, 1
    %v942 = vadd.f32 %v940, %v941
    %v943 = vrot.slane %v925, 4
    %v944 = vadd.f32 %v925, %v943
    %v945 = vrot.slane %v944, 2
    %v946 = vadd.f32 %v944, %v945
    %v947 = vrot.slane %v946, 1
    %v948 = vadd.f32 %v946, %v947
    %v949 = vrot.slane %v926, 4
    %v950 = vadd.f32 %v926, %v949
    %v951 = vrot.slane %v950, 2
    %v952 = vadd.f32 %v950, %v951
    %v953 = vrot.slane %v952, 1
    %v954 = vadd.f32 %v952, %v953
    %v955 = vrot.slane %v927, 4
    %v956 = vadd.f32 %v927, %v955
    %v957 = vrot.slane %v956, 2
    %v958 = vadd.f32 %v956, %v957
    %v959 = vrot.slane %v958, 1
    %v960 = vadd.f32 %v958, %v959
    %v961 = vrot.slane %v928, 4
    %v962 = vadd.f32 %v928, %v961
    %v963 = vrot.slane %v962, 2
    %v964 = vadd.f32 %v962, %v963
    %v965 = vrot.slane %v964, 1
    %v966 = vadd.f32 %v964, %v965
    %v967 = vrot.slane %v929, 4
    %v968 = vadd.f32 %v929, %v967
    %v969 = vrot.slane %v968, 2
    %v970 = vadd.f32 %v968, %v969
    %v971 = vrot.slane %v970, 1
    %v972 = vadd.f32 %v970, %v971
    %v973 = vrot.slane %v930, 4
    %v974 = vadd.f32 %v930, %v973
    %v975 = vrot.slane %v974, 2
    %v976 = vadd.f32 %v974, %v975
    %v977 = vrot.slane %v976, 1
    %v978 = vadd.f32 %v976, %v977
    %981 = vrot.lane.b32.xlu0 %v880, 64
    %v982 = vpop.permute.xlu0 %981
    %983 = vrot.lane.b32.xlu0 %v904, 64
    %v984 = vpop.permute.xlu0 %983
    %987 = vrot.lane.b32.xlu0 %v886, 64
    %v988 = vpop.permute.xlu0 %987
    %989 = vrot.lane.b32.xlu0 %v910, 64
    %v990 = vpop.permute.xlu0 %989
    %993 = vrot.lane.b32.xlu0 %v892, 64
    %v994 = vpop.permute.xlu0 %993
    %995 = vrot.lane.b32.xlu0 %v916, 64
    %v996 = vpop.permute.xlu0 %995
    %999 = vrot.lane.b32.xlu0 %v898, 64
    %v1000 = vpop.permute.xlu0 %999
    %1001 = vrot.lane.b32.xlu0 %v922, 64
    %v1002 = vpop.permute.xlu0 %1001
    %v1003 = vrot.slane %v904, 7
    %vm1004 = vcmask 1041409
    %v1005 = vsel %vm1004, %v1003, %v880
    %v1006 = vrot.slane %v984, 7
    %v1007 = vsel %vm1004, %v1006, %v982
    %v1008 = vrot.slane %v910, 7
    %v1009 = vsel %vm1004, %v1008, %v886
    %v1010 = vrot.slane %v990, 7
    %v1011 = vsel %vm1004, %v1010, %v988
    %v1012 = vrot.slane %v916, 7
    %v1013 = vsel %vm1004, %v1012, %v892
    %v1014 = vrot.slane %v996, 7
    %v1015 = vsel %vm1004, %v1014, %v994
    %v1016 = vrot.slane %v922, 7
    %v1017 = vsel %vm1004, %v1016, %v898
    %v1018 = vrot.slane %v1002, 7
    %v1019 = vsel %vm1004, %v1018, %v1000
    %v1028 = vcombine.low %v1005, %v1009
    %v1030 = vunpack.c.l.s4 1983009808
    %v1031 = vunpack.c.0.s8 %v1030
    %v1032 = vlaneseq
    %v1033 = vshrl.u32 %v1032, 7
    %v1034 = vsub.s32 %v1031, %v1033
    %v1035 = vrot.slane %v1028, %v1034
    %v1036 = vcombine.low %v1007, %v1011
    %v1038 = vunpack.c.l.s4 1983009808
    %v1039 = vunpack.c.0.s8 %v1038
    %v1040 = vlaneseq
    %v1041 = vshrl.u32 %v1040, 7
    %v1042 = vsub.s32 %v1039, %v1041
    %v1043 = vrot.slane %v1036, %v1042
    %v1044 = vcombine.low %v1013, %v1017
    %v1046 = vunpack.c.l.s4 1983009808
    %v1047 = vunpack.c.0.s8 %v1046
    %v1048 = vlaneseq
    %v1049 = vshrl.u32 %v1048, 7
    %v1050 = vsub.s32 %v1047, %v1049
    %v1051 = vrot.slane %v1044, %v1050
    %v1052 = vcombine.low %v1015, %v1019
    %v1054 = vunpack.c.l.s4 1983009808
    %v1055 = vunpack.c.0.s8 %v1054
    %v1056 = vlaneseq
    %v1057 = vshrl.u32 %v1056, 7
    %v1058 = vsub.s32 %v1055, %v1057
    %v1059 = vrot.slane %v1052, %v1058
    %v1060 = vcombine.low %v1035, %v1043
    %v1062 = vunpack.c.l.s4 1934713408
    %v1063 = vunpack.c.0.s8 %v1062
    %v1064 = vlaneseq
    %v1065 = vshrl.u32 %v1064, 7
    %v1066 = vsub.s32 %v1063, %v1065
    %v1067 = vrot.slane %v1060, %v1066
    %v1068 = vcombine.low %v1051, %v1059
    %v1070 = vunpack.c.l.s4 1934713408
    %v1071 = vunpack.c.0.s8 %v1070
    %v1072 = vlaneseq
    %v1073 = vshrl.u32 %v1072, 7
    %v1074 = vsub.s32 %v1071, %v1073
    %v1075 = vrot.slane %v1068, %v1074
    %v1076 = vcombine.low %v1067, %v1075
    %v1077 = vcombine.high %v1067, %v1075
    %vm1078 = vcmask 523264
    %v1079 = vsel %vm1078, %v1076, 0.0
    %v1080 = vrot.slane %v1079, 4
    %v1081 = vadd.f32 %v1079, %v1080
    %v1082 = vrot.slane %v1081, 2
    %v1083 = vadd.f32 %v1081, %v1082
    %v1084 = vrot.slane %v1083, 1
    %v1085 = vadd.f32 %v1083, %v1084
    %v1086 = vsel %vm1078, %v1077, 0.0
    %v1087 = vrot.slane %v1086, 4
    %v1088 = vadd.f32 %v1086, %v1087
    %v1089 = vrot.slane %v1088, 2
    %v1090 = vadd.f32 %v1088, %v1089
    %v1091 = vrot.slane %v1090, 1
    %v1092 = vadd.f32 %v1090, %v1091
    %1095 = vrot.lane.b32.xlu0 %v1085, 126
    %v1096 = vpop.permute.xlu0 %1095
    %1097 = vrot.lane.b32.xlu0 %v1092, 126
    %v1098 = vpop.permute.xlu0 %1097
    %1099 = vrot.lane.b32.xlu0 %v1085, 124
    %v1100 = vpop.permute.xlu0 %1099
    %1101 = vrot.lane.b32.xlu0 %v1092, 124
    %v1102 = vpop.permute.xlu0 %1101
    %1103 = vrot.lane.b32.xlu0 %v1085, 122
    %v1104 = vpop.permute.xlu0 %1103
    %1105 = vrot.lane.b32.xlu0 %v1092, 122
    %v1106 = vpop.permute.xlu0 %1105
    %1107 = vrot.lane.b32.xlu0 %v1085, 120
    %v1108 = vpop.permute.xlu0 %1107
    %1109 = vrot.lane.b32.xlu0 %v1092, 120
    %v1110 = vpop.permute.xlu0 %1109
    %1111 = vrot.lane.b32.xlu0 %v1085, 118
    %v1112 = vpop.permute.xlu0 %1111
    %1113 = vrot.lane.b32.xlu0 %v1092, 118
    %v1114 = vpop.permute.xlu0 %1113
    %1115 = vrot.lane.b32.xlu0 %v1085, 116
    %v1116 = vpop.permute.xlu0 %1115
    %1117 = vrot.lane.b32.xlu0 %v1092, 116
    %v1118 = vpop.permute.xlu0 %1117
    %1119 = vrot.lane.b32.xlu0 %v1085, 114
    %v1120 = vpop.permute.xlu0 %1119
    %1121 = vrot.lane.b32.xlu0 %v1092, 114
    %v1122 = vpop.permute.xlu0 %1121
    %1123 = vrot.lane.b32.xlu0 %v1085, 112
    %v1124 = vpop.permute.xlu0 %1123
    %1125 = vrot.lane.b32.xlu0 %v1092, 112
    %v1126 = vpop.permute.xlu0 %1125
    %1127 = vrot.lane.b32.xlu0 %v1085, 110
    %v1128 = vpop.permute.xlu0 %1127
    %1129 = vrot.lane.b32.xlu0 %v1092, 110
    %v1130 = vpop.permute.xlu0 %1129
    %1131 = vrot.lane.b32.xlu0 %v1085, 108
    %v1132 = vpop.permute.xlu0 %1131
    %1133 = vrot.lane.b32.xlu0 %v1092, 108
    %v1134 = vpop.permute.xlu0 %1133
    %1135 = vrot.lane.b32.xlu0 %v1085, 106
    %v1136 = vpop.permute.xlu0 %1135
    %1137 = vrot.lane.b32.xlu0 %v1092, 106
    %v1138 = vpop.permute.xlu0 %1137
    %1139 = vrot.lane.b32.xlu0 %v1085, 104
    %v1140 = vpop.permute.xlu0 %1139
    %1141 = vrot.lane.b32.xlu0 %v1092, 104
    %v1142 = vpop.permute.xlu0 %1141
    %1143 = vrot.lane.b32.xlu0 %v1085, 102
    %v1144 = vpop.permute.xlu0 %1143
    %1145 = vrot.lane.b32.xlu0 %v1092, 102
    %v1146 = vpop.permute.xlu0 %1145
    %1147 = vrot.lane.b32.xlu0 %v1085, 100
    %v1148 = vpop.permute.xlu0 %1147
    %1149 = vrot.lane.b32.xlu0 %v1092, 100
    %v1150 = vpop.permute.xlu0 %1149
    %1151 = vrot.lane.b32.xlu0 %v1085, 98
    %v1152 = vpop.permute.xlu0 %1151
    %1153 = vrot.lane.b32.xlu0 %v1092, 98
    %v1154 = vpop.permute.xlu0 %1153
    %1155 = vrot.lane.b32.xlu0 %v1085, 96
    %v1156 = vpop.permute.xlu0 %1155
    %1157 = vrot.lane.b32.xlu0 %v1092, 96
    %v1158 = vpop.permute.xlu0 %1157
    %1159 = vrot.lane.b32.xlu0 %v1085, 94
    %v1160 = vpop.permute.xlu0 %1159
    %1161 = vrot.lane.b32.xlu0 %v1092, 94
    %v1162 = vpop.permute.xlu0 %1161
    %1163 = vrot.lane.b32.xlu0 %v1085, 92
    %v1164 = vpop.permute.xlu0 %1163
    %1165 = vrot.lane.b32.xlu0 %v1092, 92
    %v1166 = vpop.permute.xlu0 %1165
    %1167 = vrot.lane.b32.xlu0 %v1085, 90
    %v1168 = vpop.permute.xlu0 %1167
    %1169 = vrot.lane.b32.xlu0 %v1092, 90
    %v1170 = vpop.permute.xlu0 %1169
    %1171 = vrot.lane.b32.xlu0 %v1085, 88
    %v1172 = vpop.permute.xlu0 %1171
    %1173 = vrot.lane.b32.xlu0 %v1092, 88
    %v1174 = vpop.permute.xlu0 %1173
    %1175 = vrot.lane.b32.xlu0 %v1085, 86
    %v1176 = vpop.permute.xlu0 %1175
    %1177 = vrot.lane.b32.xlu0 %v1092, 86
    %v1178 = vpop.permute.xlu0 %1177
    %1179 = vrot.lane.b32.xlu0 %v1085, 84
    %v1180 = vpop.permute.xlu0 %1179
    %1181 = vrot.lane.b32.xlu0 %v1092, 84
    %v1182 = vpop.permute.xlu0 %1181
    %1183 = vrot.lane.b32.xlu0 %v1085, 82
    %v1184 = vpop.permute.xlu0 %1183
    %1185 = vrot.lane.b32.xlu0 %v1092, 82
    %v1186 = vpop.permute.xlu0 %1185
    %1187 = vrot.lane.b32.xlu0 %v1085, 80
    %v1188 = vpop.permute.xlu0 %1187
    %1189 = vrot.lane.b32.xlu0 %v1092, 80
    %v1190 = vpop.permute.xlu0 %1189
    %1191 = vrot.lane.b32.xlu0 %v1085, 78
    %v1192 = vpop.permute.xlu0 %1191
    %1193 = vrot.lane.b32.xlu0 %v1092, 78
    %v1194 = vpop.permute.xlu0 %1193
    %1195 = vrot.lane.b32.xlu0 %v1085, 76
    %v1196 = vpop.permute.xlu0 %1195
    %1197 = vrot.lane.b32.xlu0 %v1092, 76
    %v1198 = vpop.permute.xlu0 %1197
    %1199 = vrot.lane.b32.xlu0 %v1085, 74
    %v1200 = vpop.permute.xlu0 %1199
    %1201 = vrot.lane.b32.xlu0 %v1092, 74
    %v1202 = vpop.permute.xlu0 %1201
    %1203 = vrot.lane.b32.xlu0 %v1085, 72
    %v1204 = vpop.permute.xlu0 %1203
    %1205 = vrot.lane.b32.xlu0 %v1092, 72
    %v1206 = vpop.permute.xlu0 %1205
    %1207 = vrot.lane.b32.xlu0 %v1085, 70
    %v1208 = vpop.permute.xlu0 %1207
    %1209 = vrot.lane.b32.xlu0 %v1092, 70
    %v1210 = vpop.permute.xlu0 %1209
    %1211 = vrot.lane.b32.xlu0 %v1085, 68
    %v1212 = vpop.permute.xlu0 %1211
    %1213 = vrot.lane.b32.xlu0 %v1092, 68
    %v1214 = vpop.permute.xlu0 %1213
    %1215 = vrot.lane.b32.xlu0 %v1085, 66
    %v1216 = vpop.permute.xlu0 %1215
    %1217 = vrot.lane.b32.xlu0 %v1092, 66
    %v1218 = vpop.permute.xlu0 %1217
    %v1219 = vrot.slane %v1092, 7
    %v1220 = vsel %vm1004, %v1219, %v1085
    %v1221 = vrot.slane %v1098, 7
    %v1222 = vsel %vm1004, %v1221, %v1096
    %v1223 = vrot.slane %v1102, 7
    %v1224 = vsel %vm1004, %v1223, %v1100
    %v1225 = vrot.slane %v1106, 7
    %v1226 = vsel %vm1004, %v1225, %v1104
    %v1227 = vrot.slane %v1110, 7
    %v1228 = vsel %vm1004, %v1227, %v1108
    %v1229 = vrot.slane %v1114, 7
    %v1230 = vsel %vm1004, %v1229, %v1112
    %v1231 = vrot.slane %v1118, 7
    %v1232 = vsel %vm1004, %v1231, %v1116
    %v1233 = vrot.slane %v1122, 7
    %v1234 = vsel %vm1004, %v1233, %v1120
    %v1235 = vrot.slane %v1126, 7
    %v1236 = vsel %vm1004, %v1235, %v1124
    %v1237 = vrot.slane %v1130, 7
    %v1238 = vsel %vm1004, %v1237, %v1128
    %v1239 = vrot.slane %v1134, 7
    %v1240 = vsel %vm1004, %v1239, %v1132
    %v1241 = vrot.slane %v1138, 7
    %v1242 = vsel %vm1004, %v1241, %v1136
    %v1243 = vrot.slane %v1142, 7
    %v1244 = vsel %vm1004, %v1243, %v1140
    %v1245 = vrot.slane %v1146, 7
    %v1246 = vsel %vm1004, %v1245, %v1144
    %v1247 = vrot.slane %v1150, 7
    %v1248 = vsel %vm1004, %v1247, %v1148
    %v1249 = vrot.slane %v1154, 7
    %v1250 = vsel %vm1004, %v1249, %v1152
    %v1251 = vrot.slane %v1158, 7
    %v1252 = vsel %vm1004, %v1251, %v1156
    %v1253 = vrot.slane %v1162, 7
    %v1254 = vsel %vm1004, %v1253, %v1160
    %v1255 = vrot.slane %v1166, 7
    %v1256 = vsel %vm1004, %v1255, %v1164
    %v1257 = vrot.slane %v1170, 7
    %v1258 = vsel %vm1004, %v1257, %v1168
    %v1259 = vrot.slane %v1174, 7
    %v1260 = vsel %vm1004, %v1259, %v1172
    %v1261 = vrot.slane %v1178, 7
    %v1262 = vsel %vm1004, %v1261, %v1176
    %v1263 = vrot.slane %v1182, 7
    %v1264 = vsel %vm1004, %v1263, %v1180
    %v1265 = vrot.slane %v1186, 7
    %v1266 = vsel %vm1004, %v1265, %v1184
    %v1267 = vrot.slane %v1190, 7
    %v1268 = vsel %vm1004, %v1267, %v1188
    %v1269 = vrot.slane %v1194, 7
    %v1270 = vsel %vm1004, %v1269, %v1192
    %v1271 = vrot.slane %v1198, 7
    %v1272 = vsel %vm1004, %v1271, %v1196
    %v1273 = vrot.slane %v1202, 7
    %v1274 = vsel %vm1004, %v1273, %v1200
    %v1275 = vrot.slane %v1206, 7
    %v1276 = vsel %vm1004, %v1275, %v1204
    %v1277 = vrot.slane %v1210, 7
    %v1278 = vsel %vm1004, %v1277, %v1208
    %v1279 = vrot.slane %v1214, 7
    %v1280 = vsel %vm1004, %v1279, %v1212
    %v1281 = vrot.slane %v1218, 7
    %v1282 = vsel %vm1004, %v1281, %v1216
    %v1315 = vcombine.low %v1220, %v1224
    %v1317 = vunpack.c.l.s4 1983009808
    %v1318 = vunpack.c.0.s8 %v1317
    %v1319 = vlaneseq
    %v1320 = vshrl.u32 %v1319, 7
    %v1321 = vsub.s32 %v1318, %v1320
    %v1322 = vrot.slane %v1315, %v1321
    %v1323 = vcombine.low %v1222, %v1226
    %v1325 = vunpack.c.l.s4 1983009808
    %v1326 = vunpack.c.0.s8 %v1325
    %v1327 = vlaneseq
    %v1328 = vshrl.u32 %v1327, 7
    %v1329 = vsub.s32 %v1326, %v1328
    %v1330 = vrot.slane %v1323, %v1329
    %v1331 = vcombine.low %v1228, %v1232
    %v1333 = vunpack.c.l.s4 1983009808
    %v1334 = vunpack.c.0.s8 %v1333
    %v1335 = vlaneseq
    %v1336 = vshrl.u32 %v1335, 7
    %v1337 = vsub.s32 %v1334, %v1336
    %v1338 = vrot.slane %v1331, %v1337
    %v1339 = vcombine.low %v1230, %v1234
    %v1341 = vunpack.c.l.s4 1983009808
    %v1342 = vunpack.c.0.s8 %v1341
    %v1343 = vlaneseq
    %v1344 = vshrl.u32 %v1343, 7
    %v1345 = vsub.s32 %v1342, %v1344
    %v1346 = vrot.slane %v1339, %v1345
    %v1347 = vcombine.low %v1322, %v1330
    %v1349 = vunpack.c.l.s4 1934713408
    %v1350 = vunpack.c.0.s8 %v1349
    %v1351 = vlaneseq
    %v1352 = vshrl.u32 %v1351, 7
    %v1353 = vsub.s32 %v1350, %v1352
    %v1354 = vrot.slane %v1347, %v1353
    %v1355 = vcombine.low %v1338, %v1346
    %v1357 = vunpack.c.l.s4 1934713408
    %v1358 = vunpack.c.0.s8 %v1357
    %v1359 = vlaneseq
    %v1360 = vshrl.u32 %v1359, 7
    %v1361 = vsub.s32 %v1358, %v1360
    %v1362 = vrot.slane %v1355, %v1361
    %v1363 = vcombine.low %v1354, %v1362
    %v1364 = vcombine.high %v1354, %v1362
    %v1365 = vcombine.low %v1236, %v1240
    %v1367 = vunpack.c.l.s4 1983009808
    %v1368 = vunpack.c.0.s8 %v1367
    %v1369 = vlaneseq
    %v1370 = vshrl.u32 %v1369, 7
    %v1371 = vsub.s32 %v1368, %v1370
    %v1372 = vrot.slane %v1365, %v1371
    %v1373 = vcombine.low %v1238, %v1242
    %v1375 = vunpack.c.l.s4 1983009808
    %v1376 = vunpack.c.0.s8 %v1375
    %v1377 = vlaneseq
    %v1378 = vshrl.u32 %v1377, 7
    %v1379 = vsub.s32 %v1376, %v1378
    %v1380 = vrot.slane %v1373, %v1379
    %v1381 = vcombine.low %v1244, %v1248
    %v1383 = vunpack.c.l.s4 1983009808
    %v1384 = vunpack.c.0.s8 %v1383
    %v1385 = vlaneseq
    %v1386 = vshrl.u32 %v1385, 7
    %v1387 = vsub.s32 %v1384, %v1386
    %v1388 = vrot.slane %v1381, %v1387
    %v1389 = vcombine.low %v1246, %v1250
    %v1391 = vunpack.c.l.s4 1983009808
    %v1392 = vunpack.c.0.s8 %v1391
    %v1393 = vlaneseq
    %v1394 = vshrl.u32 %v1393, 7
    %v1395 = vsub.s32 %v1392, %v1394
    %v1396 = vrot.slane %v1389, %v1395
    %v1397 = vcombine.low %v1372, %v1380
    %v1399 = vunpack.c.l.s4 1934713408
    %v1400 = vunpack.c.0.s8 %v1399
    %v1401 = vlaneseq
    %v1402 = vshrl.u32 %v1401, 7
    %v1403 = vsub.s32 %v1400, %v1402
    %v1404 = vrot.slane %v1397, %v1403
    %v1405 = vcombine.low %v1388, %v1396
    %v1407 = vunpack.c.l.s4 1934713408
    %v1408 = vunpack.c.0.s8 %v1407
    %v1409 = vlaneseq
    %v1410 = vshrl.u32 %v1409, 7
    %v1411 = vsub.s32 %v1408, %v1410
    %v1412 = vrot.slane %v1405, %v1411
    %v1413 = vcombine.low %v1404, %v1412
    %v1414 = vcombine.high %v1404, %v1412
    %v1415 = vcombine.low %v1252, %v1256
    %v1417 = vunpack.c.l.s4 1983009808
    %v1418 = vunpack.c.0.s8 %v1417
    %v1419 = vlaneseq
    %v1420 = vshrl.u32 %v1419, 7
    %v1421 = vsub.s32 %v1418, %v1420
    %v1422 = vrot.slane %v1415, %v1421
    %v1423 = vcombine.low %v1254, %v1258
    %v1425 = vunpack.c.l.s4 1983009808
    %v1426 = vunpack.c.0.s8 %v1425
    %v1427 = vlaneseq
    %v1428 = vshrl.u32 %v1427, 7
    %v1429 = vsub.s32 %v1426, %v1428
    %v1430 = vrot.slane %v1423, %v1429
    %v1431 = vcombine.low %v1260, %v1264
    %v1433 = vunpack.c.l.s4 1983009808
    %v1434 = vunpack.c.0.s8 %v1433
    %v1435 = vlaneseq
    %v1436 = vshrl.u32 %v1435, 7
    %v1437 = vsub.s32 %v1434, %v1436
    %v1438 = vrot.slane %v1431, %v1437
    %v1439 = vcombine.low %v1262, %v1266
    %v1441 = vunpack.c.l.s4 1983009808
    %v1442 = vunpack.c.0.s8 %v1441
    %v1443 = vlaneseq
    %v1444 = vshrl.u32 %v1443, 7
    %v1445 = vsub.s32 %v1442, %v1444
    %v1446 = vrot.slane %v1439, %v1445
    %v1447 = vcombine.low %v1422, %v1430
    %v1449 = vunpack.c.l.s4 1934713408
    %v1450 = vunpack.c.0.s8 %v1449
    %v1451 = vlaneseq
    %v1452 = vshrl.u32 %v1451, 7
    %v1453 = vsub.s32 %v1450, %v1452
    %v1454 = vrot.slane %v1447, %v1453
    %v1455 = vcombine.low %v1438, %v1446
    %v1457 = vunpack.c.l.s4 1934713408
    %v1458 = vunpack.c.0.s8 %v1457
    %v1459 = vlaneseq
    %v1460 = vshrl.u32 %v1459, 7
    %v1461 = vsub.s32 %v1458, %v1460
    %v1462 = vrot.slane %v1455, %v1461
    %v1463 = vcombine.low %v1454, %v1462
    %v1464 = vcombine.high %v1454, %v1462
    %v1465 = vcombine.low %v1268, %v1272
    %v1467 = vunpack.c.l.s4 1983009808
    %v1468 = vunpack.c.0.s8 %v1467
    %v1469 = vlaneseq
    %v1470 = vshrl.u32 %v1469, 7
    %v1471 = vsub.s32 %v1468, %v1470
    %v1472 = vrot.slane %v1465, %v1471
    %v1473 = vcombine.low %v1270, %v1274
    %v1475 = vunpack.c.l.s4 1983009808
    %v1476 = vunpack.c.0.s8 %v1475
    %v1477 = vlaneseq
    %v1478 = vshrl.u32 %v1477, 7
    %v1479 = vsub.s32 %v1476, %v1478
    %v1480 = vrot.slane %v1473, %v1479
    %v1481 = vcombine.low %v1276, %v1280
    %v1483 = vunpack.c.l.s4 1983009808
    %v1484 = vunpack.c.0.s8 %v1483
    %v1485 = vlaneseq
    %v1486 = vshrl.u32 %v1485, 7
    %v1487 = vsub.s32 %v1484, %v1486
    %v1488 = vrot.slane %v1481, %v1487
    %v1489 = vcombine.low %v1278, %v1282
    %v1491 = vunpack.c.l.s4 1983009808
    %v1492 = vunpack.c.0.s8 %v1491
    %v1493 = vlaneseq
    %v1494 = vshrl.u32 %v1493, 7
    %v1495 = vsub.s32 %v1492, %v1494
    %v1496 = vrot.slane %v1489, %v1495
    %v1497 = vcombine.low %v1472, %v1480
    %v1499 = vunpack.c.l.s4 1934713408
    %v1500 = vunpack.c.0.s8 %v1499
    %v1501 = vlaneseq
    %v1502 = vshrl.u32 %v1501, 7
    %v1503 = vsub.s32 %v1500, %v1502
    %v1504 = vrot.slane %v1497, %v1503
    %v1505 = vcombine.low %v1488, %v1496
    %v1507 = vunpack.c.l.s4 1934713408
    %v1508 = vunpack.c.0.s8 %v1507
    %v1509 = vlaneseq
    %v1510 = vshrl.u32 %v1509, 7
    %v1511 = vsub.s32 %v1508, %v1510
    %v1512 = vrot.slane %v1505, %v1511
    %v1513 = vcombine.low %v1504, %v1512
    %v1514 = vcombine.high %v1504, %v1512
    %vm1515 = vcmask 15360
    %v1516 = vsel %vm1515, %v1363, 0.0
    %1517 = vadd.xlane.f32.xlu0 %v1516
    %v1518 = vpop.xlane.xlu0 %1517
    %v1519 = vsel %vm1515, %v1413, 0.0
    %1520 = vadd.xlane.f32.xlu0 %v1519
    %v1521 = vpop.xlane.xlu0 %1520
    %v1522 = vsel %vm1515, %v1463, 0.0
    %1523 = vadd.xlane.f32.xlu0 %v1522
    %v1524 = vpop.xlane.xlu0 %1523
    %v1525 = vsel %vm1515, %v1513, 0.0
    %1526 = vadd.xlane.f32.xlu0 %v1525
    %v1527 = vpop.xlane.xlu0 %1526
    %v1528 = vsel %vm1515, %v1364, 0.0
    %1529 = vadd.xlane.f32.xlu0 %v1528
    %v1530 = vpop.xlane.xlu0 %1529
    %v1531 = vsel %vm1515, %v1414, 0.0
    %1532 = vadd.xlane.f32.xlu0 %v1531
    %v1533 = vpop.xlane.xlu0 %1532
    %v1534 = vsel %vm1515, %v1464, 0.0
    %1535 = vadd.xlane.f32.xlu0 %v1534
    %v1536 = vpop.xlane.xlu0 %1535
    %v1537 = vsel %vm1515, %v1514, 0.0
    %1538 = vadd.xlane.f32.xlu0 %v1537
    %v1539 = vpop.xlane.xlu0 %1538
    %v1540 = vrcp.pop 128.0
    %v1541 = vmul.f32 %v1518, %v1540
    %v1542 = vmul.f32 %v1521, %v1540
    %v1543 = vmul.f32 %v1524, %v1540
    %v1544 = vmul.f32 %v1527, %v1540
    %v1545 = vmul.f32 %v1530, %v1540
    %v1546 = vmul.f32 %v1533, %v1540
    %v1547 = vmul.f32 %v1536, %v1540
    %v1548 = vmul.f32 %v1539, %v1540
    %1551 = vrot.lane.b32.xlu0 %v936, 64
    %v1552 = vpop.permute.xlu0 %1551
    %1553 = vrot.lane.b32.xlu0 %v960, 64
    %v1554 = vpop.permute.xlu0 %1553
    %1557 = vrot.lane.b32.xlu0 %v942, 64
    %v1558 = vpop.permute.xlu0 %1557
    %1559 = vrot.lane.b32.xlu0 %v966, 64
    %v1560 = vpop.permute.xlu0 %1559
    %1563 = vrot.lane.b32.xlu0 %v948, 64
    %v1564 = vpop.permute.xlu0 %1563
    %1565 = vrot.lane.b32.xlu0 %v972, 64
    %v1566 = vpop.permute.xlu0 %1565
    %1569 = vrot.lane.b32.xlu0 %v954, 64
    %v1570 = vpop.permute.xlu0 %1569
    %1571 = vrot.lane.b32.xlu0 %v978, 64
    %v1572 = vpop.permute.xlu0 %1571
    %v1573 = vrot.slane %v960, 7
    %v1574 = vsel %vm1004, %v1573, %v936
    %v1575 = vrot.slane %v1554, 7
    %v1576 = vsel %vm1004, %v1575, %v1552
    %v1577 = vrot.slane %v966, 7
    %v1578 = vsel %vm1004, %v1577, %v942
    %v1579 = vrot.slane %v1560, 7
    %v1580 = vsel %vm1004, %v1579, %v1558
    %v1581 = vrot.slane %v972, 7
    %v1582 = vsel %vm1004, %v1581, %v948
    %v1583 = vrot.slane %v1566, 7
    %v1584 = vsel %vm1004, %v1583, %v1564
    %v1585 = vrot.slane %v978, 7
    %v1586 = vsel %vm1004, %v1585, %v954
    %v1587 = vrot.slane %v1572, 7
    %v1588 = vsel %vm1004, %v1587, %v1570
    %v1597 = vcombine.low %v1574, %v1578
    %v1599 = vunpack.c.l.s4 1983009808
    %v1600 = vunpack.c.0.s8 %v1599
    %v1601 = vlaneseq
    %v1602 = vshrl.u32 %v1601, 7
    %v1603 = vsub.s32 %v1600, %v1602
    %v1604 = vrot.slane %v1597, %v1603
    %v1605 = vcombine.low %v1576, %v1580
    %v1607 = vunpack.c.l.s4 1983009808
    %v1608 = vunpack.c.0.s8 %v1607
    %v1609 = vlaneseq
    %v1610 = vshrl.u32 %v1609, 7
    %v1611 = vsub.s32 %v1608, %v1610
    %v1612 = vrot.slane %v1605, %v1611
    %v1613 = vcombine.low %v1582, %v1586
    %v1615 = vunpack.c.l.s4 1983009808
    %v1616 = vunpack.c.0.s8 %v1615
    %v1617 = vlaneseq
    %v1618 = vshrl.u32 %v1617, 7
    %v1619 = vsub.s32 %v1616, %v1618
    %v1620 = vrot.slane %v1613, %v1619
    %v1621 = vcombine.low %v1584, %v1588
    %v1623 = vunpack.c.l.s4 1983009808
    %v1624 = vunpack.c.0.s8 %v1623
    %v1625 = vlaneseq
    %v1626 = vshrl.u32 %v1625, 7
    %v1627 = vsub.s32 %v1624, %v1626
    %v1628 = vrot.slane %v1621, %v1627
    %v1629 = vcombine.low %v1604, %v1612
    %v1631 = vunpack.c.l.s4 1934713408
    %v1632 = vunpack.c.0.s8 %v1631
    %v1633 = vlaneseq
    %v1634 = vshrl.u32 %v1633, 7
    %v1635 = vsub.s32 %v1632, %v1634
    %v1636 = vrot.slane %v1629, %v1635
    %v1637 = vcombine.low %v1620, %v1628
    %v1639 = vunpack.c.l.s4 1934713408
    %v1640 = vunpack.c.0.s8 %v1639
    %v1641 = vlaneseq
    %v1642 = vshrl.u32 %v1641, 7
    %v1643 = vsub.s32 %v1640, %v1642
    %v1644 = vrot.slane %v1637, %v1643
    %v1645 = vcombine.low %v1636, %v1644
    %v1646 = vcombine.high %v1636, %v1644
    %v1647 = vsel %vm1078, %v1645, 0.0
    %v1648 = vrot.slane %v1647, 4
    %v1649 = vadd.f32 %v1647, %v1648
    %v1650 = vrot.slane %v1649, 2
    %v1651 = vadd.f32 %v1649, %v1650
    %v1652 = vrot.slane %v1651, 1
    %v1653 = vadd.f32 %v1651, %v1652
    %v1654 = vsel %vm1078, %v1646, 0.0
    %v1655 = vrot.slane %v1654, 4
    %v1656 = vadd.f32 %v1654, %v1655
    %v1657 = vrot.slane %v1656, 2
    %v1658 = vadd.f32 %v1656, %v1657
    %v1659 = vrot.slane %v1658, 1
    %v1660 = vadd.f32 %v1658, %v1659
    %1663 = vrot.lane.b32.xlu0 %v1653, 126
    %v1664 = vpop.permute.xlu0 %1663
    %1665 = vrot.lane.b32.xlu0 %v1660, 126
    %v1666 = vpop.permute.xlu0 %1665
    %1667 = vrot.lane.b32.xlu0 %v1653, 124
    %v1668 = vpop.permute.xlu0 %1667
    %1669 = vrot.lane.b32.xlu0 %v1660, 124
    %v1670 = vpop.permute.xlu0 %1669
    %1671 = vrot.lane.b32.xlu0 %v1653, 122
    %v1672 = vpop.permute.xlu0 %1671
    %1673 = vrot.lane.b32.xlu0 %v1660, 122
    %v1674 = vpop.permute.xlu0 %1673
    %1675 = vrot.lane.b32.xlu0 %v1653, 120
    %v1676 = vpop.permute.xlu0 %1675
    %1677 = vrot.lane.b32.xlu0 %v1660, 120
    %v1678 = vpop.permute.xlu0 %1677
    %1679 = vrot.lane.b32.xlu0 %v1653, 118
    %v1680 = vpop.permute.xlu0 %1679
    %1681 = vrot.lane.b32.xlu0 %v1660, 118
    %v1682 = vpop.permute.xlu0 %1681
    %1683 = vrot.lane.b32.xlu0 %v1653, 116
    %v1684 = vpop.permute.xlu0 %1683
    %1685 = vrot.lane.b32.xlu0 %v1660, 116
    %v1686 = vpop.permute.xlu0 %1685
    %1687 = vrot.lane.b32.xlu0 %v1653, 114
    %v1688 = vpop.permute.xlu0 %1687
    %1689 = vrot.lane.b32.xlu0 %v1660, 114
    %v1690 = vpop.permute.xlu0 %1689
    %1691 = vrot.lane.b32.xlu0 %v1653, 112
    %v1692 = vpop.permute.xlu0 %1691
    %1693 = vrot.lane.b32.xlu0 %v1660, 112
    %v1694 = vpop.permute.xlu0 %1693
    %1695 = vrot.lane.b32.xlu0 %v1653, 110
    %v1696 = vpop.permute.xlu0 %1695
    %1697 = vrot.lane.b32.xlu0 %v1660, 110
    %v1698 = vpop.permute.xlu0 %1697
    %1699 = vrot.lane.b32.xlu0 %v1653, 108
    %v1700 = vpop.permute.xlu0 %1699
    %1701 = vrot.lane.b32.xlu0 %v1660, 108
    %v1702 = vpop.permute.xlu0 %1701
    %1703 = vrot.lane.b32.xlu0 %v1653, 106
    %v1704 = vpop.permute.xlu0 %1703
    %1705 = vrot.lane.b32.xlu0 %v1660, 106
    %v1706 = vpop.permute.xlu0 %1705
    %1707 = vrot.lane.b32.xlu0 %v1653, 104
    %v1708 = vpop.permute.xlu0 %1707
    %1709 = vrot.lane.b32.xlu0 %v1660, 104
    %v1710 = vpop.permute.xlu0 %1709
    %1711 = vrot.lane.b32.xlu0 %v1653, 102
    %v1712 = vpop.permute.xlu0 %1711
    %1713 = vrot.lane.b32.xlu0 %v1660, 102
    %v1714 = vpop.permute.xlu0 %1713
    %1715 = vrot.lane.b32.xlu0 %v1653, 100
    %v1716 = vpop.permute.xlu0 %1715
    %1717 = vrot.lane.b32.xlu0 %v1660, 100
    %v1718 = vpop.permute.xlu0 %1717
    %1719 = vrot.lane.b32.xlu0 %v1653, 98
    %v1720 = vpop.permute.xlu0 %1719
    %1721 = vrot.lane.b32.xlu0 %v1660, 98
    %v1722 = vpop.permute.xlu0 %1721
    %1723 = vrot.lane.b32.xlu0 %v1653, 96
    %v1724 = vpop.permute.xlu0 %1723
    %1725 = vrot.lane.b32.xlu0 %v1660, 96
    %v1726 = vpop.permute.xlu0 %1725
    %1727 = vrot.lane.b32.xlu0 %v1653, 94
    %v1728 = vpop.permute.xlu0 %1727
    %1729 = vrot.lane.b32.xlu0 %v1660, 94
    %v1730 = vpop.permute.xlu0 %1729
    %1731 = vrot.lane.b32.xlu0 %v1653, 92
    %v1732 = vpop.permute.xlu0 %1731
    %1733 = vrot.lane.b32.xlu0 %v1660, 92
    %v1734 = vpop.permute.xlu0 %1733
    %1735 = vrot.lane.b32.xlu0 %v1653, 90
    %v1736 = vpop.permute.xlu0 %1735
    %1737 = vrot.lane.b32.xlu0 %v1660, 90
    %v1738 = vpop.permute.xlu0 %1737
    %1739 = vrot.lane.b32.xlu0 %v1653, 88
    %v1740 = vpop.permute.xlu0 %1739
    %1741 = vrot.lane.b32.xlu0 %v1660, 88
    %v1742 = vpop.permute.xlu0 %1741
    %1743 = vrot.lane.b32.xlu0 %v1653, 86
    %v1744 = vpop.permute.xlu0 %1743
    %1745 = vrot.lane.b32.xlu0 %v1660, 86
    %v1746 = vpop.permute.xlu0 %1745
    %1747 = vrot.lane.b32.xlu0 %v1653, 84
    %v1748 = vpop.permute.xlu0 %1747
    %1749 = vrot.lane.b32.xlu0 %v1660, 84
    %v1750 = vpop.permute.xlu0 %1749
    %1751 = vrot.lane.b32.xlu0 %v1653, 82
    %v1752 = vpop.permute.xlu0 %1751
    %1753 = vrot.lane.b32.xlu0 %v1660, 82
    %v1754 = vpop.permute.xlu0 %1753
    %1755 = vrot.lane.b32.xlu0 %v1653, 80
    %v1756 = vpop.permute.xlu0 %1755
    %1757 = vrot.lane.b32.xlu0 %v1660, 80
    %v1758 = vpop.permute.xlu0 %1757
    %1759 = vrot.lane.b32.xlu0 %v1653, 78
    %v1760 = vpop.permute.xlu0 %1759
    %1761 = vrot.lane.b32.xlu0 %v1660, 78
    %v1762 = vpop.permute.xlu0 %1761
    %1763 = vrot.lane.b32.xlu0 %v1653, 76
    %v1764 = vpop.permute.xlu0 %1763
    %1765 = vrot.lane.b32.xlu0 %v1660, 76
    %v1766 = vpop.permute.xlu0 %1765
    %1767 = vrot.lane.b32.xlu0 %v1653, 74
    %v1768 = vpop.permute.xlu0 %1767
    %1769 = vrot.lane.b32.xlu0 %v1660, 74
    %v1770 = vpop.permute.xlu0 %1769
    %1771 = vrot.lane.b32.xlu0 %v1653, 72
    %v1772 = vpop.permute.xlu0 %1771
    %1773 = vrot.lane.b32.xlu0 %v1660, 72
    %v1774 = vpop.permute.xlu0 %1773
    %1775 = vrot.lane.b32.xlu0 %v1653, 70
    %v1776 = vpop.permute.xlu0 %1775
    %1777 = vrot.lane.b32.xlu0 %v1660, 70
    %v1778 = vpop.permute.xlu0 %1777
    %1779 = vrot.lane.b32.xlu0 %v1653, 68
    %v1780 = vpop.permute.xlu0 %1779
    %1781 = vrot.lane.b32.xlu0 %v1660, 68
    %v1782 = vpop.permute.xlu0 %1781
    %1783 = vrot.lane.b32.xlu0 %v1653, 66
    %v1784 = vpop.permute.xlu0 %1783
    %1785 = vrot.lane.b32.xlu0 %v1660, 66
    %v1786 = vpop.permute.xlu0 %1785
    %v1787 = vrot.slane %v1660, 7
    %v1788 = vsel %vm1004, %v1787, %v1653
    %v1789 = vrot.slane %v1666, 7
    %v1790 = vsel %vm1004, %v1789, %v1664
    %v1791 = vrot.slane %v1670, 7
    %v1792 = vsel %vm1004, %v1791, %v1668
    %v1793 = vrot.slane %v1674, 7
    %v1794 = vsel %vm1004, %v1793, %v1672
    %v1795 = vrot.slane %v1678, 7
    %v1796 = vsel %vm1004, %v1795, %v1676
    %v1797 = vrot.slane %v1682, 7
    %v1798 = vsel %vm1004, %v1797, %v1680
    %v1799 = vrot.slane %v1686, 7
    %v1800 = vsel %vm1004, %v1799, %v1684
    %v1801 = vrot.slane %v1690, 7
    %v1802 = vsel %vm1004, %v1801, %v1688
    %v1803 = vrot.slane %v1694, 7
    %v1804 = vsel %vm1004, %v1803, %v1692
    %v1805 = vrot.slane %v1698, 7
    %v1806 = vsel %vm1004, %v1805, %v1696
    %v1807 = vrot.slane %v1702, 7
    %v1808 = vsel %vm1004, %v1807, %v1700
    %v1809 = vrot.slane %v1706, 7
    %v1810 = vsel %vm1004, %v1809, %v1704
    %v1811 = vrot.slane %v1710, 7
    %v1812 = vsel %vm1004, %v1811, %v1708
    %v1813 = vrot.slane %v1714, 7
    %v1814 = vsel %vm1004, %v1813, %v1712
    %v1815 = vrot.slane %v1718, 7
    %v1816 = vsel %vm1004, %v1815, %v1716
    %v1817 = vrot.slane %v1722, 7
    %v1818 = vsel %vm1004, %v1817, %v1720
    %v1819 = vrot.slane %v1726, 7
    %v1820 = vsel %vm1004, %v1819, %v1724
    %v1821 = vrot.slane %v1730, 7
    %v1822 = vsel %vm1004, %v1821, %v1728
    %v1823 = vrot.slane %v1734, 7
    %v1824 = vsel %vm1004, %v1823, %v1732
    %v1825 = vrot.slane %v1738, 7
    %v1826 = vsel %vm1004, %v1825, %v1736
    %v1827 = vrot.slane %v1742, 7
    %v1828 = vsel %vm1004, %v1827, %v1740
    %v1829 = vrot.slane %v1746, 7
    %v1830 = vsel %vm1004, %v1829, %v1744
    %v1831 = vrot.slane %v1750, 7
    %v1832 = vsel %vm1004, %v1831, %v1748
    %v1833 = vrot.slane %v1754, 7
    %v1834 = vsel %vm1004, %v1833, %v1752
    %v1835 = vrot.slane %v1758, 7
    %v1836 = vsel %vm1004, %v1835, %v1756
    %v1837 = vrot.slane %v1762, 7
    %v1838 = vsel %vm1004, %v1837, %v1760
    %v1839 = vrot.slane %v1766, 7
    %v1840 = vsel %vm1004, %v1839, %v1764
    %v1841 = vrot.slane %v1770, 7
    %v1842 = vsel %vm1004, %v1841, %v1768
    %v1843 = vrot.slane %v1774, 7
    %v1844 = vsel %vm1004, %v1843, %v1772
    %v1845 = vrot.slane %v1778, 7
    %v1846 = vsel %vm1004, %v1845, %v1776
    %v1847 = vrot.slane %v1782, 7
    %v1848 = vsel %vm1004, %v1847, %v1780
    %v1849 = vrot.slane %v1786, 7
    %v1850 = vsel %vm1004, %v1849, %v1784
    %v1883 = vcombine.low %v1788, %v1792
    %v1885 = vunpack.c.l.s4 1983009808
    %v1886 = vunpack.c.0.s8 %v1885
    %v1887 = vlaneseq
    %v1888 = vshrl.u32 %v1887, 7
    %v1889 = vsub.s32 %v1886, %v1888
    %v1890 = vrot.slane %v1883, %v1889
    %v1891 = vcombine.low %v1790, %v1794
    %v1893 = vunpack.c.l.s4 1983009808
    %v1894 = vunpack.c.0.s8 %v1893
    %v1895 = vlaneseq
    %v1896 = vshrl.u32 %v1895, 7
    %v1897 = vsub.s32 %v1894, %v1896
    %v1898 = vrot.slane %v1891, %v1897
    %v1899 = vcombine.low %v1796, %v1800
    %v1901 = vunpack.c.l.s4 1983009808
    %v1902 = vunpack.c.0.s8 %v1901
    %v1903 = vlaneseq
    %v1904 = vshrl.u32 %v1903, 7
    %v1905 = vsub.s32 %v1902, %v1904
    %v1906 = vrot.slane %v1899, %v1905
    %v1907 = vcombine.low %v1798, %v1802
    %v1909 = vunpack.c.l.s4 1983009808
    %v1910 = vunpack.c.0.s8 %v1909
    %v1911 = vlaneseq
    %v1912 = vshrl.u32 %v1911, 7
    %v1913 = vsub.s32 %v1910, %v1912
    %v1914 = vrot.slane %v1907, %v1913
    %v1915 = vcombine.low %v1890, %v1898
    %v1917 = vunpack.c.l.s4 1934713408
    %v1918 = vunpack.c.0.s8 %v1917
    %v1919 = vlaneseq
    %v1920 = vshrl.u32 %v1919, 7
    %v1921 = vsub.s32 %v1918, %v1920
    %v1922 = vrot.slane %v1915, %v1921
    %v1923 = vcombine.low %v1906, %v1914
    %v1925 = vunpack.c.l.s4 1934713408
    %v1926 = vunpack.c.0.s8 %v1925
    %v1927 = vlaneseq
    %v1928 = vshrl.u32 %v1927, 7
    %v1929 = vsub.s32 %v1926, %v1928
    %v1930 = vrot.slane %v1923, %v1929
    %v1931 = vcombine.low %v1922, %v1930
    %v1932 = vcombine.high %v1922, %v1930
    %v1933 = vcombine.low %v1804, %v1808
    %v1935 = vunpack.c.l.s4 1983009808
    %v1936 = vunpack.c.0.s8 %v1935
    %v1937 = vlaneseq
    %v1938 = vshrl.u32 %v1937, 7
    %v1939 = vsub.s32 %v1936, %v1938
    %v1940 = vrot.slane %v1933, %v1939
    %v1941 = vcombine.low %v1806, %v1810
    %v1943 = vunpack.c.l.s4 1983009808
    %v1944 = vunpack.c.0.s8 %v1943
    %v1945 = vlaneseq
    %v1946 = vshrl.u32 %v1945, 7
    %v1947 = vsub.s32 %v1944, %v1946
    %v1948 = vrot.slane %v1941, %v1947
    %v1949 = vcombine.low %v1812, %v1816
    %v1951 = vunpack.c.l.s4 1983009808
    %v1952 = vunpack.c.0.s8 %v1951
    %v1953 = vlaneseq
    %v1954 = vshrl.u32 %v1953, 7
    %v1955 = vsub.s32 %v1952, %v1954
    %v1956 = vrot.slane %v1949, %v1955
    %v1957 = vcombine.low %v1814, %v1818
    %v1959 = vunpack.c.l.s4 1983009808
    %v1960 = vunpack.c.0.s8 %v1959
    %v1961 = vlaneseq
    %v1962 = vshrl.u32 %v1961, 7
    %v1963 = vsub.s32 %v1960, %v1962
    %v1964 = vrot.slane %v1957, %v1963
    %v1965 = vcombine.low %v1940, %v1948
    %v1967 = vunpack.c.l.s4 1934713408
    %v1968 = vunpack.c.0.s8 %v1967
    %v1969 = vlaneseq
    %v1970 = vshrl.u32 %v1969, 7
    %v1971 = vsub.s32 %v1968, %v1970
    %v1972 = vrot.slane %v1965, %v1971
    %v1973 = vcombine.low %v1956, %v1964
    %v1975 = vunpack.c.l.s4 1934713408
    %v1976 = vunpack.c.0.s8 %v1975
    %v1977 = vlaneseq
    %v1978 = vshrl.u32 %v1977, 7
    %v1979 = vsub.s32 %v1976, %v1978
    %v1980 = vrot.slane %v1973, %v1979
    %v1981 = vcombine.low %v1972, %v1980
    %v1982 = vcombine.high %v1972, %v1980
    %v1983 = vcombine.low %v1820, %v1824
    %v1985 = vunpack.c.l.s4 1983009808
    %v1986 = vunpack.c.0.s8 %v1985
    %v1987 = vlaneseq
    %v1988 = vshrl.u32 %v1987, 7
    %v1989 = vsub.s32 %v1986, %v1988
    %v1990 = vrot.slane %v1983, %v1989
    %v1991 = vcombine.low %v1822, %v1826
    %v1993 = vunpack.c.l.s4 1983009808
    %v1994 = vunpack.c.0.s8 %v1993
    %v1995 = vlaneseq
    %v1996 = vshrl.u32 %v1995, 7
    %v1997 = vsub.s32 %v1994, %v1996
    %v1998 = vrot.slane %v1991, %v1997
    %v1999 = vcombine.low %v1828, %v1832
    %v2001 = vunpack.c.l.s4 1983009808
    %v2002 = vunpack.c.0.s8 %v2001
    %v2003 = vlaneseq
    %v2004 = vshrl.u32 %v2003, 7
    %v2005 = vsub.s32 %v2002, %v2004
    %v2006 = vrot.slane %v1999, %v2005
    %v2007 = vcombine.low %v1830, %v1834
    %v2009 = vunpack.c.l.s4 1983009808
    %v2010 = vunpack.c.0.s8 %v2009
    %v2011 = vlaneseq
    %v2012 = vshrl.u32 %v2011, 7
    %v2013 = vsub.s32 %v2010, %v2012
    %v2014 = vrot.slane %v2007, %v2013
    %v2015 = vcombine.low %v1990, %v1998
    %v2017 = vunpack.c.l.s4 1934713408
    %v2018 = vunpack.c.0.s8 %v2017
    %v2019 = vlaneseq
    %v2020 = vshrl.u32 %v2019, 7
    %v2021 = vsub.s32 %v2018, %v2020
    %v2022 = vrot.slane %v2015, %v2021
    %v2023 = vcombine.low %v2006, %v2014
    %v2025 = vunpack.c.l.s4 1934713408
    %v2026 = vunpack.c.0.s8 %v2025
    %v2027 = vlaneseq
    %v2028 = vshrl.u32 %v2027, 7
    %v2029 = vsub.s32 %v2026, %v2028
    %v2030 = vrot.slane %v2023, %v2029
    %v2031 = vcombine.low %v2022, %v2030
    %v2032 = vcombine.high %v2022, %v2030
    %v2033 = vcombine.low %v1836, %v1840
    %v2035 = vunpack.c.l.s4 1983009808
    %v2036 = vunpack.c.0.s8 %v2035
    %v2037 = vlaneseq
    %v2038 = vshrl.u32 %v2037, 7
    %v2039 = vsub.s32 %v2036, %v2038
    %v2040 = vrot.slane %v2033, %v2039
    %v2041 = vcombine.low %v1838, %v1842
    %v2043 = vunpack.c.l.s4 1983009808
    %v2044 = vunpack.c.0.s8 %v2043
    %v2045 = vlaneseq
    %v2046 = vshrl.u32 %v2045, 7
    %v2047 = vsub.s32 %v2044, %v2046
    %v2048 = vrot.slane %v2041, %v2047
    %v2049 = vcombine.low %v1844, %v1848
    %v2051 = vunpack.c.l.s4 1983009808
    %v2052 = vunpack.c.0.s8 %v2051
    %v2053 = vlaneseq
    %v2054 = vshrl.u32 %v2053, 7
    %v2055 = vsub.s32 %v2052, %v2054
    %v2056 = vrot.slane %v2049, %v2055
    %v2057 = vcombine.low %v1846, %v1850
    %v2059 = vunpack.c.l.s4 1983009808
    %v2060 = vunpack.c.0.s8 %v2059
    %v2061 = vlaneseq
    %v2062 = vshrl.u32 %v2061, 7
    %v2063 = vsub.s32 %v2060, %v2062
    %v2064 = vrot.slane %v2057, %v2063
    %v2065 = vcombine.low %v2040, %v2048
    %v2067 = vunpack.c.l.s4 1934713408
    %v2068 = vunpack.c.0.s8 %v2067
    %v2069 = vlaneseq
    %v2070 = vshrl.u32 %v2069, 7
    %v2071 = vsub.s32 %v2068, %v2070
    %v2072 = vrot.slane %v2065, %v2071
    %v2073 = vcombine.low %v2056, %v2064
    %v2075 = vunpack.c.l.s4 1934713408
    %v2076 = vunpack.c.0.s8 %v2075
    %v2077 = vlaneseq
    %v2078 = vshrl.u32 %v2077, 7
    %v2079 = vsub.s32 %v2076, %v2078
    %v2080 = vrot.slane %v2073, %v2079
    %v2081 = vcombine.low %v2072, %v2080
    %v2082 = vcombine.high %v2072, %v2080
    %v2083 = vsel %vm1515, %v1931, 0.0
    %2084 = vadd.xlane.f32.xlu0 %v2083
    %v2085 = vpop.xlane.xlu0 %2084
    %v2086 = vsel %vm1515, %v1981, 0.0
    %2087 = vadd.xlane.f32.xlu0 %v2086
    %v2088 = vpop.xlane.xlu0 %2087
    %v2089 = vsel %vm1515, %v2031, 0.0
    %2090 = vadd.xlane.f32.xlu0 %v2089
    %v2091 = vpop.xlane.xlu0 %2090
    %v2092 = vsel %vm1515, %v2081, 0.0
    %2093 = vadd.xlane.f32.xlu0 %v2092
    %v2094 = vpop.xlane.xlu0 %2093
    %v2095 = vsel %vm1515, %v1932, 0.0
    %2096 = vadd.xlane.f32.xlu0 %v2095
    %v2097 = vpop.xlane.xlu0 %2096
    %v2098 = vsel %vm1515, %v1982, 0.0
    %2099 = vadd.xlane.f32.xlu0 %v2098
    %v2100 = vpop.xlane.xlu0 %2099
    %v2101 = vsel %vm1515, %v2032, 0.0
    %2102 = vadd.xlane.f32.xlu0 %v2101
    %v2103 = vpop.xlane.xlu0 %2102
    %v2104 = vsel %vm1515, %v2082, 0.0
    %2105 = vadd.xlane.f32.xlu0 %v2104
    %v2106 = vpop.xlane.xlu0 %2105
    %v2107 = vmul.f32 %v2085, %v1540
    %v2108 = vmul.f32 %v2088, %v1540
    %v2109 = vmul.f32 %v2091, %v1540
    %v2110 = vmul.f32 %v2094, %v1540
    %v2111 = vmul.f32 %v2097, %v1540
    %v2112 = vmul.f32 %v2100, %v1540
    %v2113 = vmul.f32 %v2103, %v1540
    %v2114 = vmul.f32 %v2106, %v1540
    %v2115 = vmul.f32 %v1541, %v1541
    %v2116 = vmul.f32 %v1542, %v1542
    %v2117 = vmul.f32 %v1543, %v1543
    %v2118 = vmul.f32 %v1544, %v1544
    %v2119 = vmul.f32 %v1545, %v1545
    %v2120 = vmul.f32 %v1546, %v1546
    %v2121 = vmul.f32 %v1547, %v1547
    %v2122 = vmul.f32 %v1548, %v1548
    %v2123 = vsub.f32 %v2107, %v2115
    %v2124 = vsub.f32 %v2108, %v2116
    %v2125 = vsub.f32 %v2109, %v2117
    %v2126 = vsub.f32 %v2110, %v2118
    %v2127 = vsub.f32 %v2111, %v2119
    %v2128 = vsub.f32 %v2112, %v2120
    %v2129 = vsub.f32 %v2113, %v2121
    %v2130 = vsub.f32 %v2114, %v2122
    %v2131 = vadd.f32 %v2123, 1e-05
    %v2132 = vadd.f32 %v2124, 1e-05
    %v2133 = vadd.f32 %v2125, 1e-05
    %v2134 = vadd.f32 %v2126, 1e-05
    %v2135 = vadd.f32 %v2127, 1e-05
    %v2136 = vadd.f32 %v2128, 1e-05
    %v2137 = vadd.f32 %v2129, 1e-05
    %v2138 = vadd.f32 %v2130, 1e-05
    %v2139 = vrsqrt.pop %v2131
    %v2140 = vrsqrt.pop %v2132
    %v2141 = vrsqrt.pop %v2133
    %v2142 = vrsqrt.pop %v2134
    %v2143 = vrsqrt.pop %v2135
    %v2144 = vrsqrt.pop %v2136
    %v2145 = vrsqrt.pop %v2137
    %v2146 = vrsqrt.pop %v2138
    %v2147 = vld [vmem:[%s2] ss:$2 sm:$0xf]
    %s2148 = scalar_lea.vmem %s2, 1
    %v2149 = vld [vmem:[%s2148] ss:$2 sm:$0xf]
    %v2150 = vcombine.high %v2139, 0.0
    %v2152 = vunpack.c.l.s4 1983009808
    %v2153 = vunpack.c.0.s8 %v2152
    %v2154 = vlaneseq
    %v2155 = vshrl.u32 %v2154, 7
    %v2156 = vsub.s32 %v2153, %v2155
    %v2157 = vrot.slane %v2139, %v2156
    %v2159 = vunpack.c.l.s4 1983009808
    %v2160 = vunpack.c.0.s8 %v2159
    %v2161 = vlaneseq
    %v2162 = vshrl.u32 %v2161, 7
    %v2163 = vsub.s32 %v2160, %v2162
    %v2164 = vrot.slane %v2150, %v2163
    %v2165 = vcombine.high %v2157, 0.0
    %v2167 = vunpack.c.l.s4 1934713408
    %v2168 = vunpack.c.0.s8 %v2167
    %v2169 = vlaneseq
    %v2170 = vshrl.u32 %v2169, 7
    %v2171 = vsub.s32 %v2168, %v2170
    %v2172 = vrot.slane %v2157, %v2171
    %v2174 = vunpack.c.l.s4 1934713408
    %v2175 = vunpack.c.0.s8 %v2174
    %v2176 = vlaneseq
    %v2177 = vshrl.u32 %v2176, 7
    %v2178 = vsub.s32 %v2175, %v2177
    %v2179 = vrot.slane %v2165, %v2178
    %v2180 = vcombine.high %v2164, 0.0
    %v2182 = vunpack.c.l.s4 1934713408
    %v2183 = vunpack.c.0.s8 %v2182
    %v2184 = vlaneseq
    %v2185 = vshrl.u32 %v2184, 7
    %v2186 = vsub.s32 %v2183, %v2185
    %v2187 = vrot.slane %v2164, %v2186
    %v2189 = vunpack.c.l.s4 1934713408
    %v2190 = vunpack.c.0.s8 %v2189
    %v2191 = vlaneseq
    %v2192 = vshrl.u32 %v2191, 7
    %v2193 = vsub.s32 %v2190, %v2192
    %v2194 = vrot.slane %v2180, %v2193
    %v2195 = vcombine.high %v2172, 0.0
    %v2196 = vcombine.high %v2179, 0.0
    %v2197 = vcombine.high %v2187, 0.0
    %v2198 = vcombine.high %v2194, 0.0
    %v2199 = vcombine.high %v2140, 0.0
    %v2201 = vunpack.c.l.s4 1983009808
    %v2202 = vunpack.c.0.s8 %v2201
    %v2203 = vlaneseq
    %v2204 = vshrl.u32 %v2203, 7
    %v2205 = vsub.s32 %v2202, %v2204
    %v2206 = vrot.slane %v2140, %v2205
    %v2208 = vunpack.c.l.s4 1983009808
    %v2209 = vunpack.c.0.s8 %v2208
    %v2210 = vlaneseq
    %v2211 = vshrl.u32 %v2210, 7
    %v2212 = vsub.s32 %v2209, %v2211
    %v2213 = vrot.slane %v2199, %v2212
    %v2214 = vcombine.high %v2206, 0.0
    %v2216 = vunpack.c.l.s4 1934713408
    %v2217 = vunpack.c.0.s8 %v2216
    %v2218 = vlaneseq
    %v2219 = vshrl.u32 %v2218, 7
    %v2220 = vsub.s32 %v2217, %v2219
    %v2221 = vrot.slane %v2206, %v2220
    %v2223 = vunpack.c.l.s4 1934713408
    %v2224 = vunpack.c.0.s8 %v2223
    %v2225 = vlaneseq
    %v2226 = vshrl.u32 %v2225, 7
    %v2227 = vsub.s32 %v2224, %v2226
    %v2228 = vrot.slane %v2214, %v2227
    %v2229 = vcombine.high %v2213, 0.0
    %v2231 = vunpack.c.l.s4 1934713408
    %v2232 = vunpack.c.0.s8 %v2231
    %v2233 = vlaneseq
    %v2234 = vshrl.u32 %v2233, 7
    %v2235 = vsub.s32 %v2232, %v2234
    %v2236 = vrot.slane %v2213, %v2235
    %v2238 = vunpack.c.l.s4 1934713408
    %v2239 = vunpack.c.0.s8 %v2238
    %v2240 = vlaneseq
    %v2241 = vshrl.u32 %v2240, 7
    %v2242 = vsub.s32 %v2239, %v2241
    %v2243 = vrot.slane %v2229, %v2242
    %v2244 = vcombine.high %v2221, 0.0
    %v2245 = vcombine.high %v2228, 0.0
    %v2246 = vcombine.high %v2236, 0.0
    %v2247 = vcombine.high %v2243, 0.0
    %v2248 = vcombine.high %v2141, 0.0
    %v2250 = vunpack.c.l.s4 1983009808
    %v2251 = vunpack.c.0.s8 %v2250
    %v2252 = vlaneseq
    %v2253 = vshrl.u32 %v2252, 7
    %v2254 = vsub.s32 %v2251, %v2253
    %v2255 = vrot.slane %v2141, %v2254
    %v2257 = vunpack.c.l.s4 1983009808
    %v2258 = vunpack.c.0.s8 %v2257
    %v2259 = vlaneseq
    %v2260 = vshrl.u32 %v2259, 7
    %v2261 = vsub.s32 %v2258, %v2260
    %v2262 = vrot.slane %v2248, %v2261
    %v2263 = vcombine.high %v2255, 0.0
    %v2265 = vunpack.c.l.s4 1934713408
    %v2266 = vunpack.c.0.s8 %v2265
    %v2267 = vlaneseq
    %v2268 = vshrl.u32 %v2267, 7
    %v2269 = vsub.s32 %v2266, %v2268
    %v2270 = vrot.slane %v2255, %v2269
    %v2272 = vunpack.c.l.s4 1934713408
    %v2273 = vunpack.c.0.s8 %v2272
    %v2274 = vlaneseq
    %v2275 = vshrl.u32 %v2274, 7
    %v2276 = vsub.s32 %v2273, %v2275
    %v2277 = vrot.slane %v2263, %v2276
    %v2278 = vcombine.high %v2262, 0.0
    %v2280 = vunpack.c.l.s4 1934713408
    %v2281 = vunpack.c.0.s8 %v2280
    %v2282 = vlaneseq
    %v2283 = vshrl.u32 %v2282, 7
    %v2284 = vsub.s32 %v2281, %v2283
    %v2285 = vrot.slane %v2262, %v2284
    %v2287 = vunpack.c.l.s4 1934713408
    %v2288 = vunpack.c.0.s8 %v2287
    %v2289 = vlaneseq
    %v2290 = vshrl.u32 %v2289, 7
    %v2291 = vsub.s32 %v2288, %v2290
    %v2292 = vrot.slane %v2278, %v2291
    %v2293 = vcombine.high %v2270, 0.0
    %v2294 = vcombine.high %v2277, 0.0
    %v2295 = vcombine.high %v2285, 0.0
    %v2296 = vcombine.high %v2292, 0.0
    %v2297 = vcombine.high %v2142, 0.0
    %v2299 = vunpack.c.l.s4 1983009808
    %v2300 = vunpack.c.0.s8 %v2299
    %v2301 = vlaneseq
    %v2302 = vshrl.u32 %v2301, 7
    %v2303 = vsub.s32 %v2300, %v2302
    %v2304 = vrot.slane %v2142, %v2303
    %v2306 = vunpack.c.l.s4 1983009808
    %v2307 = vunpack.c.0.s8 %v2306
    %v2308 = vlaneseq
    %v2309 = vshrl.u32 %v2308, 7
    %v2310 = vsub.s32 %v2307, %v2309
    %v2311 = vrot.slane %v2297, %v2310
    %v2312 = vcombine.high %v2304, 0.0
    %v2314 = vunpack.c.l.s4 1934713408
    %v2315 = vunpack.c.0.s8 %v2314
    %v2316 = vlaneseq
    %v2317 = vshrl.u32 %v2316, 7
    %v2318 = vsub.s32 %v2315, %v2317
    %v2319 = vrot.slane %v2304, %v2318
    %v2321 = vunpack.c.l.s4 1934713408
    %v2322 = vunpack.c.0.s8 %v2321
    %v2323 = vlaneseq
    %v2324 = vshrl.u32 %v2323, 7
    %v2325 = vsub.s32 %v2322, %v2324
    %v2326 = vrot.slane %v2312, %v2325
    %v2327 = vcombine.high %v2311, 0.0
    %v2329 = vunpack.c.l.s4 1934713408
    %v2330 = vunpack.c.0.s8 %v2329
    %v2331 = vlaneseq
    %v2332 = vshrl.u32 %v2331, 7
    %v2333 = vsub.s32 %v2330, %v2332
    %v2334 = vrot.slane %v2311, %v2333
    %v2336 = vunpack.c.l.s4 1934713408
    %v2337 = vunpack.c.0.s8 %v2336
    %v2338 = vlaneseq
    %v2339 = vshrl.u32 %v2338, 7
    %v2340 = vsub.s32 %v2337, %v2339
    %v2341 = vrot.slane %v2327, %v2340
    %v2342 = vcombine.high %v2319, 0.0
    %v2343 = vcombine.high %v2326, 0.0
    %v2344 = vcombine.high %v2334, 0.0
    %v2345 = vcombine.high %v2341, 0.0
    %v2346 = vcombine.high %v2143, 0.0
    %v2348 = vunpack.c.l.s4 1983009808
    %v2349 = vunpack.c.0.s8 %v2348
    %v2350 = vlaneseq
    %v2351 = vshrl.u32 %v2350, 7
    %v2352 = vsub.s32 %v2349, %v2351
    %v2353 = vrot.slane %v2143, %v2352
    %v2355 = vunpack.c.l.s4 1983009808
    %v2356 = vunpack.c.0.s8 %v2355
    %v2357 = vlaneseq
    %v2358 = vshrl.u32 %v2357, 7
    %v2359 = vsub.s32 %v2356, %v2358
    %v2360 = vrot.slane %v2346, %v2359
    %v2361 = vcombine.high %v2353, 0.0
    %v2363 = vunpack.c.l.s4 1934713408
    %v2364 = vunpack.c.0.s8 %v2363
    %v2365 = vlaneseq
    %v2366 = vshrl.u32 %v2365, 7
    %v2367 = vsub.s32 %v2364, %v2366
    %v2368 = vrot.slane %v2353, %v2367
    %v2370 = vunpack.c.l.s4 1934713408
    %v2371 = vunpack.c.0.s8 %v2370
    %v2372 = vlaneseq
    %v2373 = vshrl.u32 %v2372, 7
    %v2374 = vsub.s32 %v2371, %v2373
    %v2375 = vrot.slane %v2361, %v2374
    %v2376 = vcombine.high %v2360, 0.0
    %v2378 = vunpack.c.l.s4 1934713408
    %v2379 = vunpack.c.0.s8 %v2378
    %v2380 = vlaneseq
    %v2381 = vshrl.u32 %v2380, 7
    %v2382 = vsub.s32 %v2379, %v2381
    %v2383 = vrot.slane %v2360, %v2382
    %v2385 = vunpack.c.l.s4 1934713408
    %v2386 = vunpack.c.0.s8 %v2385
    %v2387 = vlaneseq
    %v2388 = vshrl.u32 %v2387, 7
    %v2389 = vsub.s32 %v2386, %v2388
    %v2390 = vrot.slane %v2376, %v2389
    %v2391 = vcombine.high %v2368, 0.0
    %v2392 = vcombine.high %v2375, 0.0
    %v2393 = vcombine.high %v2383, 0.0
    %v2394 = vcombine.high %v2390, 0.0
    %v2395 = vcombine.high %v2144, 0.0
    %v2397 = vunpack.c.l.s4 1983009808
    %v2398 = vunpack.c.0.s8 %v2397
    %v2399 = vlaneseq
    %v2400 = vshrl.u32 %v2399, 7
    %v2401 = vsub.s32 %v2398, %v2400
    %v2402 = vrot.slane %v2144, %v2401
    %v2404 = vunpack.c.l.s4 1983009808
    %v2405 = vunpack.c.0.s8 %v2404
    %v2406 = vlaneseq
    %v2407 = vshrl.u32 %v2406, 7
    %v2408 = vsub.s32 %v2405, %v2407
    %v2409 = vrot.slane %v2395, %v2408
    %v2410 = vcombine.high %v2402, 0.0
    %v2412 = vunpack.c.l.s4 1934713408
    %v2413 = vunpack.c.0.s8 %v2412
    %v2414 = vlaneseq
    %v2415 = vshrl.u32 %v2414, 7
    %v2416 = vsub.s32 %v2413, %v2415
    %v2417 = vrot.slane %v2402, %v2416
    %v2419 = vunpack.c.l.s4 1934713408
    %v2420 = vunpack.c.0.s8 %v2419
    %v2421 = vlaneseq
    %v2422 = vshrl.u32 %v2421, 7
    %v2423 = vsub.s32 %v2420, %v2422
    %v2424 = vrot.slane %v2410, %v2423
    %v2425 = vcombine.high %v2409, 0.0
    %v2427 = vunpack.c.l.s4 1934713408
    %v2428 = vunpack.c.0.s8 %v2427
    %v2429 = vlaneseq
    %v2430 = vshrl.u32 %v2429, 7
    %v2431 = vsub.s32 %v2428, %v2430
    %v2432 = vrot.slane %v2409, %v2431
    %v2434 = vunpack.c.l.s4 1934713408
    %v2435 = vunpack.c.0.s8 %v2434
    %v2436 = vlaneseq
    %v2437 = vshrl.u32 %v2436, 7
    %v2438 = vsub.s32 %v2435, %v2437
    %v2439 = vrot.slane %v2425, %v2438
    %v2440 = vcombine.high %v2417, 0.0
    %v2441 = vcombine.high %v2424, 0.0
    %v2442 = vcombine.high %v2432, 0.0
    %v2443 = vcombine.high %v2439, 0.0
    %v2444 = vcombine.high %v2145, 0.0
    %v2446 = vunpack.c.l.s4 1983009808
    %v2447 = vunpack.c.0.s8 %v2446
    %v2448 = vlaneseq
    %v2449 = vshrl.u32 %v2448, 7
    %v2450 = vsub.s32 %v2447, %v2449
    %v2451 = vrot.slane %v2145, %v2450
    %v2453 = vunpack.c.l.s4 1983009808
    %v2454 = vunpack.c.0.s8 %v2453
    %v2455 = vlaneseq
    %v2456 = vshrl.u32 %v2455, 7
    %v2457 = vsub.s32 %v2454, %v2456
    %v2458 = vrot.slane %v2444, %v2457
    %v2459 = vcombine.high %v2451, 0.0
    %v2461 = vunpack.c.l.s4 1934713408
    %v2462 = vunpack.c.0.s8 %v2461
    %v2463 = vlaneseq
    %v2464 = vshrl.u32 %v2463, 7
    %v2465 = vsub.s32 %v2462, %v2464
    %v2466 = vrot.slane %v2451, %v2465
    %v2468 = vunpack.c.l.s4 1934713408
    %v2469 = vunpack.c.0.s8 %v2468
    %v2470 = vlaneseq
    %v2471 = vshrl.u32 %v2470, 7
    %v2472 = vsub.s32 %v2469, %v2471
    %v2473 = vrot.slane %v2459, %v2472
    %v2474 = vcombine.high %v2458, 0.0
    %v2476 = vunpack.c.l.s4 1934713408
    %v2477 = vunpack.c.0.s8 %v2476
    %v2478 = vlaneseq
    %v2479 = vshrl.u32 %v2478, 7
    %v2480 = vsub.s32 %v2477, %v2479
    %v2481 = vrot.slane %v2458, %v2480
    %v2483 = vunpack.c.l.s4 1934713408
    %v2484 = vunpack.c.0.s8 %v2483
    %v2485 = vlaneseq
    %v2486 = vshrl.u32 %v2485, 7
    %v2487 = vsub.s32 %v2484, %v2486
    %v2488 = vrot.slane %v2474, %v2487
    %v2489 = vcombine.high %v2466, 0.0
    %v2490 = vcombine.high %v2473, 0.0
    %v2491 = vcombine.high %v2481, 0.0
    %v2492 = vcombine.high %v2488, 0.0
    %v2493 = vcombine.high %v2146, 0.0
    %v2495 = vunpack.c.l.s4 1983009808
    %v2496 = vunpack.c.0.s8 %v2495
    %v2497 = vlaneseq
    %v2498 = vshrl.u32 %v2497, 7
    %v2499 = vsub.s32 %v2496, %v2498
    %v2500 = vrot.slane %v2146, %v2499
    %v2502 = vunpack.c.l.s4 1983009808
    %v2503 = vunpack.c.0.s8 %v2502
    %v2504 = vlaneseq
    %v2505 = vshrl.u32 %v2504, 7
    %v2506 = vsub.s32 %v2503, %v2505
    %v2507 = vrot.slane %v2493, %v2506
    %v2508 = vcombine.high %v2500, 0.0
    %v2510 = vunpack.c.l.s4 1934713408
    %v2511 = vunpack.c.0.s8 %v2510
    %v2512 = vlaneseq
    %v2513 = vshrl.u32 %v2512, 7
    %v2514 = vsub.s32 %v2511, %v2513
    %v2515 = vrot.slane %v2500, %v2514
    %v2517 = vunpack.c.l.s4 1934713408
    %v2518 = vunpack.c.0.s8 %v2517
    %v2519 = vlaneseq
    %v2520 = vshrl.u32 %v2519, 7
    %v2521 = vsub.s32 %v2518, %v2520
    %v2522 = vrot.slane %v2508, %v2521
    %v2523 = vcombine.high %v2507, 0.0
    %v2525 = vunpack.c.l.s4 1934713408
    %v2526 = vunpack.c.0.s8 %v2525
    %v2527 = vlaneseq
    %v2528 = vshrl.u32 %v2527, 7
    %v2529 = vsub.s32 %v2526, %v2528
    %v2530 = vrot.slane %v2507, %v2529
    %v2532 = vunpack.c.l.s4 1934713408
    %v2533 = vunpack.c.0.s8 %v2532
    %v2534 = vlaneseq
    %v2535 = vshrl.u32 %v2534, 7
    %v2536 = vsub.s32 %v2533, %v2535
    %v2537 = vrot.slane %v2523, %v2536
    %v2538 = vcombine.high %v2515, 0.0
    %v2539 = vcombine.high %v2522, 0.0
    %v2540 = vcombine.high %v2530, 0.0
    %v2541 = vcombine.high %v2537, 0.0
    %2544 = vrot.lane.b32.xlu0 %v2195, 2
    %v2545 = vpop.permute.xlu0 %2544
    %2546 = vrot.lane.b32.xlu0 %v2391, 2
    %v2547 = vpop.permute.xlu0 %2546
    %2552 = vrot.lane.b32.xlu0 %v2179, 4
    %v2553 = vpop.permute.xlu0 %2552
    %2554 = vrot.lane.b32.xlu0 %v2375, 4
    %v2555 = vpop.permute.xlu0 %2554
    %2560 = vrot.lane.b32.xlu0 %v2196, 6
    %v2561 = vpop.permute.xlu0 %2560
    %2562 = vrot.lane.b32.xlu0 %v2392, 6
    %v2563 = vpop.permute.xlu0 %2562
    %2568 = vrot.lane.b32.xlu0 %v2187, 8
    %v2569 = vpop.permute.xlu0 %2568
    %2570 = vrot.lane.b32.xlu0 %v2383, 8
    %v2571 = vpop.permute.xlu0 %2570
    %2576 = vrot.lane.b32.xlu0 %v2197, 10
    %v2577 = vpop.permute.xlu0 %2576
    %2578 = vrot.lane.b32.xlu0 %v2393, 10
    %v2579 = vpop.permute.xlu0 %2578
    %2584 = vrot.lane.b32.xlu0 %v2194, 12
    %v2585 = vpop.permute.xlu0 %2584
    %2586 = vrot.lane.b32.xlu0 %v2390, 12
    %v2587 = vpop.permute.xlu0 %2586
    %2592 = vrot.lane.b32.xlu0 %v2198, 14
    %v2593 = vpop.permute.xlu0 %2592
    %2594 = vrot.lane.b32.xlu0 %v2394, 14
    %v2595 = vpop.permute.xlu0 %2594
    %2600 = vrot.lane.b32.xlu0 %v2221, 16
    %v2601 = vpop.permute.xlu0 %2600
    %2602 = vrot.lane.b32.xlu0 %v2417, 16
    %v2603 = vpop.permute.xlu0 %2602
    %2608 = vrot.lane.b32.xlu0 %v2244, 18
    %v2609 = vpop.permute.xlu0 %2608
    %2610 = vrot.lane.b32.xlu0 %v2440, 18
    %v2611 = vpop.permute.xlu0 %2610
    %2616 = vrot.lane.b32.xlu0 %v2228, 20
    %v2617 = vpop.permute.xlu0 %2616
    %2618 = vrot.lane.b32.xlu0 %v2424, 20
    %v2619 = vpop.permute.xlu0 %2618
    %2624 = vrot.lane.b32.xlu0 %v2245, 22
    %v2625 = vpop.permute.xlu0 %2624
    %2626 = vrot.lane.b32.xlu0 %v2441, 22
    %v2627 = vpop.permute.xlu0 %2626
    %2632 = vrot.lane.b32.xlu0 %v2236, 24
    %v2633 = vpop.permute.xlu0 %2632
    %2634 = vrot.lane.b32.xlu0 %v2432, 24
    %v2635 = vpop.permute.xlu0 %2634
    %2640 = vrot.lane.b32.xlu0 %v2246, 26
    %v2641 = vpop.permute.xlu0 %2640
    %2642 = vrot.lane.b32.xlu0 %v2442, 26
    %v2643 = vpop.permute.xlu0 %2642
    %2648 = vrot.lane.b32.xlu0 %v2243, 28
    %v2649 = vpop.permute.xlu0 %2648
    %2650 = vrot.lane.b32.xlu0 %v2439, 28
    %v2651 = vpop.permute.xlu0 %2650
    %2656 = vrot.lane.b32.xlu0 %v2247, 30
    %v2657 = vpop.permute.xlu0 %2656
    %2658 = vrot.lane.b32.xlu0 %v2443, 30
    %v2659 = vpop.permute.xlu0 %2658
    %2664 = vrot.lane.b32.xlu0 %v2270, 32
    %v2665 = vpop.permute.xlu0 %2664
    %2666 = vrot.lane.b32.xlu0 %v2466, 32
    %v2667 = vpop.permute.xlu0 %2666
    %2672 = vrot.lane.b32.xlu0 %v2293, 34
    %v2673 = vpop.permute.xlu0 %2672
    %2674 = vrot.lane.b32.xlu0 %v2489, 34
    %v2675 = vpop.permute.xlu0 %2674
    %2680 = vrot.lane.b32.xlu0 %v2277, 36
    %v2681 = vpop.permute.xlu0 %2680
    %2682 = vrot.lane.b32.xlu0 %v2473, 36
    %v2683 = vpop.permute.xlu0 %2682
    %2688 = vrot.lane.b32.xlu0 %v2294, 38
    %v2689 = vpop.permute.xlu0 %2688
    %2690 = vrot.lane.b32.xlu0 %v2490, 38
    %v2691 = vpop.permute.xlu0 %2690
    %2696 = vrot.lane.b32.xlu0 %v2285, 40
    %v2697 = vpop.permute.xlu0 %2696
    %2698 = vrot.lane.b32.xlu0 %v2481, 40
    %v2699 = vpop.permute.xlu0 %2698
    %2704 = vrot.lane.b32.xlu0 %v2295, 42
    %v2705 = vpop.permute.xlu0 %2704
    %2706 = vrot.lane.b32.xlu0 %v2491, 42
    %v2707 = vpop.permute.xlu0 %2706
    %2712 = vrot.lane.b32.xlu0 %v2292, 44
    %v2713 = vpop.permute.xlu0 %2712
    %2714 = vrot.lane.b32.xlu0 %v2488, 44
    %v2715 = vpop.permute.xlu0 %2714
    %2720 = vrot.lane.b32.xlu0 %v2296, 46
    %v2721 = vpop.permute.xlu0 %2720
    %2722 = vrot.lane.b32.xlu0 %v2492, 46
    %v2723 = vpop.permute.xlu0 %2722
    %2728 = vrot.lane.b32.xlu0 %v2319, 48
    %v2729 = vpop.permute.xlu0 %2728
    %2730 = vrot.lane.b32.xlu0 %v2515, 48
    %v2731 = vpop.permute.xlu0 %2730
    %2736 = vrot.lane.b32.xlu0 %v2342, 50
    %v2737 = vpop.permute.xlu0 %2736
    %2738 = vrot.lane.b32.xlu0 %v2538, 50
    %v2739 = vpop.permute.xlu0 %2738
    %2744 = vrot.lane.b32.xlu0 %v2326, 52
    %v2745 = vpop.permute.xlu0 %2744
    %2746 = vrot.lane.b32.xlu0 %v2522, 52
    %v2747 = vpop.permute.xlu0 %2746
    %2752 = vrot.lane.b32.xlu0 %v2343, 54
    %v2753 = vpop.permute.xlu0 %2752
    %2754 = vrot.lane.b32.xlu0 %v2539, 54
    %v2755 = vpop.permute.xlu0 %2754
    %2760 = vrot.lane.b32.xlu0 %v2334, 56
    %v2761 = vpop.permute.xlu0 %2760
    %2762 = vrot.lane.b32.xlu0 %v2530, 56
    %v2763 = vpop.permute.xlu0 %2762
    %2768 = vrot.lane.b32.xlu0 %v2344, 58
    %v2769 = vpop.permute.xlu0 %2768
    %2770 = vrot.lane.b32.xlu0 %v2540, 58
    %v2771 = vpop.permute.xlu0 %2770
    %2776 = vrot.lane.b32.xlu0 %v2341, 60
    %v2777 = vpop.permute.xlu0 %2776
    %2778 = vrot.lane.b32.xlu0 %v2537, 60
    %v2779 = vpop.permute.xlu0 %2778
    %2784 = vrot.lane.b32.xlu0 %v2345, 62
    %v2785 = vpop.permute.xlu0 %2784
    %2786 = vrot.lane.b32.xlu0 %v2541, 62
    %v2787 = vpop.permute.xlu0 %2786
    %v2790 = vsel %vm1515, %v2172, %v2545
    %v2791 = vsel %vm1515, %v2368, %v2547
    %vm2792 = vcmask 31744
    %v2793 = vsel %vm2792, %v2790, %v2553
    %v2794 = vsel %vm2792, %v2791, %v2555
    %vm2795 = vcmask 48128
    %v2796 = vsel %vm2795, %v2793, %v2561
    %v2797 = vsel %vm2795, %v2794, %v2563
    %vm2798 = vcmask 64512
    %v2799 = vsel %vm2798, %v2796, %v2569
    %v2800 = vsel %vm2798, %v2797, %v2571
    %vm2801 = vcmask 80896
    %v2802 = vsel %vm2801, %v2799, %v2577
    %v2803 = vsel %vm2801, %v2800, %v2579
    %vm2804 = vcmask 97280
    %v2805 = vsel %vm2804, %v2802, %v2585
    %v2806 = vsel %vm2804, %v2803, %v2587
    %vm2807 = vcmask 113664
    %v2808 = vsel %vm2807, %v2805, %v2593
    %v2809 = vsel %vm2807, %v2806, %v2595
    %vm2810 = vcmask 130048
    %v2811 = vsel %vm2810, %v2808, %v2601
    %v2812 = vsel %vm2810, %v2809, %v2603
    %vm2813 = vcmask 146432
    %v2814 = vsel %vm2813, %v2811, %v2609
    %v2815 = vsel %vm2813, %v2812, %v2611
    %vm2816 = vcmask 162816
    %v2817 = vsel %vm2816, %v2814, %v2617
    %v2818 = vsel %vm2816, %v2815, %v2619
    %vm2819 = vcmask 179200
    %v2820 = vsel %vm2819, %v2817, %v2625
    %v2821 = vsel %vm2819, %v2818, %v2627
    %vm2822 = vcmask 195584
    %v2823 = vsel %vm2822, %v2820, %v2633
    %v2824 = vsel %vm2822, %v2821, %v2635
    %vm2825 = vcmask 211968
    %v2826 = vsel %vm2825, %v2823, %v2641
    %v2827 = vsel %vm2825, %v2824, %v2643
    %vm2828 = vcmask 228352
    %v2829 = vsel %vm2828, %v2826, %v2649
    %v2830 = vsel %vm2828, %v2827, %v2651
    %vm2831 = vcmask 244736
    %v2832 = vsel %vm2831, %v2829, %v2657
    %v2833 = vsel %vm2831, %v2830, %v2659
    %vm2834 = vcmask 261120
    %v2835 = vsel %vm2834, %v2832, %v2665
    %v2836 = vsel %vm2834, %v2833, %v2667
    %vm2837 = vcmask 277504
    %v2838 = vsel %vm2837, %v2835, %v2673
    %v2839 = vsel %vm2837, %v2836, %v2675
    %vm2840 = vcmask 293888
    %v2841 = vsel %vm2840, %v2838, %v2681
    %v2842 = vsel %vm2840, %v2839, %v2683
    %vm2843 = vcmask 310272
    %v2844 = vsel %vm2843, %v2841, %v2689
    %v2845 = vsel %vm2843, %v2842, %v2691
    %vm2846 = vcmask 326656
    %v2847 = vsel %vm2846, %v2844, %v2697
    %v2848 = vsel %vm2846, %v2845, %v2699
    %vm2849 = vcmask 343040
    %v2850 = vsel %vm2849, %v2847, %v2705
    %v2851 = vsel %vm2849, %v2848, %v2707
    %vm2852 = vcmask 359424
    %v2853 = vsel %vm2852, %v2850, %v2713
    %v2854 = vsel %vm2852, %v2851, %v2715
    %vm2855 = vcmask 375808
    %v2856 = vsel %vm2855, %v2853, %v2721
    %v2857 = vsel %vm2855, %v2854, %v2723
    %vm2858 = vcmask 392192
    %v2859 = vsel %vm2858, %v2856, %v2729
    %v2860 = vsel %vm2858, %v2857, %v2731
    %vm2861 = vcmask 408576
    %v2862 = vsel %vm2861, %v2859, %v2737
    %v2863 = vsel %vm2861, %v2860, %v2739
    %vm2864 = vcmask 424960
    %v2865 = vsel %vm2864, %v2862, %v2745
    %v2866 = vsel %vm2864, %v2863, %v2747
    %vm2867 = vcmask 441344
    %v2868 = vsel %vm2867, %v2865, %v2753
    %v2869 = vsel %vm2867, %v2866, %v2755
    %vm2870 = vcmask 457728
    %v2871 = vsel %vm2870, %v2868, %v2761
    %v2872 = vsel %vm2870, %v2869, %v2763
    %vm2873 = vcmask 474112
    %v2874 = vsel %vm2873, %v2871, %v2769
    %v2875 = vsel %vm2873, %v2872, %v2771
    %vm2876 = vcmask 490496
    %v2877 = vsel %vm2876, %v2874, %v2777
    %v2878 = vsel %vm2876, %v2875, %v2779
    %vm2879 = vcmask 506880
    %v2880 = vsel %vm2879, %v2877, %v2785
    %v2881 = vsel %vm2879, %v2878, %v2787
    %v2882 = vlaneseq
    %v2883 = vshrl.u32 %v2882, 7
    %v2884 = vsub.s32 0, %v2883
    %v2885 = vrot.slane %v2880, %v2884
    %v2886 = vlaneseq
    %v2887 = vshrl.u32 %v2886, 7
    %v2888 = vsub.s32 0, %v2887
    %v2889 = vrot.slane %v2881, %v2888
    %v2890 = vcombine.high %v2885, 0.0
    %v2892 = vunpack.c.l.s4 1983009808
    %v2893 = vunpack.c.0.s8 %v2892
    %v2894 = vlaneseq
    %v2895 = vshrl.u32 %v2894, 7
    %v2896 = vsub.s32 %v2893, %v2895
    %v2897 = vrot.slane %v2885, %v2896
    %v2899 = vunpack.c.l.s4 1983009808
    %v2900 = vunpack.c.0.s8 %v2899
    %v2901 = vlaneseq
    %v2902 = vshrl.u32 %v2901, 7
    %v2903 = vsub.s32 %v2900, %v2902
    %v2904 = vrot.slane %v2890, %v2903
    %v2905 = vcombine.high %v2889, 0.0
    %v2907 = vunpack.c.l.s4 1983009808
    %v2908 = vunpack.c.0.s8 %v2907
    %v2909 = vlaneseq
    %v2910 = vshrl.u32 %v2909, 7
    %v2911 = vsub.s32 %v2908, %v2910
    %v2912 = vrot.slane %v2889, %v2911
    %v2914 = vunpack.c.l.s4 1983009808
    %v2915 = vunpack.c.0.s8 %v2914
    %v2916 = vlaneseq
    %v2917 = vshrl.u32 %v2916, 7
    %v2918 = vsub.s32 %v2915, %v2917
    %v2919 = vrot.slane %v2905, %v2918
    %v2920 = vcombine.low %v2897, %v2912
    %v2921 = vcombine.high %v2897, %v2912
    %v2923 = vunpack.c.l.s4 1934713408
    %v2924 = vunpack.c.0.s8 %v2923
    %v2925 = vlaneseq
    %v2926 = vshrl.u32 %v2925, 7
    %v2927 = vsub.s32 %v2924, %v2926
    %v2928 = vrot.slane %v2920, %v2927
    %v2930 = vunpack.c.l.s4 1934713408
    %v2931 = vunpack.c.0.s8 %v2930
    %v2932 = vlaneseq
    %v2933 = vshrl.u32 %v2932, 7
    %v2934 = vsub.s32 %v2931, %v2933
    %v2935 = vrot.slane %v2921, %v2934
    %v2936 = vcombine.low %v2904, %v2919
    %v2937 = vcombine.high %v2904, %v2919
    %v2939 = vunpack.c.l.s4 1934713408
    %v2940 = vunpack.c.0.s8 %v2939
    %v2941 = vlaneseq
    %v2942 = vshrl.u32 %v2941, 7
    %v2943 = vsub.s32 %v2940, %v2942
    %v2944 = vrot.slane %v2936, %v2943
    %v2946 = vunpack.c.l.s4 1934713408
    %v2947 = vunpack.c.0.s8 %v2946
    %v2948 = vlaneseq
    %v2949 = vshrl.u32 %v2948, 7
    %v2950 = vsub.s32 %v2947, %v2949
    %v2951 = vrot.slane %v2937, %v2950
    %v2952 = vcombine.high %v2928, 0.0
    %v2953 = vcombine.high %v2935, 0.0
    %v2954 = vcombine.high %v2944, 0.0
    %v2955 = vcombine.high %v2951, 0.0
    %2957 = vrot.lane.b32.xlu0 %v2952, 64
    %v2958 = vpop.permute.xlu0 %2957
    %2961 = vrot.lane.b32.xlu0 %v2953, 64
    %v2962 = vpop.permute.xlu0 %2961
    %2965 = vrot.lane.b32.xlu0 %v2954, 64
    %v2966 = vpop.permute.xlu0 %2965
    %2969 = vrot.lane.b32.xlu0 %v2955, 64
    %v2970 = vpop.permute.xlu0 %2969
    %v2972 = vsel %vm1078, %v2928, %v2958
    %v2973 = vsel %vm1078, %v2935, %v2962
    %v2974 = vsel %vm1078, %v2944, %v2966
    %v2975 = vsel %vm1078, %v2951, %v2970
    %v2977 = vlaneseq
    %v2978 = vshrl.u32 %v2977, 7
    %v2979 = vsub.s32 0, %v2978
    %v2980 = vrot.slane %v2147, %v2979
    %v2981 = vlaneseq
    %v2982 = vshrl.u32 %v2981, 7
    %v2983 = vsub.s32 1, %v2982
    %v2984 = vrot.slane %v2147, %v2983
    %v2985 = vlaneseq
    %v2986 = vshrl.u32 %v2985, 7
    %v2987 = vsub.s32 2, %v2986
    %v2988 = vrot.slane %v2147, %v2987
    %v2989 = vlaneseq
    %v2990 = vshrl.u32 %v2989, 7
    %v2991 = vsub.s32 3, %v2990
    %v2992 = vrot.slane %v2147, %v2991
    %v2997 = vmul.f32 %v2972, %v2980
    %v2998 = vmul.f32 %v2973, %v2984
    %v2999 = vmul.f32 %v2974, %v2988
    %v3000 = vmul.f32 %v2975, %v2992
    %v3001 = vcombine.high %v1541, 0.0
    %v3003 = vunpack.c.l.s4 1983009808
    %v3004 = vunpack.c.0.s8 %v3003
    %v3005 = vlaneseq
    %v3006 = vshrl.u32 %v3005, 7
    %v3007 = vsub.s32 %v3004, %v3006
    %v3008 = vrot.slane %v1541, %v3007
    %v3010 = vunpack.c.l.s4 1983009808
    %v3011 = vunpack.c.0.s8 %v3010
    %v3012 = vlaneseq
    %v3013 = vshrl.u32 %v3012, 7
    %v3014 = vsub.s32 %v3011, %v3013
    %v3015 = vrot.slane %v3001, %v3014
    %v3016 = vcombine.high %v3008, 0.0
    %v3018 = vunpack.c.l.s4 1934713408
    %v3019 = vunpack.c.0.s8 %v3018
    %v3020 = vlaneseq
    %v3021 = vshrl.u32 %v3020, 7
    %v3022 = vsub.s32 %v3019, %v3021
    %v3023 = vrot.slane %v3008, %v3022
    %v3025 = vunpack.c.l.s4 1934713408
    %v3026 = vunpack.c.0.s8 %v3025
    %v3027 = vlaneseq
    %v3028 = vshrl.u32 %v3027, 7
    %v3029 = vsub.s32 %v3026, %v3028
    %v3030 = vrot.slane %v3016, %v3029
    %v3031 = vcombine.high %v3015, 0.0
    %v3033 = vunpack.c.l.s4 1934713408
    %v3034 = vunpack.c.0.s8 %v3033
    %v3035 = vlaneseq
    %v3036 = vshrl.u32 %v3035, 7
    %v3037 = vsub.s32 %v3034, %v3036
    %v3038 = vrot.slane %v3015, %v3037
    %v3040 = vunpack.c.l.s4 1934713408
    %v3041 = vunpack.c.0.s8 %v3040
    %v3042 = vlaneseq
    %v3043 = vshrl.u32 %v3042, 7
    %v3044 = vsub.s32 %v3041, %v3043
    %v3045 = vrot.slane %v3031, %v3044
    %v3046 = vcombine.high %v3023, 0.0
    %v3047 = vcombine.high %v3030, 0.0
    %v3048 = vcombine.high %v3038, 0.0
    %v3049 = vcombine.high %v3045, 0.0
    %v3050 = vcombine.high %v1542, 0.0
    %v3052 = vunpack.c.l.s4 1983009808
    %v3053 = vunpack.c.0.s8 %v3052
    %v3054 = vlaneseq
    %v3055 = vshrl.u32 %v3054, 7
    %v3056 = vsub.s32 %v3053, %v3055
    %v3057 = vrot.slane %v1542, %v3056
    %v3059 = vunpack.c.l.s4 1983009808
    %v3060 = vunpack.c.0.s8 %v3059
    %v3061 = vlaneseq
    %v3062 = vshrl.u32 %v3061, 7
    %v3063 = vsub.s32 %v3060, %v3062
    %v3064 = vrot.slane %v3050, %v3063
    %v3065 = vcombine.high %v3057, 0.0
    %v3067 = vunpack.c.l.s4 1934713408
    %v3068 = vunpack.c.0.s8 %v3067
    %v3069 = vlaneseq
    %v3070 = vshrl.u32 %v3069, 7
    %v3071 = vsub.s32 %v3068, %v3070
    %v3072 = vrot.slane %v3057, %v3071
    %v3074 = vunpack.c.l.s4 1934713408
    %v3075 = vunpack.c.0.s8 %v3074
    %v3076 = vlaneseq
    %v3077 = vshrl.u32 %v3076, 7
    %v3078 = vsub.s32 %v3075, %v3077
    %v3079 = vrot.slane %v3065, %v3078
    %v3080 = vcombine.high %v3064, 0.0
    %v3082 = vunpack.c.l.s4 1934713408
    %v3083 = vunpack.c.0.s8 %v3082
    %v3084 = vlaneseq
    %v3085 = vshrl.u32 %v3084, 7
    %v3086 = vsub.s32 %v3083, %v3085
    %v3087 = vrot.slane %v3064, %v3086
    %v3089 = vunpack.c.l.s4 1934713408
    %v3090 = vunpack.c.0.s8 %v3089
    %v3091 = vlaneseq
    %v3092 = vshrl.u32 %v3091, 7
    %v3093 = vsub.s32 %v3090, %v3092
    %v3094 = vrot.slane %v3080, %v3093
    %v3095 = vcombine.high %v3072, 0.0
    %v3096 = vcombine.high %v3079, 0.0
    %v3097 = vcombine.high %v3087, 0.0
    %v3098 = vcombine.high %v3094, 0.0
    %v3099 = vcombine.high %v1543, 0.0
    %v3101 = vunpack.c.l.s4 1983009808
    %v3102 = vunpack.c.0.s8 %v3101
    %v3103 = vlaneseq
    %v3104 = vshrl.u32 %v3103, 7
    %v3105 = vsub.s32 %v3102, %v3104
    %v3106 = vrot.slane %v1543, %v3105
    %v3108 = vunpack.c.l.s4 1983009808
    %v3109 = vunpack.c.0.s8 %v3108
    %v3110 = vlaneseq
    %v3111 = vshrl.u32 %v3110, 7
    %v3112 = vsub.s32 %v3109, %v3111
    %v3113 = vrot.slane %v3099, %v3112
    %v3114 = vcombine.high %v3106, 0.0
    %v3116 = vunpack.c.l.s4 1934713408
    %v3117 = vunpack.c.0.s8 %v3116
    %v3118 = vlaneseq
    %v3119 = vshrl.u32 %v3118, 7
    %v3120 = vsub.s32 %v3117, %v3119
    %v3121 = vrot.slane %v3106, %v3120
    %v3123 = vunpack.c.l.s4 1934713408
    %v3124 = vunpack.c.0.s8 %v3123
    %v3125 = vlaneseq
    %v3126 = vshrl.u32 %v3125, 7
    %v3127 = vsub.s32 %v3124, %v3126
    %v3128 = vrot.slane %v3114, %v3127
    %v3129 = vcombine.high %v3113, 0.0
    %v3131 = vunpack.c.l.s4 1934713408
    %v3132 = vunpack.c.0.s8 %v3131
    %v3133 = vlaneseq
    %v3134 = vshrl.u32 %v3133, 7
    %v3135 = vsub.s32 %v3132, %v3134
    %v3136 = vrot.slane %v3113, %v3135
    %v3138 = vunpack.c.l.s4 1934713408
    %v3139 = vunpack.c.0.s8 %v3138
    %v3140 = vlaneseq
    %v3141 = vshrl.u32 %v3140, 7
    %v3142 = vsub.s32 %v3139, %v3141
    %v3143 = vrot.slane %v3129, %v3142
    %v3144 = vcombine.high %v3121, 0.0
    %v3145 = vcombine.high %v3128, 0.0
    %v3146 = vcombine.high %v3136, 0.0
    %v3147 = vcombine.high %v3143, 0.0
    %v3148 = vcombine.high %v1544, 0.0
    %v3150 = vunpack.c.l.s4 1983009808
    %v3151 = vunpack.c.0.s8 %v3150
    %v3152 = vlaneseq
    %v3153 = vshrl.u32 %v3152, 7
    %v3154 = vsub.s32 %v3151, %v3153
    %v3155 = vrot.slane %v1544, %v3154
    %v3157 = vunpack.c.l.s4 1983009808
    %v3158 = vunpack.c.0.s8 %v3157
    %v3159 = vlaneseq
    %v3160 = vshrl.u32 %v3159, 7
    %v3161 = vsub.s32 %v3158, %v3160
    %v3162 = vrot.slane %v3148, %v3161
    %v3163 = vcombine.high %v3155, 0.0
    %v3165 = vunpack.c.l.s4 1934713408
    %v3166 = vunpack.c.0.s8 %v3165
    %v3167 = vlaneseq
    %v3168 = vshrl.u32 %v3167, 7
    %v3169 = vsub.s32 %v3166, %v3168
    %v3170 = vrot.slane %v3155, %v3169
    %v3172 = vunpack.c.l.s4 1934713408
    %v3173 = vunpack.c.0.s8 %v3172
    %v3174 = vlaneseq
    %v3175 = vshrl.u32 %v3174, 7
    %v3176 = vsub.s32 %v3173, %v3175
    %v3177 = vrot.slane %v3163, %v3176
    %v3178 = vcombine.high %v3162, 0.0
    %v3180 = vunpack.c.l.s4 1934713408
    %v3181 = vunpack.c.0.s8 %v3180
    %v3182 = vlaneseq
    %v3183 = vshrl.u32 %v3182, 7
    %v3184 = vsub.s32 %v3181, %v3183
    %v3185 = vrot.slane %v3162, %v3184
    %v3187 = vunpack.c.l.s4 1934713408
    %v3188 = vunpack.c.0.s8 %v3187
    %v3189 = vlaneseq
    %v3190 = vshrl.u32 %v3189, 7
    %v3191 = vsub.s32 %v3188, %v3190
    %v3192 = vrot.slane %v3178, %v3191
    %v3193 = vcombine.high %v3170, 0.0
    %v3194 = vcombine.high %v3177, 0.0
    %v3195 = vcombine.high %v3185, 0.0
    %v3196 = vcombine.high %v3192, 0.0
    %v3197 = vcombine.high %v1545, 0.0
    %v3199 = vunpack.c.l.s4 1983009808
    %v3200 = vunpack.c.0.s8 %v3199
    %v3201 = vlaneseq
    %v3202 = vshrl.u32 %v3201, 7
    %v3203 = vsub.s32 %v3200, %v3202
    %v3204 = vrot.slane %v1545, %v3203
    %v3206 = vunpack.c.l.s4 1983009808
    %v3207 = vunpack.c.0.s8 %v3206
    %v3208 = vlaneseq
    %v3209 = vshrl.u32 %v3208, 7
    %v3210 = vsub.s32 %v3207, %v3209
    %v3211 = vrot.slane %v3197, %v3210
    %v3212 = vcombine.high %v3204, 0.0
    %v3214 = vunpack.c.l.s4 1934713408
    %v3215 = vunpack.c.0.s8 %v3214
    %v3216 = vlaneseq
    %v3217 = vshrl.u32 %v3216, 7
    %v3218 = vsub.s32 %v3215, %v3217
    %v3219 = vrot.slane %v3204, %v3218
    %v3221 = vunpack.c.l.s4 1934713408
    %v3222 = vunpack.c.0.s8 %v3221
    %v3223 = vlaneseq
    %v3224 = vshrl.u32 %v3223, 7
    %v3225 = vsub.s32 %v3222, %v3224
    %v3226 = vrot.slane %v3212, %v3225
    %v3227 = vcombine.high %v3211, 0.0
    %v3229 = vunpack.c.l.s4 1934713408
    %v3230 = vunpack.c.0.s8 %v3229
    %v3231 = vlaneseq
    %v3232 = vshrl.u32 %v3231, 7
    %v3233 = vsub.s32 %v3230, %v3232
    %v3234 = vrot.slane %v3211, %v3233
    %v3236 = vunpack.c.l.s4 1934713408
    %v3237 = vunpack.c.0.s8 %v3236
    %v3238 = vlaneseq
    %v3239 = vshrl.u32 %v3238, 7
    %v3240 = vsub.s32 %v3237, %v3239
    %v3241 = vrot.slane %v3227, %v3240
    %v3242 = vcombine.high %v3219, 0.0
    %v3243 = vcombine.high %v3226, 0.0
    %v3244 = vcombine.high %v3234, 0.0
    %v3245 = vcombine.high %v3241, 0.0
    %v3246 = vcombine.high %v1546, 0.0
    %v3248 = vunpack.c.l.s4 1983009808
    %v3249 = vunpack.c.0.s8 %v3248
    %v3250 = vlaneseq
    %v3251 = vshrl.u32 %v3250, 7
    %v3252 = vsub.s32 %v3249, %v3251
    %v3253 = vrot.slane %v1546, %v3252
    %v3255 = vunpack.c.l.s4 1983009808
    %v3256 = vunpack.c.0.s8 %v3255
    %v3257 = vlaneseq
    %v3258 = vshrl.u32 %v3257, 7
    %v3259 = vsub.s32 %v3256, %v3258
    %v3260 = vrot.slane %v3246, %v3259
    %v3261 = vcombine.high %v3253, 0.0
    %v3263 = vunpack.c.l.s4 1934713408
    %v3264 = vunpack.c.0.s8 %v3263
    %v3265 = vlaneseq
    %v3266 = vshrl.u32 %v3265, 7
    %v3267 = vsub.s32 %v3264, %v3266
    %v3268 = vrot.slane %v3253, %v3267
    %v3270 = vunpack.c.l.s4 1934713408
    %v3271 = vunpack.c.0.s8 %v3270
    %v3272 = vlaneseq
    %v3273 = vshrl.u32 %v3272, 7
    %v3274 = vsub.s32 %v3271, %v3273
    %v3275 = vrot.slane %v3261, %v3274
    %v3276 = vcombine.high %v3260, 0.0
    %v3278 = vunpack.c.l.s4 1934713408
    %v3279 = vunpack.c.0.s8 %v3278
    %v3280 = vlaneseq
    %v3281 = vshrl.u32 %v3280, 7
    %v3282 = vsub.s32 %v3279, %v3281
    %v3283 = vrot.slane %v3260, %v3282
    %v3285 = vunpack.c.l.s4 1934713408
    %v3286 = vunpack.c.0.s8 %v3285
    %v3287 = vlaneseq
    %v3288 = vshrl.u32 %v3287, 7
    %v3289 = vsub.s32 %v3286, %v3288
    %v3290 = vrot.slane %v3276, %v3289
    %v3291 = vcombine.high %v3268, 0.0
    %v3292 = vcombine.high %v3275, 0.0
    %v3293 = vcombine.high %v3283, 0.0
    %v3294 = vcombine.high %v3290, 0.0
    %v3295 = vcombine.high %v1547, 0.0
    %v3297 = vunpack.c.l.s4 1983009808
    %v3298 = vunpack.c.0.s8 %v3297
    %v3299 = vlaneseq
    %v3300 = vshrl.u32 %v3299, 7
    %v3301 = vsub.s32 %v3298, %v3300
    %v3302 = vrot.slane %v1547, %v3301
    %v3304 = vunpack.c.l.s4 1983009808
    %v3305 = vunpack.c.0.s8 %v3304
    %v3306 = vlaneseq
    %v3307 = vshrl.u32 %v3306, 7
    %v3308 = vsub.s32 %v3305, %v3307
    %v3309 = vrot.slane %v3295, %v3308
    %v3310 = vcombine.high %v3302, 0.0
    %v3312 = vunpack.c.l.s4 1934713408
    %v3313 = vunpack.c.0.s8 %v3312
    %v3314 = vlaneseq
    %v3315 = vshrl.u32 %v3314, 7
    %v3316 = vsub.s32 %v3313, %v3315
    %v3317 = vrot.slane %v3302, %v3316
    %v3319 = vunpack.c.l.s4 1934713408
    %v3320 = vunpack.c.0.s8 %v3319
    %v3321 = vlaneseq
    %v3322 = vshrl.u32 %v3321, 7
    %v3323 = vsub.s32 %v3320, %v3322
    %v3324 = vrot.slane %v3310, %v3323
    %v3325 = vcombine.high %v3309, 0.0
    %v3327 = vunpack.c.l.s4 1934713408
    %v3328 = vunpack.c.0.s8 %v3327
    %v3329 = vlaneseq
    %v3330 = vshrl.u32 %v3329, 7
    %v3331 = vsub.s32 %v3328, %v3330
    %v3332 = vrot.slane %v3309, %v3331
    %v3334 = vunpack.c.l.s4 1934713408
    %v3335 = vunpack.c.0.s8 %v3334
    %v3336 = vlaneseq
    %v3337 = vshrl.u32 %v3336, 7
    %v3338 = vsub.s32 %v3335, %v3337
    %v3339 = vrot.slane %v3325, %v3338
    %v3340 = vcombine.high %v3317, 0.0
    %v3341 = vcombine.high %v3324, 0.0
    %v3342 = vcombine.high %v3332, 0.0
    %v3343 = vcombine.high %v3339, 0.0
    %v3344 = vcombine.high %v1548, 0.0
    %v3346 = vunpack.c.l.s4 1983009808
    %v3347 = vunpack.c.0.s8 %v3346
    %v3348 = vlaneseq
    %v3349 = vshrl.u32 %v3348, 7
    %v3350 = vsub.s32 %v3347, %v3349
    %v3351 = vrot.slane %v1548, %v3350
    %v3353 = vunpack.c.l.s4 1983009808
    %v3354 = vunpack.c.0.s8 %v3353
    %v3355 = vlaneseq
    %v3356 = vshrl.u32 %v3355, 7
    %v3357 = vsub.s32 %v3354, %v3356
    %v3358 = vrot.slane %v3344, %v3357
    %v3359 = vcombine.high %v3351, 0.0
    %v3361 = vunpack.c.l.s4 1934713408
    %v3362 = vunpack.c.0.s8 %v3361
    %v3363 = vlaneseq
    %v3364 = vshrl.u32 %v3363, 7
    %v3365 = vsub.s32 %v3362, %v3364
    %v3366 = vrot.slane %v3351, %v3365
    %v3368 = vunpack.c.l.s4 1934713408
    %v3369 = vunpack.c.0.s8 %v3368
    %v3370 = vlaneseq
    %v3371 = vshrl.u32 %v3370, 7
    %v3372 = vsub.s32 %v3369, %v3371
    %v3373 = vrot.slane %v3359, %v3372
    %v3374 = vcombine.high %v3358, 0.0
    %v3376 = vunpack.c.l.s4 1934713408
    %v3377 = vunpack.c.0.s8 %v3376
    %v3378 = vlaneseq
    %v3379 = vshrl.u32 %v3378, 7
    %v3380 = vsub.s32 %v3377, %v3379
    %v3381 = vrot.slane %v3358, %v3380
    %v3383 = vunpack.c.l.s4 1934713408
    %v3384 = vunpack.c.0.s8 %v3383
    %v3385 = vlaneseq
    %v3386 = vshrl.u32 %v3385, 7
    %v3387 = vsub.s32 %v3384, %v3386
    %v3388 = vrot.slane %v3374, %v3387
    %v3389 = vcombine.high %v3366, 0.0
    %v3390 = vcombine.high %v3373, 0.0
    %v3391 = vcombine.high %v3381, 0.0
    %v3392 = vcombine.high %v3388, 0.0
    %3395 = vrot.lane.b32.xlu0 %v3046, 2
    %v3396 = vpop.permute.xlu0 %3395
    %3397 = vrot.lane.b32.xlu0 %v3242, 2
    %v3398 = vpop.permute.xlu0 %3397
    %3403 = vrot.lane.b32.xlu0 %v3030, 4
    %v3404 = vpop.permute.xlu0 %3403
    %3405 = vrot.lane.b32.xlu0 %v3226, 4
    %v3406 = vpop.permute.xlu0 %3405
    %3411 = vrot.lane.b32.xlu0 %v3047, 6
    %v3412 = vpop.permute.xlu0 %3411
    %3413 = vrot.lane.b32.xlu0 %v3243, 6
    %v3414 = vpop.permute.xlu0 %3413
    %3419 = vrot.lane.b32.xlu0 %v3038, 8
    %v3420 = vpop.permute.xlu0 %3419
    %3421 = vrot.lane.b32.xlu0 %v3234, 8
    %v3422 = vpop.permute.xlu0 %3421
    %3427 = vrot.lane.b32.xlu0 %v3048, 10
    %v3428 = vpop.permute.xlu0 %3427
    %3429 = vrot.lane.b32.xlu0 %v3244, 10
    %v3430 = vpop.permute.xlu0 %3429
    %3435 = vrot.lane.b32.xlu0 %v3045, 12
    %v3436 = vpop.permute.xlu0 %3435
    %3437 = vrot.lane.b32.xlu0 %v3241, 12
    %v3438 = vpop.permute.xlu0 %3437
    %3443 = vrot.lane.b32.xlu0 %v3049, 14
    %v3444 = vpop.permute.xlu0 %3443
    %3445 = vrot.lane.b32.xlu0 %v3245, 14
    %v3446 = vpop.permute.xlu0 %3445
    %3451 = vrot.lane.b32.xlu0 %v3072, 16
    %v3452 = vpop.permute.xlu0 %3451
    %3453 = vrot.lane.b32.xlu0 %v3268, 16
    %v3454 = vpop.permute.xlu0 %3453
    %3459 = vrot.lane.b32.xlu0 %v3095, 18
    %v3460 = vpop.permute.xlu0 %3459
    %3461 = vrot.lane.b32.xlu0 %v3291, 18
    %v3462 = vpop.permute.xlu0 %3461
    %3467 = vrot.lane.b32.xlu0 %v3079, 20
    %v3468 = vpop.permute.xlu0 %3467
    %3469 = vrot.lane.b32.xlu0 %v3275, 20
    %v3470 = vpop.permute.xlu0 %3469
    %3475 = vrot.lane.b32.xlu0 %v3096, 22
    %v3476 = vpop.permute.xlu0 %3475
    %3477 = vrot.lane.b32.xlu0 %v3292, 22
    %v3478 = vpop.permute.xlu0 %3477
    %3483 = vrot.lane.b32.xlu0 %v3087, 24
    %v3484 = vpop.permute.xlu0 %3483
    %3485 = vrot.lane.b32.xlu0 %v3283, 24
    %v3486 = vpop.permute.xlu0 %3485
    %3491 = vrot.lane.b32.xlu0 %v3097, 26
    %v3492 = vpop.permute.xlu0 %3491
    %3493 = vrot.lane.b32.xlu0 %v3293, 26
    %v3494 = vpop.permute.xlu0 %3493
    %3499 = vrot.lane.b32.xlu0 %v3094, 28
    %v3500 = vpop.permute.xlu0 %3499
    %3501 = vrot.lane.b32.xlu0 %v3290, 28
    %v3502 = vpop.permute.xlu0 %3501
    %3507 = vrot.lane.b32.xlu0 %v3098, 30
    %v3508 = vpop.permute.xlu0 %3507
    %3509 = vrot.lane.b32.xlu0 %v3294, 30
    %v3510 = vpop.permute.xlu0 %3509
    %3515 = vrot.lane.b32.xlu0 %v3121, 32
    %v3516 = vpop.permute.xlu0 %3515
    %3517 = vrot.lane.b32.xlu0 %v3317, 32
    %v3518 = vpop.permute.xlu0 %3517
    %3523 = vrot.lane.b32.xlu0 %v3144, 34
    %v3524 = vpop.permute.xlu0 %3523
    %3525 = vrot.lane.b32.xlu0 %v3340, 34
    %v3526 = vpop.permute.xlu0 %3525
    %3531 = vrot.lane.b32.xlu0 %v3128, 36
    %v3532 = vpop.permute.xlu0 %3531
    %3533 = vrot.lane.b32.xlu0 %v3324, 36
    %v3534 = vpop.permute.xlu0 %3533
    %3539 = vrot.lane.b32.xlu0 %v3145, 38
    %v3540 = vpop.permute.xlu0 %3539
    %3541 = vrot.lane.b32.xlu0 %v3341, 38
    %v3542 = vpop.permute.xlu0 %3541
    %3547 = vrot.lane.b32.xlu0 %v3136, 40
    %v3548 = vpop.permute.xlu0 %3547
    %3549 = vrot.lane.b32.xlu0 %v3332, 40
    %v3550 = vpop.permute.xlu0 %3549
    %3555 = vrot.lane.b32.xlu0 %v3146, 42
    %v3556 = vpop.permute.xlu0 %3555
    %3557 = vrot.lane.b32.xlu0 %v3342, 42
    %v3558 = vpop.permute.xlu0 %3557
    %3563 = vrot.lane.b32.xlu0 %v3143, 44
    %v3564 = vpop.permute.xlu0 %3563
    %3565 = vrot.lane.b32.xlu0 %v3339, 44
    %v3566 = vpop.permute.xlu0 %3565
    %3571 = vrot.lane.b32.xlu0 %v3147, 46
    %v3572 = vpop.permute.xlu0 %3571
    %3573 = vrot.lane.b32.xlu0 %v3343, 46
    %v3574 = vpop.permute.xlu0 %3573
    %3579 = vrot.lane.b32.xlu0 %v3170, 48
    %v3580 = vpop.permute.xlu0 %3579
    %3581 = vrot.lane.b32.xlu0 %v3366, 48
    %v3582 = vpop.permute.xlu0 %3581
    %3587 = vrot.lane.b32.xlu0 %v3193, 50
    %v3588 = vpop.permute.xlu0 %3587
    %3589 = vrot.lane.b32.xlu0 %v3389, 50
    %v3590 = vpop.permute.xlu0 %3589
    %3595 = vrot.lane.b32.xlu0 %v3177, 52
    %v3596 = vpop.permute.xlu0 %3595
    %3597 = vrot.lane.b32.xlu0 %v3373, 52
    %v3598 = vpop.permute.xlu0 %3597
    %3603 = vrot.lane.b32.xlu0 %v3194, 54
    %v3604 = vpop.permute.xlu0 %3603
    %3605 = vrot.lane.b32.xlu0 %v3390, 54
    %v3606 = vpop.permute.xlu0 %3605
    %3611 = vrot.lane.b32.xlu0 %v3185, 56
    %v3612 = vpop.permute.xlu0 %3611
    %3613 = vrot.lane.b32.xlu0 %v3381, 56
    %v3614 = vpop.permute.xlu0 %3613
    %3619 = vrot.lane.b32.xlu0 %v3195, 58
    %v3620 = vpop.permute.xlu0 %3619
    %3621 = vrot.lane.b32.xlu0 %v3391, 58
    %v3622 = vpop.permute.xlu0 %3621
    %3627 = vrot.lane.b32.xlu0 %v3192, 60
    %v3628 = vpop.permute.xlu0 %3627
    %3629 = vrot.lane.b32.xlu0 %v3388, 60
    %v3630 = vpop.permute.xlu0 %3629
    %3635 = vrot.lane.b32.xlu0 %v3196, 62
    %v3636 = vpop.permute.xlu0 %3635
    %3637 = vrot.lane.b32.xlu0 %v3392, 62
    %v3638 = vpop.permute.xlu0 %3637
    %v3641 = vsel %vm1515, %v3023, %v3396
    %v3642 = vsel %vm1515, %v3219, %v3398
    %v3643 = vsel %vm2792, %v3641, %v3404
    %v3644 = vsel %vm2792, %v3642, %v3406
    %v3645 = vsel %vm2795, %v3643, %v3412
    %v3646 = vsel %vm2795, %v3644, %v3414
    %v3647 = vsel %vm2798, %v3645, %v3420
    %v3648 = vsel %vm2798, %v3646, %v3422
    %v3649 = vsel %vm2801, %v3647, %v3428
    %v3650 = vsel %vm2801, %v3648, %v3430
    %v3651 = vsel %vm2804, %v3649, %v3436
    %v3652 = vsel %vm2804, %v3650, %v3438
    %v3653 = vsel %vm2807, %v3651, %v3444
    %v3654 = vsel %vm2807, %v3652, %v3446
    %v3655 = vsel %vm2810, %v3653, %v3452
    %v3656 = vsel %vm2810, %v3654, %v3454
    %v3657 = vsel %vm2813, %v3655, %v3460
    %v3658 = vsel %vm2813, %v3656, %v3462
    %v3659 = vsel %vm2816, %v3657, %v3468
    %v3660 = vsel %vm2816, %v3658, %v3470
    %v3661 = vsel %vm2819, %v3659, %v3476
    %v3662 = vsel %vm2819, %v3660, %v3478
    %v3663 = vsel %vm2822, %v3661, %v3484
    %v3664 = vsel %vm2822, %v3662, %v3486
    %v3665 = vsel %vm2825, %v3663, %v3492
    %v3666 = vsel %vm2825, %v3664, %v3494
    %v3667 = vsel %vm2828, %v3665, %v3500
    %v3668 = vsel %vm2828, %v3666, %v3502
    %v3669 = vsel %vm2831, %v3667, %v3508
    %v3670 = vsel %vm2831, %v3668, %v3510
    %v3671 = vsel %vm2834, %v3669, %v3516
    %v3672 = vsel %vm2834, %v3670, %v3518
    %v3673 = vsel %vm2837, %v3671, %v3524
    %v3674 = vsel %vm2837, %v3672, %v3526
    %v3675 = vsel %vm2840, %v3673, %v3532
    %v3676 = vsel %vm2840, %v3674, %v3534
    %v3677 = vsel %vm2843, %v3675, %v3540
    %v3678 = vsel %vm2843, %v3676, %v3542
    %v3679 = vsel %vm2846, %v3677, %v3548
    %v3680 = vsel %vm2846, %v3678, %v3550
    %v3681 = vsel %vm2849, %v3679, %v3556
    %v3682 = vsel %vm2849, %v3680, %v3558
    %v3683 = vsel %vm2852, %v3681, %v3564
    %v3684 = vsel %vm2852, %v3682, %v3566
    %v3685 = vsel %vm2855, %v3683, %v3572
    %v3686 = vsel %vm2855, %v3684, %v3574
    %v3687 = vsel %vm2858, %v3685, %v3580
    %v3688 = vsel %vm2858, %v3686, %v3582
    %v3689 = vsel %vm2861, %v3687, %v3588
    %v3690 = vsel %vm2861, %v3688, %v3590
    %v3691 = vsel %vm2864, %v3689, %v3596
    %v3692 = vsel %vm2864, %v3690, %v3598
    %v3693 = vsel %vm2867, %v3691, %v3604
    %v3694 = vsel %vm2867, %v3692, %v3606
    %v3695 = vsel %vm2870, %v3693, %v3612
    %v3696 = vsel %vm2870, %v3694, %v3614
    %v3697 = vsel %vm2873, %v3695, %v3620
    %v3698 = vsel %vm2873, %v3696, %v3622
    %v3699 = vsel %vm2876, %v3697, %v3628
    %v3700 = vsel %vm2876, %v3698, %v3630
    %v3701 = vsel %vm2879, %v3699, %v3636
    %v3702 = vsel %vm2879, %v3700, %v3638
    %v3703 = vlaneseq
    %v3704 = vshrl.u32 %v3703, 7
    %v3705 = vsub.s32 0, %v3704
    %v3706 = vrot.slane %v3701, %v3705
    %v3707 = vlaneseq
    %v3708 = vshrl.u32 %v3707, 7
    %v3709 = vsub.s32 0, %v3708
    %v3710 = vrot.slane %v3702, %v3709
    %v3711 = vcombine.high %v3706, 0.0
    %v3713 = vunpack.c.l.s4 1983009808
    %v3714 = vunpack.c.0.s8 %v3713
    %v3715 = vlaneseq
    %v3716 = vshrl.u32 %v3715, 7
    %v3717 = vsub.s32 %v3714, %v3716
    %v3718 = vrot.slane %v3706, %v3717
    %v3720 = vunpack.c.l.s4 1983009808
    %v3721 = vunpack.c.0.s8 %v3720
    %v3722 = vlaneseq
    %v3723 = vshrl.u32 %v3722, 7
    %v3724 = vsub.s32 %v3721, %v3723
    %v3725 = vrot.slane %v3711, %v3724
    %v3726 = vcombine.high %v3710, 0.0
    %v3728 = vunpack.c.l.s4 1983009808
    %v3729 = vunpack.c.0.s8 %v3728
    %v3730 = vlaneseq
    %v3731 = vshrl.u32 %v3730, 7
    %v3732 = vsub.s32 %v3729, %v3731
    %v3733 = vrot.slane %v3710, %v3732
    %v3735 = vunpack.c.l.s4 1983009808
    %v3736 = vunpack.c.0.s8 %v3735
    %v3737 = vlaneseq
    %v3738 = vshrl.u32 %v3737, 7
    %v3739 = vsub.s32 %v3736, %v3738
    %v3740 = vrot.slane %v3726, %v3739
    %v3741 = vcombine.low %v3718, %v3733
    %v3742 = vcombine.high %v3718, %v3733
    %v3744 = vunpack.c.l.s4 1934713408
    %v3745 = vunpack.c.0.s8 %v3744
    %v3746 = vlaneseq
    %v3747 = vshrl.u32 %v3746, 7
    %v3748 = vsub.s32 %v3745, %v3747
    %v3749 = vrot.slane %v3741, %v3748
    %v3751 = vunpack.c.l.s4 1934713408
    %v3752 = vunpack.c.0.s8 %v3751
    %v3753 = vlaneseq
    %v3754 = vshrl.u32 %v3753, 7
    %v3755 = vsub.s32 %v3752, %v3754
    %v3756 = vrot.slane %v3742, %v3755
    %v3757 = vcombine.low %v3725, %v3740
    %v3758 = vcombine.high %v3725, %v3740
    %v3760 = vunpack.c.l.s4 1934713408
    %v3761 = vunpack.c.0.s8 %v3760
    %v3762 = vlaneseq
    %v3763 = vshrl.u32 %v3762, 7
    %v3764 = vsub.s32 %v3761, %v3763
    %v3765 = vrot.slane %v3757, %v3764
    %v3767 = vunpack.c.l.s4 1934713408
    %v3768 = vunpack.c.0.s8 %v3767
    %v3769 = vlaneseq
    %v3770 = vshrl.u32 %v3769, 7
    %v3771 = vsub.s32 %v3768, %v3770
    %v3772 = vrot.slane %v3758, %v3771
    %v3773 = vcombine.high %v3749, 0.0
    %v3774 = vcombine.high %v3756, 0.0
    %v3775 = vcombine.high %v3765, 0.0
    %v3776 = vcombine.high %v3772, 0.0
    %3778 = vrot.lane.b32.xlu0 %v3773, 64
    %v3779 = vpop.permute.xlu0 %3778
    %3782 = vrot.lane.b32.xlu0 %v3774, 64
    %v3783 = vpop.permute.xlu0 %3782
    %3786 = vrot.lane.b32.xlu0 %v3775, 64
    %v3787 = vpop.permute.xlu0 %3786
    %3790 = vrot.lane.b32.xlu0 %v3776, 64
    %v3791 = vpop.permute.xlu0 %3790
    %v3793 = vsel %vm1078, %v3749, %v3779
    %v3794 = vsel %vm1078, %v3756, %v3783
    %v3795 = vsel %vm1078, %v3765, %v3787
    %v3796 = vsel %vm1078, %v3772, %v3791
    %v3797 = vmul.f32 %v3793, %v2997
    %v3798 = vmul.f32 %v3794, %v2998
    %v3799 = vmul.f32 %v3795, %v2999
    %v3800 = vmul.f32 %v3796, %v3000
    %v3802 = vlaneseq
    %v3803 = vshrl.u32 %v3802, 7
    %v3804 = vsub.s32 0, %v3803
    %v3805 = vrot.slane %v2149, %v3804
    %v3806 = vlaneseq
    %v3807 = vshrl.u32 %v3806, 7
    %v3808 = vsub.s32 1, %v3807
    %v3809 = vrot.slane %v2149, %v3808
    %v3810 = vlaneseq
    %v3811 = vshrl.u32 %v3810, 7
    %v3812 = vsub.s32 2, %v3811
    %v3813 = vrot.slane %v2149, %v3812
    %v3814 = vlaneseq
    %v3815 = vshrl.u32 %v3814, 7
    %v3816 = vsub.s32 3, %v3815
    %v3817 = vrot.slane %v2149, %v3816
    %v3822 = vsub.f32 %v3805, %v3797
    %v3823 = vsub.f32 %v3809, %v3798
    %v3824 = vsub.f32 %v3813, %v3799
    %v3825 = vsub.f32 %v3817, %v3800
    %v3830 = vcombine.low %v2997, %v2998
    %v3831 = vcombine.low %v2999, %v3000
    %v3833 = vunpack.c.l.s4 1966171168
    %v3834 = vunpack.c.0.s8 %v3833
    %v3835 = vlaneseq
    %v3836 = vshrl.u32 %v3835, 7
    %v3837 = vsub.s32 %v3834, %v3836
    %v3838 = vrot.slane %v3830, %v3837
    %v3840 = vunpack.c.l.s4 1966171168
    %v3841 = vunpack.c.0.s8 %v3840
    %v3842 = vlaneseq
    %v3843 = vshrl.u32 %v3842, 7
    %v3844 = vsub.s32 %v3841, %v3843
    %v3845 = vrot.slane %v3831, %v3844
    %v3846 = vcombine.low %v3838, %v3845
    %v3847 = vcombine.high %v3838, %v3845
    %v3849 = vunpack.c.l.s4 1966171168
    %v3850 = vunpack.c.0.s8 %v3849
    %v3851 = vlaneseq
    %v3852 = vshrl.u32 %v3851, 7
    %v3853 = vsub.s32 %v3850, %v3852
    %v3854 = vrot.slane %v3846, %v3853
    %v3856 = vunpack.c.l.s4 1966171168
    %v3857 = vunpack.c.0.s8 %v3856
    %v3858 = vlaneseq
    %v3859 = vshrl.u32 %v3858, 7
    %v3860 = vsub.s32 %v3857, %v3859
    %v3861 = vrot.slane %v3847, %v3860
    %v3862 = vlaneseq
    %v3863 = vshrl.u32 %v3862, 7
    %v3864 = vsub.s32 0, %v3863
    %v3865 = vrot.slane %v3854, %v3864
    %v3866 = vlaneseq
    %v3867 = vshrl.u32 %v3866, 7
    %v3868 = vsub.s32 1, %v3867
    %v3869 = vrot.slane %v3854, %v3868
    %v3870 = vlaneseq
    %v3871 = vshrl.u32 %v3870, 7
    %v3872 = vsub.s32 2, %v3871
    %v3873 = vrot.slane %v3854, %v3872
    %v3874 = vlaneseq
    %v3875 = vshrl.u32 %v3874, 7
    %v3876 = vsub.s32 3, %v3875
    %v3877 = vrot.slane %v3854, %v3876
    %v3878 = vlaneseq
    %v3879 = vshrl.u32 %v3878, 7
    %v3880 = vsub.s32 0, %v3879
    %v3881 = vrot.slane %v3861, %v3880
    %v3882 = vlaneseq
    %v3883 = vshrl.u32 %v3882, 7
    %v3884 = vsub.s32 1, %v3883
    %v3885 = vrot.slane %v3861, %v3884
    %v3886 = vlaneseq
    %v3887 = vshrl.u32 %v3886, 7
    %v3888 = vsub.s32 2, %v3887
    %v3889 = vrot.slane %v3861, %v3888
    %v3890 = vlaneseq
    %v3891 = vshrl.u32 %v3890, 7
    %v3892 = vsub.s32 3, %v3891
    %v3893 = vrot.slane %v3861, %v3892
    %v3902 = vmul.f32 %v781, %v3865
    %v3903 = vmul.f32 %v783, %v3869
    %v3904 = vmul.f32 %v867, %v3873
    %v3905 = vmul.f32 %v869, %v3877
    %v3906 = vmul.f32 %v785, %v3881
    %v3907 = vmul.f32 %v787, %v3885
    %v3908 = vmul.f32 %v871, %v3889
    %v3909 = vmul.f32 %v873, %v3893
    %v3914 = vcombine.low %v3822, %v3823
    %v3915 = vcombine.low %v3824, %v3825
    %v3917 = vunpack.c.l.s4 1966171168
    %v3918 = vunpack.c.0.s8 %v3917
    %v3919 = vlaneseq
    %v3920 = vshrl.u32 %v3919, 7
    %v3921 = vsub.s32 %v3918, %v3920
    %v3922 = vrot.slane %v3914, %v3921
    %v3924 = vunpack.c.l.s4 1966171168
    %v3925 = vunpack.c.0.s8 %v3924
    %v3926 = vlaneseq
    %v3927 = vshrl.u32 %v3926, 7
    %v3928 = vsub.s32 %v3925, %v3927
    %v3929 = vrot.slane %v3915, %v3928
    %v3930 = vcombine.low %v3922, %v3929
    %v3931 = vcombine.high %v3922, %v3929
    %v3933 = vunpack.c.l.s4 1966171168
    %v3934 = vunpack.c.0.s8 %v3933
    %v3935 = vlaneseq
    %v3936 = vshrl.u32 %v3935, 7
    %v3937 = vsub.s32 %v3934, %v3936
    %v3938 = vrot.slane %v3930, %v3937
    %v3940 = vunpack.c.l.s4 1966171168
    %v3941 = vunpack.c.0.s8 %v3940
    %v3942 = vlaneseq
    %v3943 = vshrl.u32 %v3942, 7
    %v3944 = vsub.s32 %v3941, %v3943
    %v3945 = vrot.slane %v3931, %v3944
    %v3946 = vlaneseq
    %v3947 = vshrl.u32 %v3946, 7
    %v3948 = vsub.s32 0, %v3947
    %v3949 = vrot.slane %v3938, %v3948
    %v3950 = vlaneseq
    %v3951 = vshrl.u32 %v3950, 7
    %v3952 = vsub.s32 1, %v3951
    %v3953 = vrot.slane %v3938, %v3952
    %v3954 = vlaneseq
    %v3955 = vshrl.u32 %v3954, 7
    %v3956 = vsub.s32 2, %v3955
    %v3957 = vrot.slane %v3938, %v3956
    %v3958 = vlaneseq
    %v3959 = vshrl.u32 %v3958, 7
    %v3960 = vsub.s32 3, %v3959
    %v3961 = vrot.slane %v3938, %v3960
    %v3962 = vlaneseq
    %v3963 = vshrl.u32 %v3962, 7
    %v3964 = vsub.s32 0, %v3963
    %v3965 = vrot.slane %v3945, %v3964
    %v3966 = vlaneseq
    %v3967 = vshrl.u32 %v3966, 7
    %v3968 = vsub.s32 1, %v3967
    %v3969 = vrot.slane %v3945, %v3968
    %v3970 = vlaneseq
    %v3971 = vshrl.u32 %v3970, 7
    %v3972 = vsub.s32 2, %v3971
    %v3973 = vrot.slane %v3945, %v3972
    %v3974 = vlaneseq
    %v3975 = vshrl.u32 %v3974, 7
    %v3976 = vsub.s32 3, %v3975
    %v3977 = vrot.slane %v3945, %v3976
    %v3986 = vadd.f32 %v3902, %v3949
    %v3987 = vadd.f32 %v3903, %v3953
    %v3988 = vadd.f32 %v3904, %v3957
    %v3989 = vadd.f32 %v3905, %v3961
    %v3990 = vadd.f32 %v3906, %v3965
    %v3991 = vadd.f32 %v3907, %v3969
    %v3992 = vadd.f32 %v3908, %v3973
    %v3993 = vadd.f32 %v3909, %v3977
    %v3994 = vmax.f32 %v3986, 0.0
    %v3995 = vmax.f32 %v3987, 0.0
    %v3996 = vmax.f32 %v3988, 0.0
    %v3997 = vmax.f32 %v3989, 0.0
    %v3998 = vmax.f32 %v3990, 0.0
    %v3999 = vmax.f32 %v3991, 0.0
    %v4000 = vmax.f32 %v3992, 0.0
    %v4001 = vmax.f32 %v3993, 0.0
    %v4002 = vpack.c.bf16 %v3998, %v3994
    %v4003 = vpack.c.bf16 %v3999, %v3995
    %v4004 = vpack.c.bf16 %v4000, %v3996
    %v4005 = vpack.c.bf16 %v4001, %v3997
    %v4006 = vld [vmem:[#allocation6] sm:$0xff]
    %v4007 = vld [vmem:[#allocation6 + $0x8] sm:$0xff]
    %v4008 = vld [vmem:[#allocation6 + $0x10] sm:$0xff]
    %v4009 = vld [vmem:[#allocation6 + $0x18] sm:$0xff]
    %v4010 = vld [vmem:[#allocation6 + $0x20] sm:$0xff]
    %v4011 = vld [vmem:[#allocation6 + $0x28] sm:$0xff]
    %v4012 = vld [vmem:[#allocation6 + $0x30] sm:$0xff]
    %v4013 = vld [vmem:[#allocation6 + $0x38] sm:$0xff]
    %v4014 = vld [vmem:[#allocation6 + $0x40] sm:$0xff]
    %v4015 = vld [vmem:[#allocation6 + $0x48] sm:$0xff]
    %v4016 = vld [vmem:[#allocation6 + $0x50] sm:$0xff]
    %v4017 = vld [vmem:[#allocation6 + $0x58] sm:$0xff]
    %v4018 = vld [vmem:[#allocation6 + $0x60] sm:$0xff]
    %v4019 = vld [vmem:[#allocation6 + $0x68] sm:$0xff]
    %v4020 = vld [vmem:[#allocation6 + $0x70] sm:$0xff]
    %v4021 = vld [vmem:[#allocation6 + $0x78] sm:$0xff]
    %v4022 = vld [vmem:[#allocation6 + $0x80] sm:$0xff]
    %v4023 = vld [vmem:[#allocation6 + $0x88] sm:$0xff]
    %v4024 = vld [vmem:[#allocation6 + $0x90] sm:$0xff]
    %v4025 = vld [vmem:[#allocation6 + $0x98] sm:$0xff]
    %v4026 = vld [vmem:[#allocation6 + $0xa0] sm:$0xff]
    %v4027 = vld [vmem:[#allocation6 + $0xa8] sm:$0xff]
    %v4028 = vld [vmem:[#allocation6 + $0xb0] sm:$0xff]
    %v4029 = vld [vmem:[#allocation6 + $0xb8] sm:$0xff]
    %v4030 = vld [vmem:[#allocation6 + $0xc0] sm:$0xff]
    %v4031 = vld [vmem:[#allocation6 + $0xc8] sm:$0xff]
    %v4032 = vld [vmem:[#allocation6 + $0xd0] sm:$0xff]
    %v4033 = vld [vmem:[#allocation6 + $0xd8] sm:$0xff]
    %v4034 = vld [vmem:[#allocation6 + $0xe0] sm:$0xff]
    %v4035 = vld [vmem:[#allocation6 + $0xe8] sm:$0xff]
    %v4036 = vld [vmem:[#allocation6 + $0xf0] sm:$0xff]
    %v4037 = vld [vmem:[#allocation6 + $0xf8] sm:$0xff]
    %v4038 = vld [vmem:[#allocation6 + $0x100] sm:$0xff]
    %v4039 = vld [vmem:[#allocation6 + $0x108] sm:$0xff]
    %v4040 = vld [vmem:[#allocation6 + $0x110] sm:$0xff]
    %v4041 = vld [vmem:[#allocation6 + $0x118] sm:$0xff]
    %v4042 = vld [vmem:[#allocation6 + $0x120] sm:$0xff]
    %v4043 = vld [vmem:[#allocation6 + $0x128] sm:$0xff]
    %v4044 = vld [vmem:[#allocation6 + $0x130] sm:$0xff]
    %v4045 = vld [vmem:[#allocation6 + $0x138] sm:$0xff]
    %v4046 = vld [vmem:[#allocation6 + $0x140] sm:$0xff]
    %v4047 = vld [vmem:[#allocation6 + $0x148] sm:$0xff]
    %v4048 = vld [vmem:[#allocation6 + $0x150] sm:$0xff]
    %v4049 = vld [vmem:[#allocation6 + $0x158] sm:$0xff]
    %v4050 = vld [vmem:[#allocation6 + $0x160] sm:$0xff]
    %v4051 = vld [vmem:[#allocation6 + $0x168] sm:$0xff]
    %v4052 = vld [vmem:[#allocation6 + $0x170] sm:$0xff]
    %v4053 = vld [vmem:[#allocation6 + $0x178] sm:$0xff]
    %v4054 = vld [vmem:[#allocation6 + $0x180] sm:$0xff]
    %v4055 = vld [vmem:[#allocation6 + $0x188] sm:$0xff]
    %v4056 = vld [vmem:[#allocation6 + $0x190] sm:$0xff]
    %v4057 = vld [vmem:[#allocation6 + $0x198] sm:$0xff]
    %v4058 = vld [vmem:[#allocation6 + $0x1a0] sm:$0xff]
    %v4059 = vld [vmem:[#allocation6 + $0x1a8] sm:$0xff]
    %v4060 = vld [vmem:[#allocation6 + $0x1b0] sm:$0xff]
    %v4061 = vld [vmem:[#allocation6 + $0x1b8] sm:$0xff]
    %v4062 = vld [vmem:[#allocation6 + $0x1c0] sm:$0xff]
    %v4063 = vld [vmem:[#allocation6 + $0x1c8] sm:$0xff]
    %v4064 = vld [vmem:[#allocation6 + $0x1d0] sm:$0xff]
    %v4065 = vld [vmem:[#allocation6 + $0x1d8] sm:$0xff]
    %v4066 = vld [vmem:[#allocation6 + $0x1e0] sm:$0xff]
    %v4067 = vld [vmem:[#allocation6 + $0x1e8] sm:$0xff]
    %v4068 = vld [vmem:[#allocation6 + $0x1f0] sm:$0xff]
    %v4069 = vld [vmem:[#allocation6 + $0x1f8] sm:$0xff]
    %v4070 = vld [vmem:[#allocation6 + $0x200] sm:$0xff]
    %v4071 = vld [vmem:[#allocation6 + $0x208] sm:$0xff]
    %v4072 = vld [vmem:[#allocation6 + $0x210] sm:$0xff]
    %v4073 = vld [vmem:[#allocation6 + $0x218] sm:$0xff]
    %v4074 = vld [vmem:[#allocation6 + $0x220] sm:$0xff]
    %v4075 = vld [vmem:[#allocation6 + $0x228] sm:$0xff]
    %v4076 = vld [vmem:[#allocation6 + $0x230] sm:$0xff]
    %v4077 = vld [vmem:[#allocation6 + $0x238] sm:$0xff]
    %v4078 = vld [vmem:[#allocation6 + $0x240] sm:$0xff]
    %v4079 = vld [vmem:[#allocation6 + $0x248] sm:$0xff]
    %v4080 = vld [vmem:[#allocation6 + $0x250] sm:$0xff]
    %v4081 = vld [vmem:[#allocation6 + $0x258] sm:$0xff]
    %v4082 = vld [vmem:[#allocation6 + $0x260] sm:$0xff]
    %v4083 = vld [vmem:[#allocation6 + $0x268] sm:$0xff]
    %v4084 = vld [vmem:[#allocation6 + $0x270] sm:$0xff]
    %v4085 = vld [vmem:[#allocation6 + $0x278] sm:$0xff]
    %v4086 = vld [vmem:[#allocation6 + $0x280] sm:$0xff]
    %v4087 = vld [vmem:[#allocation6 + $0x288] sm:$0xff]
    %v4088 = vld [vmem:[#allocation6 + $0x290] sm:$0xff]
    %v4089 = vld [vmem:[#allocation6 + $0x298] sm:$0xff]
    %v4090 = vld [vmem:[#allocation6 + $0x2a0] sm:$0xff]
    %v4091 = vld [vmem:[#allocation6 + $0x2a8] sm:$0xff]
    %v4092 = vld [vmem:[#allocation6 + $0x2b0] sm:$0xff]
    %v4093 = vld [vmem:[#allocation6 + $0x2b8] sm:$0xff]
    %v4094 = vld [vmem:[#allocation6 + $0x2c0] sm:$0xff]
    %v4095 = vld [vmem:[#allocation6 + $0x2c8] sm:$0xff]
    %v4096 = vld [vmem:[#allocation6 + $0x2d0] sm:$0xff]
    %v4097 = vld [vmem:[#allocation6 + $0x2d8] sm:$0xff]
    %v4098 = vld [vmem:[#allocation6 + $0x2e0] sm:$0xff]
    %v4099 = vld [vmem:[#allocation6 + $0x2e8] sm:$0xff]
    %v4100 = vld [vmem:[#allocation6 + $0x2f0] sm:$0xff]
    %v4101 = vld [vmem:[#allocation6 + $0x2f8] sm:$0xff]
    %v4102 = vld [vmem:[#allocation6 + $0x300] sm:$0xff]
    %v4103 = vld [vmem:[#allocation6 + $0x308] sm:$0xff]
    %v4104 = vld [vmem:[#allocation6 + $0x310] sm:$0xff]
    %v4105 = vld [vmem:[#allocation6 + $0x318] sm:$0xff]
    %v4106 = vld [vmem:[#allocation6 + $0x320] sm:$0xff]
    %v4107 = vld [vmem:[#allocation6 + $0x328] sm:$0xff]
    %v4108 = vld [vmem:[#allocation6 + $0x330] sm:$0xff]
    %v4109 = vld [vmem:[#allocation6 + $0x338] sm:$0xff]
    %v4110 = vld [vmem:[#allocation6 + $0x340] sm:$0xff]
    %v4111 = vld [vmem:[#allocation6 + $0x348] sm:$0xff]
    %v4112 = vld [vmem:[#allocation6 + $0x350] sm:$0xff]
    %v4113 = vld [vmem:[#allocation6 + $0x358] sm:$0xff]
    %v4114 = vld [vmem:[#allocation6 + $0x360] sm:$0xff]
    %v4115 = vld [vmem:[#allocation6 + $0x368] sm:$0xff]
    %v4116 = vld [vmem:[#allocation6 + $0x370] sm:$0xff]
    %v4117 = vld [vmem:[#allocation6 + $0x378] sm:$0xff]
    %v4118 = vld [vmem:[#allocation6 + $0x380] sm:$0xff]
    %v4119 = vld [vmem:[#allocation6 + $0x388] sm:$0xff]
    %v4120 = vld [vmem:[#allocation6 + $0x390] sm:$0xff]
    %v4121 = vld [vmem:[#allocation6 + $0x398] sm:$0xff]
    %v4122 = vld [vmem:[#allocation6 + $0x3a0] sm:$0xff]
    %v4123 = vld [vmem:[#allocation6 + $0x3a8] sm:$0xff]
    %v4124 = vld [vmem:[#allocation6 + $0x3b0] sm:$0xff]
    %v4125 = vld [vmem:[#allocation6 + $0x3b8] sm:$0xff]
    %v4126 = vld [vmem:[#allocation6 + $0x3c0] sm:$0xff]
    %v4127 = vld [vmem:[#allocation6 + $0x3c8] sm:$0xff]
    %v4128 = vld [vmem:[#allocation6 + $0x3d0] sm:$0xff]
    %v4129 = vld [vmem:[#allocation6 + $0x3d8] sm:$0xff]
    %v4130 = vld [vmem:[#allocation6 + $0x3e0] sm:$0xff]
    %v4131 = vld [vmem:[#allocation6 + $0x3e8] sm:$0xff]
    %v4132 = vld [vmem:[#allocation6 + $0x3f0] sm:$0xff]
    %v4133 = vld [vmem:[#allocation6 + $0x3f8] sm:$0xff]
    %v4134 = vld [vmem:[#allocation6 + $0x400] sm:$0xff]
    %v4135 = vld [vmem:[#allocation6 + $0x408] sm:$0xff]
    %v4136 = vld [vmem:[#allocation6 + $0x410] sm:$0xff]
    %v4137 = vld [vmem:[#allocation6 + $0x418] sm:$0xff]
    %v4138 = vld [vmem:[#allocation6 + $0x420] sm:$0xff]
    %v4139 = vld [vmem:[#allocation6 + $0x428] sm:$0xff]
    %v4140 = vld [vmem:[#allocation6 + $0x430] sm:$0xff]
    %v4141 = vld [vmem:[#allocation6 + $0x438] sm:$0xff]
    %v4142 = vld [vmem:[#allocation6 + $0x440] sm:$0xff]
    %v4143 = vld [vmem:[#allocation6 + $0x448] sm:$0xff]
    %v4144 = vld [vmem:[#allocation6 + $0x450] sm:$0xff]
    %v4145 = vld [vmem:[#allocation6 + $0x458] sm:$0xff]
    %v4146 = vld [vmem:[#allocation6 + $0x460] sm:$0xff]
    %v4147 = vld [vmem:[#allocation6 + $0x468] sm:$0xff]
    %v4148 = vld [vmem:[#allocation6 + $0x470] sm:$0xff]
    %v4149 = vld [vmem:[#allocation6 + $0x478] sm:$0xff]
    %v4150 = vld [vmem:[#allocation6 + $0x480] sm:$0xff]
    %v4151 = vld [vmem:[#allocation6 + $0x488] sm:$0xff]
    %v4152 = vld [vmem:[#allocation6 + $0x490] sm:$0xff]
    %v4153 = vld [vmem:[#allocation6 + $0x498] sm:$0xff]
    %v4154 = vld [vmem:[#allocation6 + $0x4a0] sm:$0xff]
    %v4155 = vld [vmem:[#allocation6 + $0x4a8] sm:$0xff]
    %v4156 = vld [vmem:[#allocation6 + $0x4b0] sm:$0xff]
    %v4157 = vld [vmem:[#allocation6 + $0x4b8] sm:$0xff]
    %v4158 = vld [vmem:[#allocation6 + $0x4c0] sm:$0xff]
    %v4159 = vld [vmem:[#allocation6 + $0x4c8] sm:$0xff]
    %v4160 = vld [vmem:[#allocation6 + $0x4d0] sm:$0xff]
    %v4161 = vld [vmem:[#allocation6 + $0x4d8] sm:$0xff]
    %v4162 = vld [vmem:[#allocation6 + $0x4e0] sm:$0xff]
    %v4163 = vld [vmem:[#allocation6 + $0x4e8] sm:$0xff]
    %v4164 = vld [vmem:[#allocation6 + $0x4f0] sm:$0xff]
    %v4165 = vld [vmem:[#allocation6 + $0x4f8] sm:$0xff]
    %v4166 = vld [vmem:[#allocation6 + $0x500] sm:$0xff]
    %v4167 = vld [vmem:[#allocation6 + $0x508] sm:$0xff]
    %v4168 = vld [vmem:[#allocation6 + $0x510] sm:$0xff]
    %v4169 = vld [vmem:[#allocation6 + $0x518] sm:$0xff]
    %v4170 = vld [vmem:[#allocation6 + $0x520] sm:$0xff]
    %v4171 = vld [vmem:[#allocation6 + $0x528] sm:$0xff]
    %v4172 = vld [vmem:[#allocation6 + $0x530] sm:$0xff]
    %v4173 = vld [vmem:[#allocation6 + $0x538] sm:$0xff]
    %v4174 = vld [vmem:[#allocation6 + $0x540] sm:$0xff]
    %v4175 = vld [vmem:[#allocation6 + $0x548] sm:$0xff]
    %v4176 = vld [vmem:[#allocation6 + $0x550] sm:$0xff]
    %v4177 = vld [vmem:[#allocation6 + $0x558] sm:$0xff]
    %v4178 = vld [vmem:[#allocation6 + $0x560] sm:$0xff]
    %v4179 = vld [vmem:[#allocation6 + $0x568] sm:$0xff]
    %v4180 = vld [vmem:[#allocation6 + $0x570] sm:$0xff]
    %v4181 = vld [vmem:[#allocation6 + $0x578] sm:$0xff]
    %v4182 = vld [vmem:[#allocation6 + $0x580] sm:$0xff]
    %v4183 = vld [vmem:[#allocation6 + $0x588] sm:$0xff]
    %v4184 = vld [vmem:[#allocation6 + $0x590] sm:$0xff]
    %v4185 = vld [vmem:[#allocation6 + $0x598] sm:$0xff]
    %v4186 = vld [vmem:[#allocation6 + $0x5a0] sm:$0xff]
    %v4187 = vld [vmem:[#allocation6 + $0x5a8] sm:$0xff]
    %v4188 = vld [vmem:[#allocation6 + $0x5b0] sm:$0xff]
    %v4189 = vld [vmem:[#allocation6 + $0x5b8] sm:$0xff]
    %v4190 = vld [vmem:[#allocation6 + $0x5c0] sm:$0xff]
    %v4191 = vld [vmem:[#allocation6 + $0x5c8] sm:$0xff]
    %v4192 = vld [vmem:[#allocation6 + $0x5d0] sm:$0xff]
    %v4193 = vld [vmem:[#allocation6 + $0x5d8] sm:$0xff]
    %v4194 = vld [vmem:[#allocation6 + $0x5e0] sm:$0xff]
    %v4195 = vld [vmem:[#allocation6 + $0x5e8] sm:$0xff]
    %v4196 = vld [vmem:[#allocation6 + $0x5f0] sm:$0xff]
    %v4197 = vld [vmem:[#allocation6 + $0x5f8] sm:$0xff]
    %v4198 = vld [vmem:[#allocation6 + $0x600] sm:$0xff]
    %v4199 = vld [vmem:[#allocation6 + $0x608] sm:$0xff]
    %v4200 = vld [vmem:[#allocation6 + $0x610] sm:$0xff]
    %v4201 = vld [vmem:[#allocation6 + $0x618] sm:$0xff]
    %v4202 = vld [vmem:[#allocation6 + $0x620] sm:$0xff]
    %v4203 = vld [vmem:[#allocation6 + $0x628] sm:$0xff]
    %v4204 = vld [vmem:[#allocation6 + $0x630] sm:$0xff]
    %v4205 = vld [vmem:[#allocation6 + $0x638] sm:$0xff]
    %v4206 = vld [vmem:[#allocation6 + $0x640] sm:$0xff]
    %v4207 = vld [vmem:[#allocation6 + $0x648] sm:$0xff]
    %v4208 = vld [vmem:[#allocation6 + $0x650] sm:$0xff]
    %v4209 = vld [vmem:[#allocation6 + $0x658] sm:$0xff]
    %v4210 = vld [vmem:[#allocation6 + $0x660] sm:$0xff]
    %v4211 = vld [vmem:[#allocation6 + $0x668] sm:$0xff]
    %v4212 = vld [vmem:[#allocation6 + $0x670] sm:$0xff]
    %v4213 = vld [vmem:[#allocation6 + $0x678] sm:$0xff]
    %v4214 = vld [vmem:[#allocation6 + $0x680] sm:$0xff]
    %v4215 = vld [vmem:[#allocation6 + $0x688] sm:$0xff]
    %v4216 = vld [vmem:[#allocation6 + $0x690] sm:$0xff]
    %v4217 = vld [vmem:[#allocation6 + $0x698] sm:$0xff]
    %v4218 = vld [vmem:[#allocation6 + $0x6a0] sm:$0xff]
    %v4219 = vld [vmem:[#allocation6 + $0x6a8] sm:$0xff]
    %v4220 = vld [vmem:[#allocation6 + $0x6b0] sm:$0xff]
    %v4221 = vld [vmem:[#allocation6 + $0x6b8] sm:$0xff]
    %v4222 = vld [vmem:[#allocation6 + $0x6c0] sm:$0xff]
    %v4223 = vld [vmem:[#allocation6 + $0x6c8] sm:$0xff]
    %v4224 = vld [vmem:[#allocation6 + $0x6d0] sm:$0xff]
    %v4225 = vld [vmem:[#allocation6 + $0x6d8] sm:$0xff]
    %v4226 = vld [vmem:[#allocation6 + $0x6e0] sm:$0xff]
    %v4227 = vld [vmem:[#allocation6 + $0x6e8] sm:$0xff]
    %v4228 = vld [vmem:[#allocation6 + $0x6f0] sm:$0xff]
    %v4229 = vld [vmem:[#allocation6 + $0x6f8] sm:$0xff]
    %v4230 = vld [vmem:[#allocation6 + $0x700] sm:$0xff]
    %v4231 = vld [vmem:[#allocation6 + $0x708] sm:$0xff]
    %v4232 = vld [vmem:[#allocation6 + $0x710] sm:$0xff]
    %v4233 = vld [vmem:[#allocation6 + $0x718] sm:$0xff]
    %v4234 = vld [vmem:[#allocation6 + $0x720] sm:$0xff]
    %v4235 = vld [vmem:[#allocation6 + $0x728] sm:$0xff]
    %v4236 = vld [vmem:[#allocation6 + $0x730] sm:$0xff]
    %v4237 = vld [vmem:[#allocation6 + $0x738] sm:$0xff]
    %v4238 = vld [vmem:[#allocation6 + $0x740] sm:$0xff]
    %v4239 = vld [vmem:[#allocation6 + $0x748] sm:$0xff]
    %v4240 = vld [vmem:[#allocation6 + $0x750] sm:$0xff]
    %v4241 = vld [vmem:[#allocation6 + $0x758] sm:$0xff]
    %v4242 = vld [vmem:[#allocation6 + $0x760] sm:$0xff]
    %v4243 = vld [vmem:[#allocation6 + $0x768] sm:$0xff]
    %v4244 = vld [vmem:[#allocation6 + $0x770] sm:$0xff]
    %v4245 = vld [vmem:[#allocation6 + $0x778] sm:$0xff]
    %v4246 = vld [vmem:[#allocation6 + $0x780] sm:$0xff]
    %v4247 = vld [vmem:[#allocation6 + $0x788] sm:$0xff]
    %v4248 = vld [vmem:[#allocation6 + $0x790] sm:$0xff]
    %v4249 = vld [vmem:[#allocation6 + $0x798] sm:$0xff]
    %v4250 = vld [vmem:[#allocation6 + $0x7a0] sm:$0xff]
    %v4251 = vld [vmem:[#allocation6 + $0x7a8] sm:$0xff]
    %v4252 = vld [vmem:[#allocation6 + $0x7b0] sm:$0xff]
    %v4253 = vld [vmem:[#allocation6 + $0x7b8] sm:$0xff]
    %v4254 = vld [vmem:[#allocation6 + $0x7c0] sm:$0xff]
    %v4255 = vld [vmem:[#allocation6 + $0x7c8] sm:$0xff]
    %v4256 = vld [vmem:[#allocation6 + $0x7d0] sm:$0xff]
    %v4257 = vld [vmem:[#allocation6 + $0x7d8] sm:$0xff]
    %v4258 = vld [vmem:[#allocation6 + $0x7e0] sm:$0xff]
    %v4259 = vld [vmem:[#allocation6 + $0x7e8] sm:$0xff]
    %v4260 = vld [vmem:[#allocation6 + $0x7f0] sm:$0xff]
    %v4261 = vld [vmem:[#allocation6 + $0x7f8] sm:$0xff]
    %v4518 = vunpack.c.l.b16 %v4006
    %v4519 = vunpack.c.h.b16 %v4006
    %v4520 = vunpack.c.l.b16 %v4007
    %v4521 = vunpack.c.h.b16 %v4007
    %v4522 = vunpack.c.l.b16 %v4008
    %v4523 = vunpack.c.h.b16 %v4008
    %v4524 = vunpack.c.l.b16 %v4009
    %v4525 = vunpack.c.h.b16 %v4009
    %v4526 = vunpack.c.l.b16 %v4010
    %v4527 = vunpack.c.h.b16 %v4010
    %v4528 = vunpack.c.l.b16 %v4011
    %v4529 = vunpack.c.h.b16 %v4011
    %v4530 = vunpack.c.l.b16 %v4012
    %v4531 = vunpack.c.h.b16 %v4012
    %v4532 = vunpack.c.l.b16 %v4013
    %v4533 = vunpack.c.h.b16 %v4013
    %v4534 = vunpack.c.l.b16 %v4014
    %v4535 = vunpack.c.h.b16 %v4014
    %v4536 = vunpack.c.l.b16 %v4015
    %v4537 = vunpack.c.h.b16 %v4015
    %v4538 = vunpack.c.l.b16 %v4016
    %v4539 = vunpack.c.h.b16 %v4016
    %v4540 = vunpack.c.l.b16 %v4017
    %v4541 = vunpack.c.h.b16 %v4017
    %v4542 = vunpack.c.l.b16 %v4018
    %v4543 = vunpack.c.h.b16 %v4018
    %v4544 = vunpack.c.l.b16 %v4019
    %v4545 = vunpack.c.h.b16 %v4019
    %v4546 = vunpack.c.l.b16 %v4020
    %v4547 = vunpack.c.h.b16 %v4020
    %v4548 = vunpack.c.l.b16 %v4021
    %v4549 = vunpack.c.h.b16 %v4021
    %v4550 = vunpack.c.l.b16 %v4022
    %v4551 = vunpack.c.h.b16 %v4022
    %v4552 = vunpack.c.l.b16 %v4023
    %v4553 = vunpack.c.h.b16 %v4023
    %v4554 = vunpack.c.l.b16 %v4024
    %v4555 = vunpack.c.h.b16 %v4024
    %v4556 = vunpack.c.l.b16 %v4025
    %v4557 = vunpack.c.h.b16 %v4025
    %v4558 = vunpack.c.l.b16 %v4026
    %v4559 = vunpack.c.h.b16 %v4026
    %v4560 = vunpack.c.l.b16 %v4027
    %v4561 = vunpack.c.h.b16 %v4027
    %v4562 = vunpack.c.l.b16 %v4028
    %v4563 = vunpack.c.h.b16 %v4028
    %v4564 = vunpack.c.l.b16 %v4029
    %v4565 = vunpack.c.h.b16 %v4029
    %v4566 = vunpack.c.l.b16 %v4030
    %v4567 = vunpack.c.h.b16 %v4030
    %v4568 = vunpack.c.l.b16 %v4031
    %v4569 = vunpack.c.h.b16 %v4031
    %v4570 = vunpack.c.l.b16 %v4032
    %v4571 = vunpack.c.h.b16 %v4032
    %v4572 = vunpack.c.l.b16 %v4033
    %v4573 = vunpack.c.h.b16 %v4033
    %v4574 = vunpack.c.l.b16 %v4034
    %v4575 = vunpack.c.h.b16 %v4034
    %v4576 = vunpack.c.l.b16 %v4035
    %v4577 = vunpack.c.h.b16 %v4035
    %v4578 = vunpack.c.l.b16 %v4036
    %v4579 = vunpack.c.h.b16 %v4036
    %v4580 = vunpack.c.l.b16 %v4037
    %v4581 = vunpack.c.h.b16 %v4037
    %v4582 = vunpack.c.l.b16 %v4038
    %v4583 = vunpack.c.h.b16 %v4038
    %v4584 = vunpack.c.l.b16 %v4039
    %v4585 = vunpack.c.h.b16 %v4039
    %v4586 = vunpack.c.l.b16 %v4040
    %v4587 = vunpack.c.h.b16 %v4040
    %v4588 = vunpack.c.l.b16 %v4041
    %v4589 = vunpack.c.h.b16 %v4041
    %v4590 = vunpack.c.l.b16 %v4042
    %v4591 = vunpack.c.h.b16 %v4042
    %v4592 = vunpack.c.l.b16 %v4043
    %v4593 = vunpack.c.h.b16 %v4043
    %v4594 = vunpack.c.l.b16 %v4044
    %v4595 = vunpack.c.h.b16 %v4044
    %v4596 = vunpack.c.l.b16 %v4045
    %v4597 = vunpack.c.h.b16 %v4045
    %v4598 = vunpack.c.l.b16 %v4046
    %v4599 = vunpack.c.h.b16 %v4046
    %v4600 = vunpack.c.l.b16 %v4047
    %v4601 = vunpack.c.h.b16 %v4047
    %v4602 = vunpack.c.l.b16 %v4048
    %v4603 = vunpack.c.h.b16 %v4048
    %v4604 = vunpack.c.l.b16 %v4049
    %v4605 = vunpack.c.h.b16 %v4049
    %v4606 = vunpack.c.l.b16 %v4050
    %v4607 = vunpack.c.h.b16 %v4050
    %v4608 = vunpack.c.l.b16 %v4051
    %v4609 = vunpack.c.h.b16 %v4051
    %v4610 = vunpack.c.l.b16 %v4052
    %v4611 = vunpack.c.h.b16 %v4052
    %v4612 = vunpack.c.l.b16 %v4053
    %v4613 = vunpack.c.h.b16 %v4053
    %v4614 = vunpack.c.l.b16 %v4054
    %v4615 = vunpack.c.h.b16 %v4054
    %v4616 = vunpack.c.l.b16 %v4055
    %v4617 = vunpack.c.h.b16 %v4055
    %v4618 = vunpack.c.l.b16 %v4056
    %v4619 = vunpack.c.h.b16 %v4056
    %v4620 = vunpack.c.l.b16 %v4057
    %v4621 = vunpack.c.h.b16 %v4057
    %v4622 = vunpack.c.l.b16 %v4058
    %v4623 = vunpack.c.h.b16 %v4058
    %v4624 = vunpack.c.l.b16 %v4059
    %v4625 = vunpack.c.h.b16 %v4059
    %v4626 = vunpack.c.l.b16 %v4060
    %v4627 = vunpack.c.h.b16 %v4060
    %v4628 = vunpack.c.l.b16 %v4061
    %v4629 = vunpack.c.h.b16 %v4061
    %v4630 = vunpack.c.l.b16 %v4062
    %v4631 = vunpack.c.h.b16 %v4062
    %v4632 = vunpack.c.l.b16 %v4063
    %v4633 = vunpack.c.h.b16 %v4063
    %v4634 = vunpack.c.l.b16 %v4064
    %v4635 = vunpack.c.h.b16 %v4064
    %v4636 = vunpack.c.l.b16 %v4065
    %v4637 = vunpack.c.h.b16 %v4065
    %v4638 = vunpack.c.l.b16 %v4066
    %v4639 = vunpack.c.h.b16 %v4066
    %v4640 = vunpack.c.l.b16 %v4067
    %v4641 = vunpack.c.h.b16 %v4067
    %v4642 = vunpack.c.l.b16 %v4068
    %v4643 = vunpack.c.h.b16 %v4068
    %v4644 = vunpack.c.l.b16 %v4069
    %v4645 = vunpack.c.h.b16 %v4069
    %v4646 = vunpack.c.l.b16 %v4070
    %v4647 = vunpack.c.h.b16 %v4070
    %v4648 = vunpack.c.l.b16 %v4071
    %v4649 = vunpack.c.h.b16 %v4071
    %v4650 = vunpack.c.l.b16 %v4072
    %v4651 = vunpack.c.h.b16 %v4072
    %v4652 = vunpack.c.l.b16 %v4073
    %v4653 = vunpack.c.h.b16 %v4073
    %v4654 = vunpack.c.l.b16 %v4074
    %v4655 = vunpack.c.h.b16 %v4074
    %v4656 = vunpack.c.l.b16 %v4075
    %v4657 = vunpack.c.h.b16 %v4075
    %v4658 = vunpack.c.l.b16 %v4076
    %v4659 = vunpack.c.h.b16 %v4076
    %v4660 = vunpack.c.l.b16 %v4077
    %v4661 = vunpack.c.h.b16 %v4077
    %v4662 = vunpack.c.l.b16 %v4078
    %v4663 = vunpack.c.h.b16 %v4078
    %v4664 = vunpack.c.l.b16 %v4079
    %v4665 = vunpack.c.h.b16 %v4079
    %v4666 = vunpack.c.l.b16 %v4080
    %v4667 = vunpack.c.h.b16 %v4080
    %v4668 = vunpack.c.l.b16 %v4081
    %v4669 = vunpack.c.h.b16 %v4081
    %v4670 = vunpack.c.l.b16 %v4082
    %v4671 = vunpack.c.h.b16 %v4082
    %v4672 = vunpack.c.l.b16 %v4083
    %v4673 = vunpack.c.h.b16 %v4083
    %v4674 = vunpack.c.l.b16 %v4084
    %v4675 = vunpack.c.h.b16 %v4084
    %v4676 = vunpack.c.l.b16 %v4085
    %v4677 = vunpack.c.h.b16 %v4085
    %v4678 = vunpack.c.l.b16 %v4086
    %v4679 = vunpack.c.h.b16 %v4086
    %v4680 = vunpack.c.l.b16 %v4087
    %v4681 = vunpack.c.h.b16 %v4087
    %v4682 = vunpack.c.l.b16 %v4088
    %v4683 = vunpack.c.h.b16 %v4088
    %v4684 = vunpack.c.l.b16 %v4089
    %v4685 = vunpack.c.h.b16 %v4089
    %v4686 = vunpack.c.l.b16 %v4090
    %v4687 = vunpack.c.h.b16 %v4090
    %v4688 = vunpack.c.l.b16 %v4091
    %v4689 = vunpack.c.h.b16 %v4091
    %v4690 = vunpack.c.l.b16 %v4092
    %v4691 = vunpack.c.h.b16 %v4092
    %v4692 = vunpack.c.l.b16 %v4093
    %v4693 = vunpack.c.h.b16 %v4093
    %v4694 = vunpack.c.l.b16 %v4094
    %v4695 = vunpack.c.h.b16 %v4094
    %v4696 = vunpack.c.l.b16 %v4095
    %v4697 = vunpack.c.h.b16 %v4095
    %v4698 = vunpack.c.l.b16 %v4096
    %v4699 = vunpack.c.h.b16 %v4096
    %v4700 = vunpack.c.l.b16 %v4097
    %v4701 = vunpack.c.h.b16 %v4097
    %v4702 = vunpack.c.l.b16 %v4098
    %v4703 = vunpack.c.h.b16 %v4098
    %v4704 = vunpack.c.l.b16 %v4099
    %v4705 = vunpack.c.h.b16 %v4099
    %v4706 = vunpack.c.l.b16 %v4100
    %v4707 = vunpack.c.h.b16 %v4100
    %v4708 = vunpack.c.l.b16 %v4101
    %v4709 = vunpack.c.h.b16 %v4101
    %v4710 = vunpack.c.l.b16 %v4102
    %v4711 = vunpack.c.h.b16 %v4102
    %v4712 = vunpack.c.l.b16 %v4103
    %v4713 = vunpack.c.h.b16 %v4103
    %v4714 = vunpack.c.l.b16 %v4104
    %v4715 = vunpack.c.h.b16 %v4104
    %v4716 = vunpack.c.l.b16 %v4105
    %v4717 = vunpack.c.h.b16 %v4105
    %v4718 = vunpack.c.l.b16 %v4106
    %v4719 = vunpack.c.h.b16 %v4106
    %v4720 = vunpack.c.l.b16 %v4107
    %v4721 = vunpack.c.h.b16 %v4107
    %v4722 = vunpack.c.l.b16 %v4108
    %v4723 = vunpack.c.h.b16 %v4108
    %v4724 = vunpack.c.l.b16 %v4109
    %v4725 = vunpack.c.h.b16 %v4109
    %v4726 = vunpack.c.l.b16 %v4110
    %v4727 = vunpack.c.h.b16 %v4110
    %v4728 = vunpack.c.l.b16 %v4111
    %v4729 = vunpack.c.h.b16 %v4111
    %v4730 = vunpack.c.l.b16 %v4112
    %v4731 = vunpack.c.h.b16 %v4112
    %v4732 = vunpack.c.l.b16 %v4113
    %v4733 = vunpack.c.h.b16 %v4113
    %v4734 = vunpack.c.l.b16 %v4114
    %v4735 = vunpack.c.h.b16 %v4114
    %v4736 = vunpack.c.l.b16 %v4115
    %v4737 = vunpack.c.h.b16 %v4115
    %v4738 = vunpack.c.l.b16 %v4116
    %v4739 = vunpack.c.h.b16 %v4116
    %v4740 = vunpack.c.l.b16 %v4117
    %v4741 = vunpack.c.h.b16 %v4117
    %v4742 = vunpack.c.l.b16 %v4118
    %v4743 = vunpack.c.h.b16 %v4118
    %v4744 = vunpack.c.l.b16 %v4119
    %v4745 = vunpack.c.h.b16 %v4119
    %v4746 = vunpack.c.l.b16 %v4120
    %v4747 = vunpack.c.h.b16 %v4120
    %v4748 = vunpack.c.l.b16 %v4121
    %v4749 = vunpack.c.h.b16 %v4121
    %v4750 = vunpack.c.l.b16 %v4122
    %v4751 = vunpack.c.h.b16 %v4122
    %v4752 = vunpack.c.l.b16 %v4123
    %v4753 = vunpack.c.h.b16 %v4123
    %v4754 = vunpack.c.l.b16 %v4124
    %v4755 = vunpack.c.h.b16 %v4124
    %v4756 = vunpack.c.l.b16 %v4125
    %v4757 = vunpack.c.h.b16 %v4125
    %v4758 = vunpack.c.l.b16 %v4126
    %v4759 = vunpack.c.h.b16 %v4126
    %v4760 = vunpack.c.l.b16 %v4127
    %v4761 = vunpack.c.h.b16 %v4127
    %v4762 = vunpack.c.l.b16 %v4128
    %v4763 = vunpack.c.h.b16 %v4128
    %v4764 = vunpack.c.l.b16 %v4129
    %v4765 = vunpack.c.h.b16 %v4129
    %v4766 = vunpack.c.l.b16 %v4130
    %v4767 = vunpack.c.h.b16 %v4130
    %v4768 = vunpack.c.l.b16 %v4131
    %v4769 = vunpack.c.h.b16 %v4131
    %v4770 = vunpack.c.l.b16 %v4132
    %v4771 = vunpack.c.h.b16 %v4132
    %v4772 = vunpack.c.l.b16 %v4133
    %v4773 = vunpack.c.h.b16 %v4133
    %v4774 = vunpack.c.l.b16 %v4134
    %v4775 = vunpack.c.h.b16 %v4134
    %v4776 = vunpack.c.l.b16 %v4135
    %v4777 = vunpack.c.h.b16 %v4135
    %v4778 = vunpack.c.l.b16 %v4136
    %v4779 = vunpack.c.h.b16 %v4136
    %v4780 = vunpack.c.l.b16 %v4137
    %v4781 = vunpack.c.h.b16 %v4137
    %v4782 = vunpack.c.l.b16 %v4138
    %v4783 = vunpack.c.h.b16 %v4138
    %v4784 = vunpack.c.l.b16 %v4139
    %v4785 = vunpack.c.h.b16 %v4139
    %v4786 = vunpack.c.l.b16 %v4140
    %v4787 = vunpack.c.h.b16 %v4140
    %v4788 = vunpack.c.l.b16 %v4141
    %v4789 = vunpack.c.h.b16 %v4141
    %v4790 = vunpack.c.l.b16 %v4142
    %v4791 = vunpack.c.h.b16 %v4142
    %v4792 = vunpack.c.l.b16 %v4143
    %v4793 = vunpack.c.h.b16 %v4143
    %v4794 = vunpack.c.l.b16 %v4144
    %v4795 = vunpack.c.h.b16 %v4144
    %v4796 = vunpack.c.l.b16 %v4145
    %v4797 = vunpack.c.h.b16 %v4145
    %v4798 = vunpack.c.l.b16 %v4146
    %v4799 = vunpack.c.h.b16 %v4146
    %v4800 = vunpack.c.l.b16 %v4147
    %v4801 = vunpack.c.h.b16 %v4147
    %v4802 = vunpack.c.l.b16 %v4148
    %v4803 = vunpack.c.h.b16 %v4148
    %v4804 = vunpack.c.l.b16 %v4149
    %v4805 = vunpack.c.h.b16 %v4149
    %v4806 = vunpack.c.l.b16 %v4150
    %v4807 = vunpack.c.h.b16 %v4150
    %v4808 = vunpack.c.l.b16 %v4151
    %v4809 = vunpack.c.h.b16 %v4151
    %v4810 = vunpack.c.l.b16 %v4152
    %v4811 = vunpack.c.h.b16 %v4152
    %v4812 = vunpack.c.l.b16 %v4153
    %v4813 = vunpack.c.h.b16 %v4153
    %v4814 = vunpack.c.l.b16 %v4154
    %v4815 = vunpack.c.h.b16 %v4154
    %v4816 = vunpack.c.l.b16 %v4155
    %v4817 = vunpack.c.h.b16 %v4155
    %v4818 = vunpack.c.l.b16 %v4156
    %v4819 = vunpack.c.h.b16 %v4156
    %v4820 = vunpack.c.l.b16 %v4157
    %v4821 = vunpack.c.h.b16 %v4157
    %v4822 = vunpack.c.l.b16 %v4158
    %v4823 = vunpack.c.h.b16 %v4158
    %v4824 = vunpack.c.l.b16 %v4159
    %v4825 = vunpack.c.h.b16 %v4159
    %v4826 = vunpack.c.l.b16 %v4160
    %v4827 = vunpack.c.h.b16 %v4160
    %v4828 = vunpack.c.l.b16 %v4161
    %v4829 = vunpack.c.h.b16 %v4161
    %v4830 = vunpack.c.l.b16 %v4162
    %v4831 = vunpack.c.h.b16 %v4162
    %v4832 = vunpack.c.l.b16 %v4163
    %v4833 = vunpack.c.h.b16 %v4163
    %v4834 = vunpack.c.l.b16 %v4164
    %v4835 = vunpack.c.h.b16 %v4164
    %v4836 = vunpack.c.l.b16 %v4165
    %v4837 = vunpack.c.h.b16 %v4165
    %v4838 = vunpack.c.l.b16 %v4166
    %v4839 = vunpack.c.h.b16 %v4166
    %v4840 = vunpack.c.l.b16 %v4167
    %v4841 = vunpack.c.h.b16 %v4167
    %v4842 = vunpack.c.l.b16 %v4168
    %v4843 = vunpack.c.h.b16 %v4168
    %v4844 = vunpack.c.l.b16 %v4169
    %v4845 = vunpack.c.h.b16 %v4169
    %v4846 = vunpack.c.l.b16 %v4170
    %v4847 = vunpack.c.h.b16 %v4170
    %v4848 = vunpack.c.l.b16 %v4171
    %v4849 = vunpack.c.h.b16 %v4171
    %v4850 = vunpack.c.l.b16 %v4172
    %v4851 = vunpack.c.h.b16 %v4172
    %v4852 = vunpack.c.l.b16 %v4173
    %v4853 = vunpack.c.h.b16 %v4173
    %v4854 = vunpack.c.l.b16 %v4174
    %v4855 = vunpack.c.h.b16 %v4174
    %v4856 = vunpack.c.l.b16 %v4175
    %v4857 = vunpack.c.h.b16 %v4175
    %v4858 = vunpack.c.l.b16 %v4176
    %v4859 = vunpack.c.h.b16 %v4176
    %v4860 = vunpack.c.l.b16 %v4177
    %v4861 = vunpack.c.h.b16 %v4177
    %v4862 = vunpack.c.l.b16 %v4178
    %v4863 = vunpack.c.h.b16 %v4178
    %v4864 = vunpack.c.l.b16 %v4179
    %v4865 = vunpack.c.h.b16 %v4179
    %v4866 = vunpack.c.l.b16 %v4180
    %v4867 = vunpack.c.h.b16 %v4180
    %v4868 = vunpack.c.l.b16 %v4181
    %v4869 = vunpack.c.h.b16 %v4181
    %v4870 = vunpack.c.l.b16 %v4182
    %v4871 = vunpack.c.h.b16 %v4182
    %v4872 = vunpack.c.l.b16 %v4183
    %v4873 = vunpack.c.h.b16 %v4183
    %v4874 = vunpack.c.l.b16 %v4184
    %v4875 = vunpack.c.h.b16 %v4184
    %v4876 = vunpack.c.l.b16 %v4185
    %v4877 = vunpack.c.h.b16 %v4185
    %v4878 = vunpack.c.l.b16 %v4186
    %v4879 = vunpack.c.h.b16 %v4186
    %v4880 = vunpack.c.l.b16 %v4187
    %v4881 = vunpack.c.h.b16 %v4187
    %v4882 = vunpack.c.l.b16 %v4188
    %v4883 = vunpack.c.h.b16 %v4188
    %v4884 = vunpack.c.l.b16 %v4189
    %v4885 = vunpack.c.h.b16 %v4189
    %v4886 = vunpack.c.l.b16 %v4190
    %v4887 = vunpack.c.h.b16 %v4190
    %v4888 = vunpack.c.l.b16 %v4191
    %v4889 = vunpack.c.h.b16 %v4191
    %v4890 = vunpack.c.l.b16 %v4192
    %v4891 = vunpack.c.h.b16 %v4192
    %v4892 = vunpack.c.l.b16 %v4193
    %v4893 = vunpack.c.h.b16 %v4193
    %v4894 = vunpack.c.l.b16 %v4194
    %v4895 = vunpack.c.h.b16 %v4194
    %v4896 = vunpack.c.l.b16 %v4195
    %v4897 = vunpack.c.h.b16 %v4195
    %v4898 = vunpack.c.l.b16 %v4196
    %v4899 = vunpack.c.h.b16 %v4196
    %v4900 = vunpack.c.l.b16 %v4197
    %v4901 = vunpack.c.h.b16 %v4197
    %v4902 = vunpack.c.l.b16 %v4198
    %v4903 = vunpack.c.h.b16 %v4198
    %v4904 = vunpack.c.l.b16 %v4199
    %v4905 = vunpack.c.h.b16 %v4199
    %v4906 = vunpack.c.l.b16 %v4200
    %v4907 = vunpack.c.h.b16 %v4200
    %v4908 = vunpack.c.l.b16 %v4201
    %v4909 = vunpack.c.h.b16 %v4201
    %v4910 = vunpack.c.l.b16 %v4202
    %v4911 = vunpack.c.h.b16 %v4202
    %v4912 = vunpack.c.l.b16 %v4203
    %v4913 = vunpack.c.h.b16 %v4203
    %v4914 = vunpack.c.l.b16 %v4204
    %v4915 = vunpack.c.h.b16 %v4204
    %v4916 = vunpack.c.l.b16 %v4205
    %v4917 = vunpack.c.h.b16 %v4205
    %v4918 = vunpack.c.l.b16 %v4206
    %v4919 = vunpack.c.h.b16 %v4206
    %v4920 = vunpack.c.l.b16 %v4207
    %v4921 = vunpack.c.h.b16 %v4207
    %v4922 = vunpack.c.l.b16 %v4208
    %v4923 = vunpack.c.h.b16 %v4208
    %v4924 = vunpack.c.l.b16 %v4209
    %v4925 = vunpack.c.h.b16 %v4209
    %v4926 = vunpack.c.l.b16 %v4210
    %v4927 = vunpack.c.h.b16 %v4210
    %v4928 = vunpack.c.l.b16 %v4211
    %v4929 = vunpack.c.h.b16 %v4211
    %v4930 = vunpack.c.l.b16 %v4212
    %v4931 = vunpack.c.h.b16 %v4212
    %v4932 = vunpack.c.l.b16 %v4213
    %v4933 = vunpack.c.h.b16 %v4213
    %v4934 = vunpack.c.l.b16 %v4214
    %v4935 = vunpack.c.h.b16 %v4214
    %v4936 = vunpack.c.l.b16 %v4215
    %v4937 = vunpack.c.h.b16 %v4215
    %v4938 = vunpack.c.l.b16 %v4216
    %v4939 = vunpack.c.h.b16 %v4216
    %v4940 = vunpack.c.l.b16 %v4217
    %v4941 = vunpack.c.h.b16 %v4217
    %v4942 = vunpack.c.l.b16 %v4218
    %v4943 = vunpack.c.h.b16 %v4218
    %v4944 = vunpack.c.l.b16 %v4219
    %v4945 = vunpack.c.h.b16 %v4219
    %v4946 = vunpack.c.l.b16 %v4220
    %v4947 = vunpack.c.h.b16 %v4220
    %v4948 = vunpack.c.l.b16 %v4221
    %v4949 = vunpack.c.h.b16 %v4221
    %v4950 = vunpack.c.l.b16 %v4222
    %v4951 = vunpack.c.h.b16 %v4222
    %v4952 = vunpack.c.l.b16 %v4223
    %v4953 = vunpack.c.h.b16 %v4223
    %v4954 = vunpack.c.l.b16 %v4224
    %v4955 = vunpack.c.h.b16 %v4224
    %v4956 = vunpack.c.l.b16 %v4225
    %v4957 = vunpack.c.h.b16 %v4225
    %v4958 = vunpack.c.l.b16 %v4226
    %v4959 = vunpack.c.h.b16 %v4226
    %v4960 = vunpack.c.l.b16 %v4227
    %v4961 = vunpack.c.h.b16 %v4227
    %v4962 = vunpack.c.l.b16 %v4228
    %v4963 = vunpack.c.h.b16 %v4228
    %v4964 = vunpack.c.l.b16 %v4229
    %v4965 = vunpack.c.h.b16 %v4229
    %v4966 = vunpack.c.l.b16 %v4230
    %v4967 = vunpack.c.h.b16 %v4230
    %v4968 = vunpack.c.l.b16 %v4231
    %v4969 = vunpack.c.h.b16 %v4231
    %v4970 = vunpack.c.l.b16 %v4232
    %v4971 = vunpack.c.h.b16 %v4232
    %v4972 = vunpack.c.l.b16 %v4233
    %v4973 = vunpack.c.h.b16 %v4233
    %v4974 = vunpack.c.l.b16 %v4234
    %v4975 = vunpack.c.h.b16 %v4234
    %v4976 = vunpack.c.l.b16 %v4235
    %v4977 = vunpack.c.h.b16 %v4235
    %v4978 = vunpack.c.l.b16 %v4236
    %v4979 = vunpack.c.h.b16 %v4236
    %v4980 = vunpack.c.l.b16 %v4237
    %v4981 = vunpack.c.h.b16 %v4237
    %v4982 = vunpack.c.l.b16 %v4238
    %v4983 = vunpack.c.h.b16 %v4238
    %v4984 = vunpack.c.l.b16 %v4239
    %v4985 = vunpack.c.h.b16 %v4239
    %v4986 = vunpack.c.l.b16 %v4240
    %v4987 = vunpack.c.h.b16 %v4240
    %v4988 = vunpack.c.l.b16 %v4241
    %v4989 = vunpack.c.h.b16 %v4241
    %v4990 = vunpack.c.l.b16 %v4242
    %v4991 = vunpack.c.h.b16 %v4242
    %v4992 = vunpack.c.l.b16 %v4243
    %v4993 = vunpack.c.h.b16 %v4243
    %v4994 = vunpack.c.l.b16 %v4244
    %v4995 = vunpack.c.h.b16 %v4244
    %v4996 = vunpack.c.l.b16 %v4245
    %v4997 = vunpack.c.h.b16 %v4245
    %v4998 = vunpack.c.l.b16 %v4246
    %v4999 = vunpack.c.h.b16 %v4246
    %v5000 = vunpack.c.l.b16 %v4247
    %v5001 = vunpack.c.h.b16 %v4247
    %v5002 = vunpack.c.l.b16 %v4248
    %v5003 = vunpack.c.h.b16 %v4248
    %v5004 = vunpack.c.l.b16 %v4249
    %v5005 = vunpack.c.h.b16 %v4249
    %v5006 = vunpack.c.l.b16 %v4250
    %v5007 = vunpack.c.h.b16 %v4250
    %v5008 = vunpack.c.l.b16 %v4251
    %v5009 = vunpack.c.h.b16 %v4251
    %v5010 = vunpack.c.l.b16 %v4252
    %v5011 = vunpack.c.h.b16 %v4252
    %v5012 = vunpack.c.l.b16 %v4253
    %v5013 = vunpack.c.h.b16 %v4253
    %v5014 = vunpack.c.l.b16 %v4254
    %v5015 = vunpack.c.h.b16 %v4254
    %v5016 = vunpack.c.l.b16 %v4255
    %v5017 = vunpack.c.h.b16 %v4255
    %v5018 = vunpack.c.l.b16 %v4256
    %v5019 = vunpack.c.h.b16 %v4256
    %v5020 = vunpack.c.l.b16 %v4257
    %v5021 = vunpack.c.h.b16 %v4257
    %v5022 = vunpack.c.l.b16 %v4258
    %v5023 = vunpack.c.h.b16 %v4258
    %v5024 = vunpack.c.l.b16 %v4259
    %v5025 = vunpack.c.h.b16 %v4259
    %v5026 = vunpack.c.l.b16 %v4260
    %v5027 = vunpack.c.h.b16 %v4260
    %v5028 = vunpack.c.l.b16 %v4261
    %v5029 = vunpack.c.h.b16 %v4261
    %v5030 = vpack.c.b16 %v4526, %v4518
    %v5031 = vpack.c.b16 %v4527, %v4519
    %v5032 = vpack.c.b16 %v4528, %v4520
    %v5033 = vpack.c.b16 %v4529, %v4521
    %v5034 = vpack.c.b16 %v4530, %v4522
    %v5035 = vpack.c.b16 %v4531, %v4523
    %v5036 = vpack.c.b16 %v4532, %v4524
    %v5037 = vpack.c.b16 %v4533, %v4525
    %v5038 = vpack.c.b16 %v4542, %v4534
    %v5039 = vpack.c.b16 %v4543, %v4535
    %v5040 = vpack.c.b16 %v4544, %v4536
    %v5041 = vpack.c.b16 %v4545, %v4537
    %v5042 = vpack.c.b16 %v4546, %v4538
    %v5043 = vpack.c.b16 %v4547, %v4539
    %v5044 = vpack.c.b16 %v4548, %v4540
    %v5045 = vpack.c.b16 %v4549, %v4541
    %v5046 = vpack.c.b16 %v4558, %v4550
    %v5047 = vpack.c.b16 %v4559, %v4551
    %v5048 = vpack.c.b16 %v4560, %v4552
    %v5049 = vpack.c.b16 %v4561, %v4553
    %v5050 = vpack.c.b16 %v4562, %v4554
    %v5051 = vpack.c.b16 %v4563, %v4555
    %v5052 = vpack.c.b16 %v4564, %v4556
    %v5053 = vpack.c.b16 %v4565, %v4557
    %v5054 = vpack.c.b16 %v4574, %v4566
    %v5055 = vpack.c.b16 %v4575, %v4567
    %v5056 = vpack.c.b16 %v4576, %v4568
    %v5057 = vpack.c.b16 %v4577, %v4569
    %v5058 = vpack.c.b16 %v4578, %v4570
    %v5059 = vpack.c.b16 %v4579, %v4571
    %v5060 = vpack.c.b16 %v4580, %v4572
    %v5061 = vpack.c.b16 %v4581, %v4573
    %v5062 = vpack.c.b16 %v4590, %v4582
    %v5063 = vpack.c.b16 %v4591, %v4583
    %v5064 = vpack.c.b16 %v4592, %v4584
    %v5065 = vpack.c.b16 %v4593, %v4585
    %v5066 = vpack.c.b16 %v4594, %v4586
    %v5067 = vpack.c.b16 %v4595, %v4587
    %v5068 = vpack.c.b16 %v4596, %v4588
    %v5069 = vpack.c.b16 %v4597, %v4589
    %v5070 = vpack.c.b16 %v4606, %v4598
    %v5071 = vpack.c.b16 %v4607, %v4599
    %v5072 = vpack.c.b16 %v4608, %v4600
    %v5073 = vpack.c.b16 %v4609, %v4601
    %v5074 = vpack.c.b16 %v4610, %v4602
    %v5075 = vpack.c.b16 %v4611, %v4603
    %v5076 = vpack.c.b16 %v4612, %v4604
    %v5077 = vpack.c.b16 %v4613, %v4605
    %v5078 = vpack.c.b16 %v4622, %v4614
    %v5079 = vpack.c.b16 %v4623, %v4615
    %v5080 = vpack.c.b16 %v4624, %v4616
    %v5081 = vpack.c.b16 %v4625, %v4617
    %v5082 = vpack.c.b16 %v4626, %v4618
    %v5083 = vpack.c.b16 %v4627, %v4619
    %v5084 = vpack.c.b16 %v4628, %v4620
    %v5085 = vpack.c.b16 %v4629, %v4621
    %v5086 = vpack.c.b16 %v4638, %v4630
    %v5087 = vpack.c.b16 %v4639, %v4631
    %v5088 = vpack.c.b16 %v4640, %v4632
    %v5089 = vpack.c.b16 %v4641, %v4633
    %v5090 = vpack.c.b16 %v4642, %v4634
    %v5091 = vpack.c.b16 %v4643, %v4635
    %v5092 = vpack.c.b16 %v4644, %v4636
    %v5093 = vpack.c.b16 %v4645, %v4637
    %v5094 = vpack.c.b16 %v4654, %v4646
    %v5095 = vpack.c.b16 %v4655, %v4647
    %v5096 = vpack.c.b16 %v4656, %v4648
    %v5097 = vpack.c.b16 %v4657, %v4649
    %v5098 = vpack.c.b16 %v4658, %v4650
    %v5099 = vpack.c.b16 %v4659, %v4651
    %v5100 = vpack.c.b16 %v4660, %v4652
    %v5101 = vpack.c.b16 %v4661, %v4653
    %v5102 = vpack.c.b16 %v4670, %v4662
    %v5103 = vpack.c.b16 %v4671, %v4663
    %v5104 = vpack.c.b16 %v4672, %v4664
    %v5105 = vpack.c.b16 %v4673, %v4665
    %v5106 = vpack.c.b16 %v4674, %v4666
    %v5107 = vpack.c.b16 %v4675, %v4667
    %v5108 = vpack.c.b16 %v4676, %v4668
    %v5109 = vpack.c.b16 %v4677, %v4669
    %v5110 = vpack.c.b16 %v4686, %v4678
    %v5111 = vpack.c.b16 %v4687, %v4679
    %v5112 = vpack.c.b16 %v4688, %v4680
    %v5113 = vpack.c.b16 %v4689, %v4681
    %v5114 = vpack.c.b16 %v4690, %v4682
    %v5115 = vpack.c.b16 %v4691, %v4683
    %v5116 = vpack.c.b16 %v4692, %v4684
    %v5117 = vpack.c.b16 %v4693, %v4685
    %v5118 = vpack.c.b16 %v4702, %v4694
    %v5119 = vpack.c.b16 %v4703, %v4695
    %v5120 = vpack.c.b16 %v4704, %v4696
    %v5121 = vpack.c.b16 %v4705, %v4697
    %v5122 = vpack.c.b16 %v4706, %v4698
    %v5123 = vpack.c.b16 %v4707, %v4699
    %v5124 = vpack.c.b16 %v4708, %v4700
    %v5125 = vpack.c.b16 %v4709, %v4701
    %v5126 = vpack.c.b16 %v4718, %v4710
    %v5127 = vpack.c.b16 %v4719, %v4711
    %v5128 = vpack.c.b16 %v4720, %v4712
    %v5129 = vpack.c.b16 %v4721, %v4713
    %v5130 = vpack.c.b16 %v4722, %v4714
    %v5131 = vpack.c.b16 %v4723, %v4715
    %v5132 = vpack.c.b16 %v4724, %v4716
    %v5133 = vpack.c.b16 %v4725, %v4717
    %v5134 = vpack.c.b16 %v4734, %v4726
    %v5135 = vpack.c.b16 %v4735, %v4727
    %v5136 = vpack.c.b16 %v4736, %v4728
    %v5137 = vpack.c.b16 %v4737, %v4729
    %v5138 = vpack.c.b16 %v4738, %v4730
    %v5139 = vpack.c.b16 %v4739, %v4731
    %v5140 = vpack.c.b16 %v4740, %v4732
    %v5141 = vpack.c.b16 %v4741, %v4733
    %v5142 = vpack.c.b16 %v4750, %v4742
    %v5143 = vpack.c.b16 %v4751, %v4743
    %v5144 = vpack.c.b16 %v4752, %v4744
    %v5145 = vpack.c.b16 %v4753, %v4745
    %v5146 = vpack.c.b16 %v4754, %v4746
    %v5147 = vpack.c.b16 %v4755, %v4747
    %v5148 = vpack.c.b16 %v4756, %v4748
    %v5149 = vpack.c.b16 %v4757, %v4749
    %v5150 = vpack.c.b16 %v4766, %v4758
    %v5151 = vpack.c.b16 %v4767, %v4759
    %v5152 = vpack.c.b16 %v4768, %v4760
    %v5153 = vpack.c.b16 %v4769, %v4761
    %v5154 = vpack.c.b16 %v4770, %v4762
    %v5155 = vpack.c.b16 %v4771, %v4763
    %v5156 = vpack.c.b16 %v4772, %v4764
    %v5157 = vpack.c.b16 %v4773, %v4765
    %v5158 = vpack.c.b16 %v4782, %v4774
    %v5159 = vpack.c.b16 %v4783, %v4775
    %v5160 = vpack.c.b16 %v4784, %v4776
    %v5161 = vpack.c.b16 %v4785, %v4777
    %v5162 = vpack.c.b16 %v4786, %v4778
    %v5163 = vpack.c.b16 %v4787, %v4779
    %v5164 = vpack.c.b16 %v4788, %v4780
    %v5165 = vpack.c.b16 %v4789, %v4781
    %v5166 = vpack.c.b16 %v4798, %v4790
    %v5167 = vpack.c.b16 %v4799, %v4791
    %v5168 = vpack.c.b16 %v4800, %v4792
    %v5169 = vpack.c.b16 %v4801, %v4793
    %v5170 = vpack.c.b16 %v4802, %v4794
    %v5171 = vpack.c.b16 %v4803, %v4795
    %v5172 = vpack.c.b16 %v4804, %v4796
    %v5173 = vpack.c.b16 %v4805, %v4797
    %v5174 = vpack.c.b16 %v4814, %v4806
    %v5175 = vpack.c.b16 %v4815, %v4807
    %v5176 = vpack.c.b16 %v4816, %v4808
    %v5177 = vpack.c.b16 %v4817, %v4809
    %v5178 = vpack.c.b16 %v4818, %v4810
    %v5179 = vpack.c.b16 %v4819, %v4811
    %v5180 = vpack.c.b16 %v4820, %v4812
    %v5181 = vpack.c.b16 %v4821, %v4813
    %v5182 = vpack.c.b16 %v4830, %v4822
    %v5183 = vpack.c.b16 %v4831, %v4823
    %v5184 = vpack.c.b16 %v4832, %v4824
    %v5185 = vpack.c.b16 %v4833, %v4825
    %v5186 = vpack.c.b16 %v4834, %v4826
    %v5187 = vpack.c.b16 %v4835, %v4827
    %v5188 = vpack.c.b16 %v4836, %v4828
    %v5189 = vpack.c.b16 %v4837, %v4829
    %v5190 = vpack.c.b16 %v4846, %v4838
    %v5191 = vpack.c.b16 %v4847, %v4839
    %v5192 = vpack.c.b16 %v4848, %v4840
    %v5193 = vpack.c.b16 %v4849, %v4841
    %v5194 = vpack.c.b16 %v4850, %v4842
    %v5195 = vpack.c.b16 %v4851, %v4843
    %v5196 = vpack.c.b16 %v4852, %v4844
    %v5197 = vpack.c.b16 %v4853, %v4845
    %v5198 = vpack.c.b16 %v4862, %v4854
    %v5199 = vpack.c.b16 %v4863, %v4855
    %v5200 = vpack.c.b16 %v4864, %v4856
    %v5201 = vpack.c.b16 %v4865, %v4857
    %v5202 = vpack.c.b16 %v4866, %v4858
    %v5203 = vpack.c.b16 %v4867, %v4859
    %v5204 = vpack.c.b16 %v4868, %v4860
    %v5205 = vpack.c.b16 %v4869, %v4861
    %v5206 = vpack.c.b16 %v4878, %v4870
    %v5207 = vpack.c.b16 %v4879, %v4871
    %v5208 = vpack.c.b16 %v4880, %v4872
    %v5209 = vpack.c.b16 %v4881, %v4873
    %v5210 = vpack.c.b16 %v4882, %v4874
    %v5211 = vpack.c.b16 %v4883, %v4875
    %v5212 = vpack.c.b16 %v4884, %v4876
    %v5213 = vpack.c.b16 %v4885, %v4877
    %v5214 = vpack.c.b16 %v4894, %v4886
    %v5215 = vpack.c.b16 %v4895, %v4887
    %v5216 = vpack.c.b16 %v4896, %v4888
    %v5217 = vpack.c.b16 %v4897, %v4889
    %v5218 = vpack.c.b16 %v4898, %v4890
    %v5219 = vpack.c.b16 %v4899, %v4891
    %v5220 = vpack.c.b16 %v4900, %v4892
    %v5221 = vpack.c.b16 %v4901, %v4893
    %v5222 = vpack.c.b16 %v4910, %v4902
    %v5223 = vpack.c.b16 %v4911, %v4903
    %v5224 = vpack.c.b16 %v4912, %v4904
    %v5225 = vpack.c.b16 %v4913, %v4905
    %v5226 = vpack.c.b16 %v4914, %v4906
    %v5227 = vpack.c.b16 %v4915, %v4907
    %v5228 = vpack.c.b16 %v4916, %v4908
    %v5229 = vpack.c.b16 %v4917, %v4909
    %v5230 = vpack.c.b16 %v4926, %v4918
    %v5231 = vpack.c.b16 %v4927, %v4919
    %v5232 = vpack.c.b16 %v4928, %v4920
    %v5233 = vpack.c.b16 %v4929, %v4921
    %v5234 = vpack.c.b16 %v4930, %v4922
    %v5235 = vpack.c.b16 %v4931, %v4923
    %v5236 = vpack.c.b16 %v4932, %v4924
    %v5237 = vpack.c.b16 %v4933, %v4925
    %v5238 = vpack.c.b16 %v4942, %v4934
    %v5239 = vpack.c.b16 %v4943, %v4935
    %v5240 = vpack.c.b16 %v4944, %v4936
    %v5241 = vpack.c.b16 %v4945, %v4937
    %v5242 = vpack.c.b16 %v4946, %v4938
    %v5243 = vpack.c.b16 %v4947, %v4939
    %v5244 = vpack.c.b16 %v4948, %v4940
    %v5245 = vpack.c.b16 %v4949, %v4941
    %v5246 = vpack.c.b16 %v4958, %v4950
    %v5247 = vpack.c.b16 %v4959, %v4951
    %v5248 = vpack.c.b16 %v4960, %v4952
    %v5249 = vpack.c.b16 %v4961, %v4953
    %v5250 = vpack.c.b16 %v4962, %v4954
    %v5251 = vpack.c.b16 %v4963, %v4955
    %v5252 = vpack.c.b16 %v4964, %v4956
    %v5253 = vpack.c.b16 %v4965, %v4957
    %v5254 = vpack.c.b16 %v4974, %v4966
    %v5255 = vpack.c.b16 %v4975, %v4967
    %v5256 = vpack.c.b16 %v4976, %v4968
    %v5257 = vpack.c.b16 %v4977, %v4969
    %v5258 = vpack.c.b16 %v4978, %v4970
    %v5259 = vpack.c.b16 %v4979, %v4971
    %v5260 = vpack.c.b16 %v4980, %v4972
    %v5261 = vpack.c.b16 %v4981, %v4973
    %v5262 = vpack.c.b16 %v4990, %v4982
    %v5263 = vpack.c.b16 %v4991, %v4983
    %v5264 = vpack.c.b16 %v4992, %v4984
    %v5265 = vpack.c.b16 %v4993, %v4985
    %v5266 = vpack.c.b16 %v4994, %v4986
    %v5267 = vpack.c.b16 %v4995, %v4987
    %v5268 = vpack.c.b16 %v4996, %v4988
    %v5269 = vpack.c.b16 %v4997, %v4989
    %v5270 = vpack.c.b16 %v5006, %v4998
    %v5271 = vpack.c.b16 %v5007, %v4999
    %v5272 = vpack.c.b16 %v5008, %v5000
    %v5273 = vpack.c.b16 %v5009, %v5001
    %v5274 = vpack.c.b16 %v5010, %v5002
    %v5275 = vpack.c.b16 %v5011, %v5003
    %v5276 = vpack.c.b16 %v5012, %v5004
    %v5277 = vpack.c.b16 %v5013, %v5005
    %v5278 = vpack.c.b16 %v5022, %v5014
    %v5279 = vpack.c.b16 %v5023, %v5015
    %v5280 = vpack.c.b16 %v5024, %v5016
    %v5281 = vpack.c.b16 %v5025, %v5017
    %v5282 = vpack.c.b16 %v5026, %v5018
    %v5283 = vpack.c.b16 %v5027, %v5019
    %v5284 = vpack.c.b16 %v5028, %v5020
    %v5285 = vpack.c.b16 %v5029, %v5021
    %5542 = vmatprep.subr.bf16.mxu0 %v5031
    %5543 = vmatpush1.bf16.msra.mxu0 %v5030
    %5544 = vmatprep.subr.bf16.mxu0 %v5039
    %5545 = vmatpush1.bf16.msra.mxu0 %v5038
    %5546 = vmatprep.subr.bf16.mxu0 %v5047
    %5547 = vmatpush1.bf16.msra.mxu0 %v5046
    %5548 = vmatprep.subr.bf16.mxu0 %v5055
    %5549 = vmatpush1.bf16.msra.mxu0 %v5054
    %5550 = vmatprep.subr.bf16.mxu0 %v5063
    %5551 = vmatpush1.bf16.msra.mxu0 %v5062
    %5552 = vmatprep.subr.bf16.mxu0 %v5071
    %5553 = vmatpush1.bf16.msra.mxu0 %v5070
    %5554 = vmatprep.subr.bf16.mxu0 %v5079
    %5555 = vmatpush1.bf16.msra.mxu0 %v5078
    %5556 = vmatprep.subr.bf16.mxu0 %v5087
    %5557 = vmatpush1.bf16.msra.mxu0 %v5086
    %5558 = vmatprep.subr.bf16.mxu0 %v5095
    %5559 = vmatpush1.bf16.msra.mxu0 %v5094
    %5560 = vmatprep.subr.bf16.mxu0 %v5103
    %5561 = vmatpush1.bf16.msra.mxu0 %v5102
    %5562 = vmatprep.subr.bf16.mxu0 %v5111
    %5563 = vmatpush1.bf16.msra.mxu0 %v5110
    %5564 = vmatprep.subr.bf16.mxu0 %v5119
    %5565 = vmatpush1.bf16.msra.mxu0 %v5118
    %5566 = vmatprep.subr.bf16.mxu0 %v5127
    %5567 = vmatpush1.bf16.msra.mxu0 %v5126
    %5568 = vmatprep.subr.bf16.mxu0 %v5135
    %5569 = vmatpush1.bf16.msra.mxu0 %v5134
    %5570 = vmatprep.subr.bf16.mxu0 %v5143
    %5571 = vmatpush1.bf16.msra.mxu0 %v5142
    %5572 = vmatprep.subr.bf16.mxu0 %v5151
    %5573 = vmatpush1.bf16.msra.mxu0 %v5150
    %5574 = vmatprep.mubr.bf16.mxu0 %v4003
    %5575 = vmatmul.mubr.bf16.gmra.mrb[0].mxu0 %v4002
    %v5576 = vpop.f32.mrb[0].mxu0
    %v5577 = vadd.f32 0.0, %v5576
    %v5578 = vpop.f32.mrb[0].mxu0
    %v5579 = vadd.f32 0.0, %v5578
    %v5580 = vpop.f32.mrb[0].mxu0
    %v5581 = vadd.f32 0.0, %v5580
    %v5582 = vpop.f32.mrb[0].mxu0
    %v5583 = vadd.f32 0.0, %v5582
    %5584 = vdwg.mxu0
    %5585 = vmatprep.subr.bf16.mxu0 %v5159
    %5586 = vmatpush1.bf16.msra.mxu0 %v5158
    %5587 = vmatprep.subr.bf16.mxu0 %v5167
    %5588 = vmatpush1.bf16.msra.mxu0 %v5166
    %5589 = vmatprep.subr.bf16.mxu0 %v5175
    %5590 = vmatpush1.bf16.msra.mxu0 %v5174
    %5591 = vmatprep.subr.bf16.mxu0 %v5183
    %5592 = vmatpush1.bf16.msra.mxu0 %v5182
    %5593 = vmatprep.subr.bf16.mxu0 %v5191
    %5594 = vmatpush1.bf16.msra.mxu0 %v5190
    %5595 = vmatprep.subr.bf16.mxu0 %v5199
    %5596 = vmatpush1.bf16.msra.mxu0 %v5198
    %5597 = vmatprep.subr.bf16.mxu0 %v5207
    %5598 = vmatpush1.bf16.msra.mxu0 %v5206
    %5599 = vmatprep.subr.bf16.mxu0 %v5215
    %5600 = vmatpush1.bf16.msra.mxu0 %v5214
    %5601 = vmatprep.subr.bf16.mxu0 %v5223
    %5602 = vmatpush1.bf16.msra.mxu0 %v5222
    %5603 = vmatprep.subr.bf16.mxu0 %v5231
    %5604 = vmatpush1.bf16.msra.mxu0 %v5230
    %5605 = vmatprep.subr.bf16.mxu0 %v5239
    %5606 = vmatpush1.bf16.msra.mxu0 %v5238
    %5607 = vmatprep.subr.bf16.mxu0 %v5247
    %5608 = vmatpush1.bf16.msra.mxu0 %v5246
    %5609 = vmatprep.subr.bf16.mxu0 %v5255
    %5610 = vmatpush1.bf16.msra.mxu0 %v5254
    %5611 = vmatprep.subr.bf16.mxu0 %v5263
    %5612 = vmatpush1.bf16.msra.mxu0 %v5262
    %5613 = vmatprep.subr.bf16.mxu0 %v5271
    %5614 = vmatpush1.bf16.msra.mxu0 %v5270
    %5615 = vmatprep.subr.bf16.mxu0 %v5279
    %5616 = vmatpush1.bf16.msra.mxu0 %v5278
    %5617 = vmatprep.mubr.bf16.mxu0 %v4005
    %5618 = vmatmul.mubr.bf16.gmra.mrb[0].mxu0 %v4004
    %v5619 = vpop.f32.mrb[0].mxu0
    %v5620 = vadd.f32 %v5577, %v5619
    %v5621 = vpop.f32.mrb[0].mxu0
    %v5622 = vadd.f32 %v5579, %v5621
    %v5623 = vpop.f32.mrb[0].mxu0
    %v5624 = vadd.f32 %v5581, %v5623
    %v5625 = vpop.f32.mrb[0].mxu0
    %v5626 = vadd.f32 %v5583, %v5625
    %5627 = vdwg.mxu0
    %5628 = vmatprep.subr.bf16.mxu0 %v5033
    %5629 = vmatpush1.bf16.msra.mxu0 %v5032
    %5630 = vmatprep.subr.bf16.mxu0 %v5041
    %5631 = vmatpush1.bf16.msra.mxu0 %v5040
    %5632 = vmatprep.subr.bf16.mxu0 %v5049
    %5633 = vmatpush1.bf16.msra.mxu0 %v5048
    %5634 = vmatprep.subr.bf16.mxu0 %v5057
    %5635 = vmatpush1.bf16.msra.mxu0 %v5056
    %5636 = vmatprep.subr.bf16.mxu0 %v5065
    %5637 = vmatpush1.bf16.msra.mxu0 %v5064
    %5638 = vmatprep.subr.bf16.mxu0 %v5073
    %5639 = vmatpush1.bf16.msra.mxu0 %v5072
    %5640 = vmatprep.subr.bf16.mxu0 %v5081
    %5641 = vmatpush1.bf16.msra.mxu0 %v5080
    %5642 = vmatprep.subr.bf16.mxu0 %v5089
    %5643 = vmatpush1.bf16.msra.mxu0 %v5088
    %5644 = vmatprep.subr.bf16.mxu0 %v5097
    %5645 = vmatpush1.bf16.msra.mxu0 %v5096
    %5646 = vmatprep.subr.bf16.mxu0 %v5105
    %5647 = vmatpush1.bf16.msra.mxu0 %v5104
    %5648 = vmatprep.subr.bf16.mxu0 %v5113
    %5649 = vmatpush1.bf16.msra.mxu0 %v5112
    %5650 = vmatprep.subr.bf16.mxu0 %v5121
    %5651 = vmatpush1.bf16.msra.mxu0 %v5120
    %5652 = vmatprep.subr.bf16.mxu0 %v5129
    %5653 = vmatpush1.bf16.msra.mxu0 %v5128
    %5654 = vmatprep.subr.bf16.mxu0 %v5137
    %5655 = vmatpush1.bf16.msra.mxu0 %v5136
    %5656 = vmatprep.subr.bf16.mxu0 %v5145
    %5657 = vmatpush1.bf16.msra.mxu0 %v5144
    %5658 = vmatprep.subr.bf16.mxu0 %v5153
    %5659 = vmatpush1.bf16.msra.mxu0 %v5152
    %5660 = vmatprep.mubr.bf16.mxu0 %v4003
    %5661 = vmatmul.mubr.bf16.gmra.mrb[0].mxu0 %v4002
    %v5662 = vpop.f32.mrb[0].mxu0
    %v5663 = vadd.f32 0.0, %v5662
    %v5664 = vpop.f32.mrb[0].mxu0
    %v5665 = vadd.f32 0.0, %v5664
    %v5666 = vpop.f32.mrb[0].mxu0
    %v5667 = vadd.f32 0.0, %v5666
    %v5668 = vpop.f32.mrb[0].mxu0
    %v5669 = vadd.f32 0.0, %v5668
    %5670 = vdwg.mxu0
    %5671 = vmatprep.subr.bf16.mxu0 %v5161
    %5672 = vmatpush1.bf16.msra.mxu0 %v5160
    %5673 = vmatprep.subr.bf16.mxu0 %v5169
    %5674 = vmatpush1.bf16.msra.mxu0 %v5168
    %5675 = vmatprep.subr.bf16.mxu0 %v5177
    %5676 = vmatpush1.bf16.msra.mxu0 %v5176
    %5677 = vmatprep.subr.bf16.mxu0 %v5185
    %5678 = vmatpush1.bf16.msra.mxu0 %v5184
    %5679 = vmatprep.subr.bf16.mxu0 %v5193
    %5680 = vmatpush1.bf16.msra.mxu0 %v5192
    %5681 = vmatprep.subr.bf16.mxu0 %v5201
    %5682 = vmatpush1.bf16.msra.mxu0 %v5200
    %5683 = vmatprep.subr.bf16.mxu0 %v5209
    %5684 = vmatpush1.bf16.msra.mxu0 %v5208
    %5685 = vmatprep.subr.bf16.mxu0 %v5217
    %5686 = vmatpush1.bf16.msra.mxu0 %v5216
    %5687 = vmatprep.subr.bf16.mxu0 %v5225
    %5688 = vmatpush1.bf16.msra.mxu0 %v5224
    %5689 = vmatprep.subr.bf16.mxu0 %v5233
    %5690 = vmatpush1.bf16.msra.mxu0 %v5232
    %5691 = vmatprep.subr.bf16.mxu0 %v5241
    %5692 = vmatpush1.bf16.msra.mxu0 %v5240
    %5693 = vmatprep.subr.bf16.mxu0 %v5249
    %5694 = vmatpush1.bf16.msra.mxu0 %v5248
    %5695 = vmatprep.subr.bf16.mxu0 %v5257
    %5696 = vmatpush1.bf16.msra.mxu0 %v5256
    %5697 = vmatprep.subr.bf16.mxu0 %v5265
    %5698 = vmatpush1.bf16.msra.mxu0 %v5264
    %5699 = vmatprep.subr.bf16.mxu0 %v5273
    %5700 = vmatpush1.bf16.msra.mxu0 %v5272
    %5701 = vmatprep.subr.bf16.mxu0 %v5281
    %5702 = vmatpush1.bf16.msra.mxu0 %v5280
    %5703 = vmatprep.mubr.bf16.mxu0 %v4005
    %5704 = vmatmul.mubr.bf16.gmra.mrb[0].mxu0 %v4004
    %v5705 = vpop.f32.mrb[0].mxu0
    %v5706 = vadd.f32 %v5663, %v5705
    %v5707 = vpop.f32.mrb[0].mxu0
    %v5708 = vadd.f32 %v5665, %v5707
    %v5709 = vpop.f32.mrb[0].mxu0
    %v5710 = vadd.f32 %v5667, %v5709
    %v5711 = vpop.f32.mrb[0].mxu0
    %v5712 = vadd.f32 %v5669, %v5711
    %5713 = vdwg.mxu0
    %5714 = vmatprep.subr.bf16.mxu0 %v5035
    %5715 = vmatpush1.bf16.msra.mxu0 %v5034
    %5716 = vmatprep.subr.bf16.mxu0 %v5043
    %5717 = vmatpush1.bf16.msra.mxu0 %v5042
    %5718 = vmatprep.subr.bf16.mxu0 %v5051
    %5719 = vmatpush1.bf16.msra.mxu0 %v5050
    %5720 = vmatprep.subr.bf16.mxu0 %v5059
    %5721 = vmatpush1.bf16.msra.mxu0 %v5058
    %5722 = vmatprep.subr.bf16.mxu0 %v5067
    %5723 = vmatpush1.bf16.msra.mxu0 %v5066
    %5724 = vmatprep.subr.bf16.mxu0 %v5075
    %5725 = vmatpush1.bf16.msra.mxu0 %v5074
    %5726 = vmatprep.subr.bf16.mxu0 %v5083
    %5727 = vmatpush1.bf16.msra.mxu0 %v5082
    %5728 = vmatprep.subr.bf16.mxu0 %v5091
    %5729 = vmatpush1.bf16.msra.mxu0 %v5090
    %5730 = vmatprep.subr.bf16.mxu0 %v5099
    %5731 = vmatpush1.bf16.msra.mxu0 %v5098
    %5732 = vmatprep.subr.bf16.mxu0 %v5107
    %5733 = vmatpush1.bf16.msra.mxu0 %v5106
    %5734 = vmatprep.subr.bf16.mxu0 %v5115
    %5735 = vmatpush1.bf16.msra.mxu0 %v5114
    %5736 = vmatprep.subr.bf16.mxu0 %v5123
    %5737 = vmatpush1.bf16.msra.mxu0 %v5122
    %5738 = vmatprep.subr.bf16.mxu0 %v5131
    %5739 = vmatpush1.bf16.msra.mxu0 %v5130
    %5740 = vmatprep.subr.bf16.mxu0 %v5139
    %5741 = vmatpush1.bf16.msra.mxu0 %v5138
    %5742 = vmatprep.subr.bf16.mxu0 %v5147
    %5743 = vmatpush1.bf16.msra.mxu0 %v5146
    %5744 = vmatprep.subr.bf16.mxu0 %v5155
    %5745 = vmatpush1.bf16.msra.mxu0 %v5154
    %5746 = vmatprep.mubr.bf16.mxu0 %v4003
    %5747 = vmatmul.mubr.bf16.gmra.mrb[0].mxu0 %v4002
    %v5748 = vpop.f32.mrb[0].mxu0
    %v5749 = vadd.f32 0.0, %v5748
    %v5750 = vpop.f32.mrb[0].mxu0
    %v5751 = vadd.f32 0.0, %v5750
    %v5752 = vpop.f32.mrb[0].mxu0
    %v5753 = vadd.f32 0.0, %v5752
    %v5754 = vpop.f32.mrb[0].mxu0
    %v5755 = vadd.f32 0.0, %v5754
    %5756 = vdwg.mxu0
    %5757 = vmatprep.subr.bf16.mxu0 %v5163
    %5758 = vmatpush1.bf16.msra.mxu0 %v5162
    %5759 = vmatprep.subr.bf16.mxu0 %v5171
    %5760 = vmatpush1.bf16.msra.mxu0 %v5170
    %5761 = vmatprep.subr.bf16.mxu0 %v5179
    %5762 = vmatpush1.bf16.msra.mxu0 %v5178
    %5763 = vmatprep.subr.bf16.mxu0 %v5187
    %5764 = vmatpush1.bf16.msra.mxu0 %v5186
    %5765 = vmatprep.subr.bf16.mxu0 %v5195
    %5766 = vmatpush1.bf16.msra.mxu0 %v5194
    %5767 = vmatprep.subr.bf16.mxu0 %v5203
    %5768 = vmatpush1.bf16.msra.mxu0 %v5202
    %5769 = vmatprep.subr.bf16.mxu0 %v5211
    %5770 = vmatpush1.bf16.msra.mxu0 %v5210
    %5771 = vmatprep.subr.bf16.mxu0 %v5219
    %5772 = vmatpush1.bf16.msra.mxu0 %v5218
    %5773 = vmatprep.subr.bf16.mxu0 %v5227
    %5774 = vmatpush1.bf16.msra.mxu0 %v5226
    %5775 = vmatprep.subr.bf16.mxu0 %v5235
    %5776 = vmatpush1.bf16.msra.mxu0 %v5234
    %5777 = vmatprep.subr.bf16.mxu0 %v5243
    %5778 = vmatpush1.bf16.msra.mxu0 %v5242
    %5779 = vmatprep.subr.bf16.mxu0 %v5251
    %5780 = vmatpush1.bf16.msra.mxu0 %v5250
    %5781 = vmatprep.subr.bf16.mxu0 %v5259
    %5782 = vmatpush1.bf16.msra.mxu0 %v5258
    %5783 = vmatprep.subr.bf16.mxu0 %v5267
    %5784 = vmatpush1.bf16.msra.mxu0 %v5266
    %5785 = vmatprep.subr.bf16.mxu0 %v5275
    %5786 = vmatpush1.bf16.msra.mxu0 %v5274
    %5787 = vmatprep.subr.bf16.mxu0 %v5283
    %5788 = vmatpush1.bf16.msra.mxu0 %v5282
    %5789 = vmatprep.mubr.bf16.mxu0 %v4005
    %5790 = vmatmul.mubr.bf16.gmra.mrb[0].mxu0 %v4004
    %v5791 = vpop.f32.mrb[0].mxu0
    %v5792 = vadd.f32 %v5749, %v5791
    %v5793 = vpop.f32.mrb[0].mxu0
    %v5794 = vadd.f32 %v5751, %v5793
    %v5795 = vpop.f32.mrb[0].mxu0
    %v5796 = vadd.f32 %v5753, %v5795
    %v5797 = vpop.f32.mrb[0].mxu0
    %v5798 = vadd.f32 %v5755, %v5797
    %5799 = vdwg.mxu0
    %5800 = vmatprep.subr.bf16.mxu0 %v5037
    %5801 = vmatpush1.bf16.msra.mxu0 %v5036
    %5802 = vmatprep.subr.bf16.mxu0 %v5045
    %5803 = vmatpush1.bf16.msra.mxu0 %v5044
    %5804 = vmatprep.subr.bf16.mxu0 %v5053
    %5805 = vmatpush1.bf16.msra.mxu0 %v5052
    %5806 = vmatprep.subr.bf16.mxu0 %v5061
    %5807 = vmatpush1.bf16.msra.mxu0 %v5060
    %5808 = vmatprep.subr.bf16.mxu0 %v5069
    %5809 = vmatpush1.bf16.msra.mxu0 %v5068
    %5810 = vmatprep.subr.bf16.mxu0 %v5077
    %5811 = vmatpush1.bf16.msra.mxu0 %v5076
    %5812 = vmatprep.subr.bf16.mxu0 %v5085
    %5813 = vmatpush1.bf16.msra.mxu0 %v5084
    %5814 = vmatprep.subr.bf16.mxu0 %v5093
    %5815 = vmatpush1.bf16.msra.mxu0 %v5092
    %5816 = vmatprep.subr.bf16.mxu0 %v5101
    %5817 = vmatpush1.bf16.msra.mxu0 %v5100
    %5818 = vmatprep.subr.bf16.mxu0 %v5109
    %5819 = vmatpush1.bf16.msra.mxu0 %v5108
    %5820 = vmatprep.subr.bf16.mxu0 %v5117
    %5821 = vmatpush1.bf16.msra.mxu0 %v5116
    %5822 = vmatprep.subr.bf16.mxu0 %v5125
    %5823 = vmatpush1.bf16.msra.mxu0 %v5124
    %5824 = vmatprep.subr.bf16.mxu0 %v5133
    %5825 = vmatpush1.bf16.msra.mxu0 %v5132
    %5826 = vmatprep.subr.bf16.mxu0 %v5141
    %5827 = vmatpush1.bf16.msra.mxu0 %v5140
    %5828 = vmatprep.subr.bf16.mxu0 %v5149
    %5829 = vmatpush1.bf16.msra.mxu0 %v5148
    %5830 = vmatprep.subr.bf16.mxu0 %v5157
    %5831 = vmatpush1.bf16.msra.mxu0 %v5156
    %5832 = vmatprep.mubr.bf16.mxu0 %v4003
    %5833 = vmatmul.mubr.bf16.gmra.mrb[0].mxu0 %v4002
    %v5834 = vpop.f32.mrb[0].mxu0
    %v5835 = vadd.f32 0.0, %v5834
    %v5836 = vpop.f32.mrb[0].mxu0
    %v5837 = vadd.f32 0.0, %v5836
    %v5838 = vpop.f32.mrb[0].mxu0
    %v5839 = vadd.f32 0.0, %v5838
    %v5840 = vpop.f32.mrb[0].mxu0
    %v5841 = vadd.f32 0.0, %v5840
    %5842 = vdwg.mxu0
    %5843 = vmatprep.subr.bf16.mxu0 %v5165
    %5844 = vmatpush1.bf16.msra.mxu0 %v5164
    %5845 = vmatprep.subr.bf16.mxu0 %v5173
    %5846 = vmatpush1.bf16.msra.mxu0 %v5172
    %5847 = vmatprep.subr.bf16.mxu0 %v5181
    %5848 = vmatpush1.bf16.msra.mxu0 %v5180
    %5849 = vmatprep.subr.bf16.mxu0 %v5189
    %5850 = vmatpush1.bf16.msra.mxu0 %v5188
    %5851 = vmatprep.subr.bf16.mxu0 %v5197
    %5852 = vmatpush1.bf16.msra.mxu0 %v5196
    %5853 = vmatprep.subr.bf16.mxu0 %v5205
    %5854 = vmatpush1.bf16.msra.mxu0 %v5204
    %5855 = vmatprep.subr.bf16.mxu0 %v5213
    %5856 = vmatpush1.bf16.msra.mxu0 %v5212
    %5857 = vmatprep.subr.bf16.mxu0 %v5221
    %5858 = vmatpush1.bf16.msra.mxu0 %v5220
    %5859 = vmatprep.subr.bf16.mxu0 %v5229
    %5860 = vmatpush1.bf16.msra.mxu0 %v5228
    %5861 = vmatprep.subr.bf16.mxu0 %v5237
    %5862 = vmatpush1.bf16.msra.mxu0 %v5236
    %5863 = vmatprep.subr.bf16.mxu0 %v5245
    %5864 = vmatpush1.bf16.msra.mxu0 %v5244
    %5865 = vmatprep.subr.bf16.mxu0 %v5253
    %5866 = vmatpush1.bf16.msra.mxu0 %v5252
    %5867 = vmatprep.subr.bf16.mxu0 %v5261
    %5868 = vmatpush1.bf16.msra.mxu0 %v5260
    %5869 = vmatprep.subr.bf16.mxu0 %v5269
    %5870 = vmatpush1.bf16.msra.mxu0 %v5268
    %5871 = vmatprep.subr.bf16.mxu0 %v5277
    %5872 = vmatpush1.bf16.msra.mxu0 %v5276
    %5873 = vmatprep.subr.bf16.mxu0 %v5285
    %5874 = vmatpush1.bf16.msra.mxu0 %v5284
    %5875 = vmatprep.mubr.bf16.mxu0 %v4005
    %5876 = vmatmul.mubr.bf16.gmra.mrb[0].mxu0 %v4004
    %v5877 = vpop.f32.mrb[0].mxu0
    %v5878 = vadd.f32 %v5835, %v5877
    %v5879 = vpop.f32.mrb[0].mxu0
    %v5880 = vadd.f32 %v5837, %v5879
    %v5881 = vpop.f32.mrb[0].mxu0
    %v5882 = vadd.f32 %v5839, %v5881
    %v5883 = vpop.f32.mrb[0].mxu0
    %v5884 = vadd.f32 %v5841, %v5883
    %5885 = vdwg.mxu0
    %v5886 = vld [vmem:[%s3] sm:$0xf]
    %v5887 = vld [vmem:[%s3 + $0x4] sm:$0xf]
    %v5888 = vld [vmem:[%s3 + $0x8] sm:$0xf]
    %v5889 = vld [vmem:[%s3 + $0xc] sm:$0xf]
    %v5890 = vpack.c.bf16 %v5624, %v5620
    %v5891 = vpack.c.bf16 %v5626, %v5622
    %v5892 = vpack.c.bf16 %v5710, %v5706
    %v5893 = vpack.c.bf16 %v5712, %v5708
    %v5894 = vpack.c.bf16 %v5796, %v5792
    %v5895 = vpack.c.bf16 %v5798, %v5794
    %v5896 = vpack.c.bf16 %v5882, %v5878
    %v5897 = vpack.c.bf16 %v5884, %v5880
    %v5902 = vunpack.c.l.b16 %v5886
    %v5903 = vunpack.c.l.b16 %v5887
    %v5904 = vunpack.c.l.b16 %v5888
    %v5905 = vunpack.c.l.b16 %v5889
    %v5906 = vpack.c.b16 %v5903, %v5902
    %v5907 = vpack.c.b16 %v5905, %v5904
    %v5909 = vsel %vm2810, %v5906, 0
    %v5912 = vsel %vm2810, %v5907, 0
    %5914 = vmatprep.subr.bf16.mxu0 %v5891
    %5915 = vmatpush1.bf16.msra.mxu0 %v5890
    %5916 = vmatprep.subr.bf16.mxu0 0
    %5917 = vmatpush1.bf16.msra.mxu0 0
    %5918 = vmatprep.subr.bf16.mxu0 0
    %5919 = vmatpush1.bf16.msra.mxu0 0
    %5920 = vmatprep.subr.bf16.mxu0 0
    %5921 = vmatpush1.bf16.msra.mxu0 0
    %5922 = vmatprep.subr.bf16.mxu0 0
    %5923 = vmatpush1.bf16.msra.mxu0 0
    %5924 = vmatprep.subr.bf16.mxu0 0
    %5925 = vmatpush1.bf16.msra.mxu0 0
    %5926 = vmatprep.subr.bf16.mxu0 0
    %5927 = vmatpush1.bf16.msra.mxu0 0
    %5928 = vmatprep.subr.bf16.mxu0 0
    %5929 = vmatpush1.bf16.msra.mxu0 0
    %5930 = vmatprep.subr.bf16.mxu0 0
    %5931 = vmatpush1.bf16.msra.mxu0 0
    %5932 = vmatprep.subr.bf16.mxu0 0
    %5933 = vmatpush1.bf16.msra.mxu0 0
    %5934 = vmatprep.subr.bf16.mxu0 0
    %5935 = vmatpush1.bf16.msra.mxu0 0
    %5936 = vmatprep.subr.bf16.mxu0 0
    %5937 = vmatpush1.bf16.msra.mxu0 0
    %5938 = vmatprep.subr.bf16.mxu0 0
    %5939 = vmatpush1.bf16.msra.mxu0 0
    %5940 = vmatprep.subr.bf16.mxu0 0
    %5941 = vmatpush1.bf16.msra.mxu0 0
    %5942 = vmatprep.subr.bf16.mxu0 0
    %5943 = vmatpush1.bf16.msra.mxu0 0
    %5944 = vmatprep.subr.bf16.mxu0 0
    %5945 = vmatpush1.bf16.msra.mxu0 0
    %5946 = vmatprep.mubr.bf16.mxu0 0
    %5947 = vmatmul.mubr.bf16.gmra.mrb[0].mxu0 %v5909
    %v5948 = vpop.f32.mrb[0].mxu0
    %v5949 = vadd.f32 0.0, %v5948
    %v5950 = vpop.f32.mrb[0].mxu0
    %v5951 = vadd.f32 0.0, %v5950
    %v5952 = vpop.f32.mrb[0].mxu0
    %v5953 = vadd.f32 0.0, %v5952
    %v5954 = vpop.f32.mrb[0].mxu0
    %v5955 = vadd.f32 0.0, %v5954
    %5956 = vmatprep.mubr.bf16.mxu0 0
    %5957 = vmatmul.mubr.bf16.gmra.mrb[0].mxu0 %v5912
    %v5958 = vpop.f32.mrb[0].mxu0
    %v5959 = vadd.f32 0.0, %v5958
    %v5960 = vpop.f32.mrb[0].mxu0
    %v5961 = vadd.f32 0.0, %v5960
    %v5962 = vpop.f32.mrb[0].mxu0
    %v5963 = vadd.f32 0.0, %v5962
    %v5964 = vpop.f32.mrb[0].mxu0
    %v5965 = vadd.f32 0.0, %v5964
    %5966 = vdwg.mxu0
    %5967 = vmatprep.subr.bf16.mxu0 %v5893
    %5968 = vmatpush1.bf16.msra.mxu0 %v5892
    %5969 = vmatprep.subr.bf16.mxu0 0
    %5970 = vmatpush1.bf16.msra.mxu0 0
    %5971 = vmatprep.subr.bf16.mxu0 0
    %5972 = vmatpush1.bf16.msra.mxu0 0
    %5973 = vmatprep.subr.bf16.mxu0 0
    %5974 = vmatpush1.bf16.msra.mxu0 0
    %5975 = vmatprep.subr.bf16.mxu0 0
    %5976 = vmatpush1.bf16.msra.mxu0 0
    %5977 = vmatprep.subr.bf16.mxu0 0
    %5978 = vmatpush1.bf16.msra.mxu0 0
    %5979 = vmatprep.subr.bf16.mxu0 0
    %5980 = vmatpush1.bf16.msra.mxu0 0
    %5981 = vmatprep.subr.bf16.mxu0 0
    %5982 = vmatpush1.bf16.msra.mxu0 0
    %5983 = vmatprep.subr.bf16.mxu0 0
    %5984 = vmatpush1.bf16.msra.mxu0 0
    %5985 = vmatprep.subr.bf16.mxu0 0
    %5986 = vmatpush1.bf16.msra.mxu0 0
    %5987 = vmatprep.subr.bf16.mxu0 0
    %5988 = vmatpush1.bf16.msra.mxu0 0
    %5989 = vmatprep.subr.bf16.mxu0 0
    %5990 = vmatpush1.bf16.msra.mxu0 0
    %5991 = vmatprep.subr.bf16.mxu0 0
    %5992 = vmatpush1.bf16.msra.mxu0 0
    %5993 = vmatprep.subr.bf16.mxu0 0
    %5994 = vmatpush1.bf16.msra.mxu0 0
    %5995 = vmatprep.subr.bf16.mxu0 0
    %5996 = vmatpush1.bf16.msra.mxu0 0
    %5997 = vmatprep.subr.bf16.mxu0 0
    %5998 = vmatpush1.bf16.msra.mxu0 0
    %5999 = vmatprep.mubr.bf16.mxu0 0
    %6000 = vmatmul.mubr.bf16.gmra.mrb[0].mxu0 %v5909
    %v6001 = vpop.f32.mrb[0].mxu0
    %v6002 = vadd.f32 0.0, %v6001
    %v6003 = vpop.f32.mrb[0].mxu0
    %v6004 = vadd.f32 0.0, %v6003
    %v6005 = vpop.f32.mrb[0].mxu0
    %v6006 = vadd.f32 0.0, %v6005
    %v6007 = vpop.f32.mrb[0].mxu0
    %v6008 = vadd.f32 0.0, %v6007
    %6009 = vmatprep.mubr.bf16.mxu0 0
    %6010 = vmatmul.mubr.bf16.gmra.mrb[0].mxu0 %v5912
    %v6011 = vpop.f32.mrb[0].mxu0
    %v6012 = vadd.f32 0.0, %v6011
    %v6013 = vpop.f32.mrb[0].mxu0
    %v6014 = vadd.f32 0.0, %v6013
    %v6015 = vpop.f32.mrb[0].mxu0
    %v6016 = vadd.f32 0.0, %v6015
    %v6017 = vpop.f32.mrb[0].mxu0
    %v6018 = vadd.f32 0.0, %v6017
    %6019 = vdwg.mxu0
    %6020 = vmatprep.subr.bf16.mxu0 %v5895
    %6021 = vmatpush1.bf16.msra.mxu0 %v5894
    %6022 = vmatprep.subr.bf16.mxu0 0
    %6023 = vmatpush1.bf16.msra.mxu0 0
    %6024 = vmatprep.subr.bf16.mxu0 0
    %6025 = vmatpush1.bf16.msra.mxu0 0
    %6026 = vmatprep.subr.bf16.mxu0 0
    %6027 = vmatpush1.bf16.msra.mxu0 0
    %6028 = vmatprep.subr.bf16.mxu0 0
    %6029 = vmatpush1.bf16.msra.mxu0 0
    %6030 = vmatprep.subr.bf16.mxu0 0
    %6031 = vmatpush1.bf16.msra.mxu0 0
    %6032 = vmatprep.subr.bf16.mxu0 0
    %6033 = vmatpush1.bf16.msra.mxu0 0
    %6034 = vmatprep.subr.bf16.mxu0 0
    %6035 = vmatpush1.bf16.msra.mxu0 0
    %6036 = vmatprep.subr.bf16.mxu0 0
    %6037 = vmatpush1.bf16.msra.mxu0 0
    %6038 = vmatprep.subr.bf16.mxu0 0
    %6039 = vmatpush1.bf16.msra.mxu0 0
    %6040 = vmatprep.subr.bf16.mxu0 0
    %6041 = vmatpush1.bf16.msra.mxu0 0
    %6042 = vmatprep.subr.bf16.mxu0 0
    %6043 = vmatpush1.bf16.msra.mxu0 0
    %6044 = vmatprep.subr.bf16.mxu0 0
    %6045 = vmatpush1.bf16.msra.mxu0 0
    %6046 = vmatprep.subr.bf16.mxu0 0
    %6047 = vmatpush1.bf16.msra.mxu0 0
    %6048 = vmatprep.subr.bf16.mxu0 0
    %6049 = vmatpush1.bf16.msra.mxu0 0
    %6050 = vmatprep.subr.bf16.mxu0 0
    %6051 = vmatpush1.bf16.msra.mxu0 0
    %6052 = vmatprep.mubr.bf16.mxu0 0
    %6053 = vmatmul.mubr.bf16.gmra.mrb[0].mxu0 %v5909
    %v6054 = vpop.f32.mrb[0].mxu0
    %v6055 = vadd.f32 0.0, %v6054
    %v6056 = vpop.f32.mrb[0].mxu0
    %v6057 = vadd.f32 0.0, %v6056
    %v6058 = vpop.f32.mrb[0].mxu0
    %v6059 = vadd.f32 0.0, %v6058
    %v6060 = vpop.f32.mrb[0].mxu0
    %v6061 = vadd.f32 0.0, %v6060
    %6062 = vmatprep.mubr.bf16.mxu0 0
    %6063 = vmatmul.mubr.bf16.gmra.mrb[0].mxu0 %v5912
    %v6064 = vpop.f32.mrb[0].mxu0
    %v6065 = vadd.f32 0.0, %v6064
    %v6066 = vpop.f32.mrb[0].mxu0
    %v6067 = vadd.f32 0.0, %v6066
    %v6068 = vpop.f32.mrb[0].mxu0
    %v6069 = vadd.f32 0.0, %v6068
    %v6070 = vpop.f32.mrb[0].mxu0
    %v6071 = vadd.f32 0.0, %v6070
    %6072 = vdwg.mxu0
    %6073 = vmatprep.subr.bf16.mxu0 %v5897
    %6074 = vmatpush1.bf16.msra.mxu0 %v5896
    %6075 = vmatprep.subr.bf16.mxu0 0
    %6076 = vmatpush1.bf16.msra.mxu0 0
    %6077 = vmatprep.subr.bf16.mxu0 0
    %6078 = vmatpush1.bf16.msra.mxu0 0
    %6079 = vmatprep.subr.bf16.mxu0 0
    %6080 = vmatpush1.bf16.msra.mxu0 0
    %6081 = vmatprep.subr.bf16.mxu0 0
    %6082 = vmatpush1.bf16.msra.mxu0 0
    %6083 = vmatprep.subr.bf16.mxu0 0
    %6084 = vmatpush1.bf16.msra.mxu0 0
    %6085 = vmatprep.subr.bf16.mxu0 0
    %6086 = vmatpush1.bf16.msra.mxu0 0
    %6087 = vmatprep.subr.bf16.mxu0 0
    %6088 = vmatpush1.bf16.msra.mxu0 0
    %6089 = vmatprep.subr.bf16.mxu0 0
    %6090 = vmatpush1.bf16.msra.mxu0 0
    %6091 = vmatprep.subr.bf16.mxu0 0
    %6092 = vmatpush1.bf16.msra.mxu0 0
    %6093 = vmatprep.subr.bf16.mxu0 0
    %6094 = vmatpush1.bf16.msra.mxu0 0
    %6095 = vmatprep.subr.bf16.mxu0 0
    %6096 = vmatpush1.bf16.msra.mxu0 0
    %6097 = vmatprep.subr.bf16.mxu0 0
    %6098 = vmatpush1.bf16.msra.mxu0 0
    %6099 = vmatprep.subr.bf16.mxu0 0
    %6100 = vmatpush1.bf16.msra.mxu0 0
    %6101 = vmatprep.subr.bf16.mxu0 0
    %6102 = vmatpush1.bf16.msra.mxu0 0
    %6103 = vmatprep.subr.bf16.mxu0 0
    %6104 = vmatpush1.bf16.msra.mxu0 0
    %6105 = vmatprep.mubr.bf16.mxu0 0
    %6106 = vmatmul.mubr.bf16.gmra.mrb[0].mxu0 %v5909
    %v6107 = vpop.f32.mrb[0].mxu0
    %v6108 = vadd.f32 0.0, %v6107
    %v6109 = vpop.f32.mrb[0].mxu0
    %v6110 = vadd.f32 0.0, %v6109
    %v6111 = vpop.f32.mrb[0].mxu0
    %v6112 = vadd.f32 0.0, %v6111
    %v6113 = vpop.f32.mrb[0].mxu0
    %v6114 = vadd.f32 0.0, %v6113
    %6115 = vmatprep.mubr.bf16.mxu0 0
    %6116 = vmatmul.mubr.bf16.gmra.mrb[0].mxu0 %v5912
    %v6117 = vpop.f32.mrb[0].mxu0
    %v6118 = vadd.f32 0.0, %v6117
    %v6119 = vpop.f32.mrb[0].mxu0
    %v6120 = vadd.f32 0.0, %v6119
    %v6121 = vpop.f32.mrb[0].mxu0
    %v6122 = vadd.f32 0.0, %v6121
    %v6123 = vpop.f32.mrb[0].mxu0
    %v6124 = vadd.f32 0.0, %v6123
    %6125 = vdwg.mxu0
    %v6126 = vpack.c.bf16 %v5953, %v5949
    %v6127 = vpack.c.bf16 %v5955, %v5951
    %v6128 = vpack.c.bf16 %v6006, %v6002
    %v6129 = vpack.c.bf16 %v6008, %v6004
    %v6130 = vpack.c.bf16 %v6059, %v6055
    %v6131 = vpack.c.bf16 %v6061, %v6057
    %v6132 = vpack.c.bf16 %v6112, %v6108
    %v6133 = vpack.c.bf16 %v6114, %v6110
    %v6134 = vpack.c.bf16 %v5963, %v5959
    %v6135 = vpack.c.bf16 %v5965, %v5961
    %v6136 = vpack.c.bf16 %v6016, %v6012
    %v6137 = vpack.c.bf16 %v6018, %v6014
    %v6138 = vpack.c.bf16 %v6069, %v6065
    %v6139 = vpack.c.bf16 %v6071, %v6067
    %v6140 = vpack.c.bf16 %v6122, %v6118
    %v6141 = vpack.c.bf16 %v6124, %v6120
    %v6158 = vunpack.c.l.b16 %v6126
    %v6159 = vunpack.c.l.b16 %v6127
    %v6160 = vunpack.c.l.b16 %v6128
    %v6161 = vunpack.c.l.b16 %v6129
    %v6162 = vunpack.c.l.b16 %v6130
    %v6163 = vunpack.c.l.b16 %v6131
    %v6164 = vunpack.c.l.b16 %v6132
    %v6165 = vunpack.c.l.b16 %v6133
    %v6166 = vunpack.c.h.b16 %v6126
    %v6167 = vunpack.c.h.b16 %v6127
    %v6168 = vunpack.c.h.b16 %v6128
    %v6169 = vunpack.c.h.b16 %v6129
    %v6170 = vunpack.c.h.b16 %v6130
    %v6171 = vunpack.c.h.b16 %v6131
    %v6172 = vunpack.c.h.b16 %v6132
    %v6173 = vunpack.c.h.b16 %v6133
    %v6174 = vunpack.c.l.b16 %v6134
    %v6175 = vunpack.c.l.b16 %v6135
    %v6176 = vunpack.c.l.b16 %v6136
    %v6177 = vunpack.c.l.b16 %v6137
    %v6178 = vunpack.c.l.b16 %v6138
    %v6179 = vunpack.c.l.b16 %v6139
    %v6180 = vunpack.c.l.b16 %v6140
    %v6181 = vunpack.c.l.b16 %v6141
    %v6182 = vunpack.c.h.b16 %v6134
    %v6183 = vunpack.c.h.b16 %v6135
    %v6184 = vunpack.c.h.b16 %v6136
    %v6185 = vunpack.c.h.b16 %v6137
    %v6186 = vunpack.c.h.b16 %v6138
    %v6187 = vunpack.c.h.b16 %v6139
    %v6188 = vunpack.c.h.b16 %v6140
    %v6189 = vunpack.c.h.b16 %v6141
    %v6190 = vpack.c.b16 %v6159, %v6158
    %v6191 = vpack.c.b16 %v6161, %v6160
    %v6192 = vpack.c.b16 %v6163, %v6162
    %v6193 = vpack.c.b16 %v6165, %v6164
    %v6194 = vpack.c.b16 %v6167, %v6166
    %v6195 = vpack.c.b16 %v6169, %v6168
    %v6196 = vpack.c.b16 %v6171, %v6170
    %v6197 = vpack.c.b16 %v6173, %v6172
    %v6198 = vpack.c.b16 %v6175, %v6174
    %v6199 = vpack.c.b16 %v6177, %v6176
    %v6200 = vpack.c.b16 %v6179, %v6178
    %v6201 = vpack.c.b16 %v6181, %v6180
    %v6202 = vpack.c.b16 %v6183, %v6182
    %v6203 = vpack.c.b16 %v6185, %v6184
    %v6204 = vpack.c.b16 %v6187, %v6186
    %v6205 = vpack.c.b16 %v6189, %v6188
    %6222 = vst [vmem:[#allocation8] sm:$0xff] %v6190
    %6223 = vst [vmem:[#allocation8 + $0x8] sm:$0xff] %v6191
    %6224 = vst [vmem:[#allocation8 + $0x10] sm:$0xff] %v6192
    %6225 = vst [vmem:[#allocation8 + $0x18] sm:$0xff] %v6193
    %6226 = vst [vmem:[#allocation8 + $0x20] sm:$0xff] %v6194
    %6227 = vst [vmem:[#allocation8 + $0x28] sm:$0xff] %v6195
    %6228 = vst [vmem:[#allocation8 + $0x30] sm:$0xff] %v6196
    %6229 = vst [vmem:[#allocation8 + $0x38] sm:$0xff] %v6197
    %6230 = vst [vmem:[#allocation8 + $0x40] sm:$0xff] %v6198
    %6231 = vst [vmem:[#allocation8 + $0x48] sm:$0xff] %v6199
    %6232 = vst [vmem:[#allocation8 + $0x50] sm:$0xff] %v6200
    %6233 = vst [vmem:[#allocation8 + $0x58] sm:$0xff] %v6201
    %6234 = vst [vmem:[#allocation8 + $0x60] sm:$0xff] %v6202
    %6235 = vst [vmem:[#allocation8 + $0x68] sm:$0xff] %v6203
    %6236 = vst [vmem:[#allocation8 + $0x70] sm:$0xff] %v6204
    %6237 = vst [vmem:[#allocation8 + $0x78] sm:$0xff] %v6205
    // Predicated region
    $region30: #{tpu_custom_call.1} parent=1 // pred_check
      _
    $region31: #{tpu_custom_call.1} parent=1 // pred_check_branch
      %6239 = sbr.rel (0) target = $region33
    $region32: #{tpu_custom_call.1} parent=1 // pred_region
      %s6241 = ssub.s32 2048, 2048
      %6242 = vsyncadd [#allocation5], %s6241
      %s6243 = sshll.u32 [#allocation8], 4
      %s6244 = int_to_ptr.vmem [resolvable:$true] %s6243
      %6249 = dma.vmem_to_hbm [thread:$0]  %s6244, 2048, %s5, [#allocation5], 512, 512, 32
    $region33: #{tpu_custom_call.1} parent=1 // pred_fallthru
      _
    // Predicated region
    $region34: #{tpu_custom_call.1} parent=1 // pred_check
      _
    $region35: #{tpu_custom_call.1} parent=1 // pred_check_branch
      %6251 = sbr.rel (0) target = $region37
    $region36: #{tpu_custom_call.1} parent=1 // pred_region
      %6252 = dma.done [#allocation5], 2048
    $region37: #{tpu_custom_call.1} parent=1 // pred_fallthru
      _
    %6253 = vsyncpa [#allocation4], 1
    %6254 = vsyncpa [#allocation7], 1
    %6255 = vsyncpa [#allocation5], 1

</llo_original>
